<compile_context>
chip_gen: v7x
topology: tpu7x:2x2x1
jax: 0.10.0
libtpu: 0.0.40
codegen_flags: <defaults>
</compile_context>

<pallas_src>
import numpy as np
import jax
import jax.numpy as jnp
from jax.experimental import pallas as pl
from jax.experimental.pallas import tpu as pltpu

# ------------------------- problem configuration ---------------------------
DIM = 8                        # eqn_config['dim']
NUM_HIDDENS = (16, 16)         # net_config['num_hiddens']
NUM_TIME_INTERVAL = 6          # eqn_config['num_time_interval']
TOTAL_TIME = 1.0
DELTA_T = TOTAL_TIME / NUM_TIME_INTERVAL
LAMBD = 1.0                    # HJBLQ generator coefficient
BATCH = 256                    # Monte-Carlo paths per call (multiple of B_TILE)
B_TILE = 128                   # batch rows per grid step (sublane-aligned)
BN_EPS = 1e-6                  # matches nn.BatchNorm1d(eps=1e-06)
Y_INIT_RANGE = (0.0, 1.0)

# --------------------------- packed lane layout -----------------------------
LANES = 128                    # every slab / weight padded to full (8,128) tiles
NSUB = NUM_TIME_INTERVAL - 1   # T-1 independent subnets
X_OFF = 0                      # lanes [ 0,40): x_1..x_{T-1}   (subnet inputs)
DW_OFF = NSUB * DIM            # lanes [40,80): dw_1..dw_{T-1} (aligned with z_t)
DW0_OFF = 2 * NSUB * DIM       # lanes [80,88): dw_0           (aligned with z_init)
USED = DW0_OFF + DIM

assert NSUB * max(NUM_HIDDENS) <= LANES and USED <= LANES

_HIGHEST = jax.lax.Precision.HIGHEST


# ------------------------------ Pallas kernel -------------------------------
def bsde_fused_kernel(slab_ref, w_ref, c_ref, y_ref):
    """Whole NonsharedModel forward for one batch tile.

    slab_ref : [Bt, 128]      x | dw_tail | dw_0 packed lane-wise (see layout)
    w_ref    : [3, 128, 128]  block-diag packed layer weights (BN/bias//dim folded)
    c_ref    : [8, 128]       rows 0..2 = folded bias rows (row 2 also carries
                              z_init at lanes 80..87); row 3 lane 0 = y_init
    y_ref    : [Bt, 1]
    """
    slab = slab_ref[...]                                           # [Bt, 128]

    # All T-1 subnets as three full-width block-diagonal matmuls (dw/pad lanes
    # of the slab hit zero rows of W0, so no input slicing is needed).
    h = jnp.dot(slab, w_ref[0], preferred_element_type=jnp.float32,
                precision=_HIGHEST) + c_ref[0:1, :]
    h = jnp.maximum(h, 0.0)
    h = jnp.dot(h, w_ref[1], preferred_element_type=jnp.float32,
                precision=_HIGHEST) + c_ref[1:2, :]
    h = jnp.maximum(h, 0.0)
    z = jnp.dot(h, w_ref[2], preferred_element_type=jnp.float32,
                precision=_HIGHEST) + c_ref[2:3, :]
    # z lanes 40..79 = z_1..z_5 (already /dim), lanes 80..87 = z_init, rest 0.
    # The slab holds the matching dw values on exactly those lanes, so one
    # fused elementwise + lane-reduce realizes the entire y-recursion:
    #   y = y_init + sum_t [ dt*lambd*||z_t||^2 + z_t . dw_t ],  t = 0..T-1
    # TODO(synk): this collapse is valid because the assumed HJBLQ generator
    #   f_tf(t, x, y, z) = -lambd*||z||^2 is independent of (t, x, y); a
    #   general bsde.f_tf would require a sequential in-kernel time loop.
    term = (LAMBD * DELTA_T) * (z * z) + z * slab
    # TODO(synk): for very large batch tiles a lane-dense [1, Bt] output row
    # would avoid the masked single-lane stores of this [Bt, 1] column.
    y_ref[...] = jnp.sum(term, axis=-1, keepdims=True) + c_ref[3:4, 0:1]


# ------------------------------ model forward -------------------------------
def pack_inputs(dw, x):
    """[B,D,T] dw and [B,D,T+1] x (PyTorch layout) -> one [B,128] lane-dense slab.

    TODO(synk): in production the path sampler should emit this layout directly
    so the transpose/concat below does not run on every forward call.
    """
    B, D, T = dw.shape
    x_tm = jnp.transpose(x, (0, 2, 1))                     # [B, T+1, D]
    dw_tm = jnp.transpose(dw, (0, 2, 1))                   # [B, T, D]
    x_part = x_tm[:, 1:T, :].reshape(B, (T - 1) * D)       # x_1..x_{T-1}
    dw_tail = dw_tm[:, 1:, :].reshape(B, (T - 1) * D)      # dw_1..dw_{T-1}
    dw0 = dw_tm[:, 0, :]                                   # dw_0
    pad = jnp.zeros((B, LANES - USED), jnp.float32)
    return jnp.concatenate([x_part, dw_tail, dw0, pad], axis=1).astype(jnp.float32)


def nonshared_model_forward(dw, x, w_stack, consts):
    slab = pack_inputs(dw, x)
    B = slab.shape[0]
    assert B % B_TILE == 0, "pad batch to a multiple of B_TILE"
    return pl.pallas_call(
        bsde_fused_kernel,
        out_shape=jax.ShapeDtypeStruct((B, 1), jnp.float32),
        grid=(B // B_TILE,),
        in_specs=[
            pl.BlockSpec((B_TILE, LANES), lambda i: (i, 0)),        # activations
            pl.BlockSpec((3, LANES, LANES), lambda i: (0, 0, 0)),   # weights (resident)
            pl.BlockSpec((8, LANES), lambda i: (0, 0)),             # constants (resident)
        ],
        out_specs=pl.BlockSpec((B_TILE, 1), lambda i: (i, 0)),
        compiler_params=pltpu.CompilerParams(
            dimension_semantics=("parallel",)),     # both TensorCores on v7x
    )(slab, w_stack, consts)


# --------------------------- parameter construction --------------------------
def init_subnet_raw(key, dim, num_hiddens):
    """Deterministic synthetic weights for one FeedForwardSubNet (eval-mode BN)."""
    sizes = [dim] + list(num_hiddens) + [dim]
    n = len(sizes) - 1
    keys = iter(jax.random.split(key, 4 + 6 * n))
    u = lambda k, s, lo, hi: jax.random.uniform(k, s, minval=lo, maxval=hi)

    bn0 = dict(g=u(next(keys), (dim,), 0.5, 1.5),
               b=u(next(keys), (dim,), -0.1, 0.1),
               m=u(next(keys), (dim,), -0.1, 0.1),
               v=u(next(keys), (dim,), 0.5, 1.5))
    dense = []
    for i in range(n):
        fi, fo = sizes[i], sizes[i + 1]
        W = jax.random.normal(next(keys), (fi, fo)) / jnp.sqrt(fi)
        bias = u(next(keys), (fo,), -0.05, 0.05)
        g = u(next(keys), (fo,), 0.5, 1.5)
        bt = u(next(keys), (fo,), -0.1, 0.1)
        m = u(next(keys), (fo,), -0.1, 0.1)
        v = u(next(keys), (fo,), 0.5, 1.5)
        dense.append((W, bias, g, bt, m, v))
    return {"bn0": bn0, "dense": dense}


def fold_subnet(raw, dim):
    """Fold eval-mode BN (bn0 + per-layer bn), linear bias and /dim into a
    plain chain  h = relu(h @ W' + b') ... (last layer without relu).
    TODO(synk): eval-mode (running-stats) BN only; training-mode batch stats
    are not representable as folded weights."""
    bn0 = raw["bn0"]
    s0 = bn0["g"] / jnp.sqrt(bn0["v"] + BN_EPS)
    t0 = bn0["b"] - bn0["m"] * s0

    layers = []
    for (W, bias, g, bt, m, v) in raw["dense"]:
        s = g / jnp.sqrt(v + BN_EPS)
        t = (bias - m) * s + bt                 # bn(lin + bias) = lin*s + t
        layers.append([W * s[None, :], t])      # scale folded into W columns

    # fold bn0 (input affine) into the first layer
    W0s, t1 = layers[0]
    layers[0] = [s0[:, None] * W0s, t0 @ W0s + t1]
    # fold the final /dim into the last layer
    Wl, bl = layers[-1]
    layers[-1] = [Wl / dim, bl / dim]
    return layers


def pack_constants(folded_subnets, z_init, y_init):
    """Block-diag pack the T-1 folded subnets into one [3,128,128] weight stack
    and one [8,128] constants tile, all padded to full 128-lane tiles."""
    h0 = int(folded_subnets[0][0][0].shape[1])
    h1 = int(folded_subnets[0][1][0].shape[1])
    W = np.zeros((3, LANES, LANES), np.float32)
    C = np.zeros((8, LANES), np.float32)
    for t, sub in enumerate(folded_subnets):
        (W0, b0), (W1, b1), (W2, b2) = sub
        r0, c0 = X_OFF + t * DIM, t * h0
        W[0, r0:r0 + DIM, c0:c0 + h0] = np.asarray(W0)
        C[0, c0:c0 + h0] = np.asarray(b0)
        c1 = t * h1
        W[1, c0:c0 + h0, c1:c1 + h1] = np.asarray(W1)
        C[1, c1:c1 + h1] = np.asarray(b1)
        c2 = DW_OFF + t * DIM
        W[2, c1:c1 + h1, c2:c2 + DIM] = np.asarray(W2)
        C[2, c2:c2 + DIM] = np.asarray(b2)
    # z_init rides in the last bias row on the dw_0 lanes -> the t=0 term is
    # produced by the same elementwise+reduce as every other time step.
    C[2, DW0_OFF:DW0_OFF + DIM] = np.asarray(z_init).reshape(-1)
    C[3, 0] = float(np.asarray(y_init).reshape(-1)[0])
    return jnp.asarray(W), jnp.asarray(C)


# ---------------------------- pure-JAX reference -----------------------------
def _subnet_reference(xv, raw):
    bn0 = raw["bn0"]
    s0 = bn0["g"] / jnp.sqrt(bn0["v"] + BN_EPS)
    t0 = bn0["b"] - bn0["m"] * s0
    h = xv * s0[None, :] + t0[None, :]
    n = len(raw["dense"])
    for i, (W, bias, g, bt, m, v) in enumerate(raw["dense"]):
        h = jnp.dot(h, W, precision=_HIGHEST) + bias[None, :]
        s = g / jnp.sqrt(v + BN_EPS)
        h = h * s[None, :] + (bt - m * s)[None, :]
        if i < n - 1:
            h = jax.nn.relu(h)
    return h


def reference_forward(dw, x, y_init, z_init, raws):
    """Direct (unfused) transcription of NonsharedModel.forward with the
    HJBLQ generator f_tf(t,x,y,z) = -lambd*||z||^2."""
    B = dw.shape[0]
    y = jnp.ones((B, 1), jnp.float32) * y_init
    z = jnp.ones((B, 1), jnp.float32) @ z_init
    for t in range(NUM_TIME_INTERVAL - 1):
        f = -LAMBD * jnp.sum(z * z, axis=1, keepdims=True)
        y = y - DELTA_T * f + jnp.sum(z * dw[:, :, t], axis=1, keepdims=True)
        z = _subnet_reference(x[:, :, t + 1], raws[t]) / DIM
    f = -LAMBD * jnp.sum(z * z, axis=1, keepdims=True)
    y = y - DELTA_T * f + jnp.sum(z * dw[:, :, -1], axis=1, keepdims=True)
    return y


# ---------------------------------- main ------------------------------------
if __name__ == "__main__":
    key = jax.random.PRNGKey(0)
    k_dw, k_x, k_y, k_z, k_net = jax.random.split(key, 5)

    dw = (jax.random.normal(k_dw, (BATCH, DIM, NUM_TIME_INTERVAL))
          * jnp.sqrt(DELTA_T)).astype(jnp.float32)
    x = jax.random.normal(k_x, (BATCH, DIM, NUM_TIME_INTERVAL + 1)).astype(jnp.float32)

    y_init = jax.random.uniform(k_y, (1,), minval=Y_INIT_RANGE[0],
                                maxval=Y_INIT_RANGE[1]).astype(jnp.float32)
    z_init = jax.random.uniform(k_z, (1, DIM), minval=-0.1,
                                maxval=0.1).astype(jnp.float32)

    subnet_keys = jax.random.split(k_net, NUM_TIME_INTERVAL - 1)
    raws = [init_subnet_raw(sk, DIM, NUM_HIDDENS) for sk in subnet_keys]
    folded = [fold_subnet(r, DIM) for r in raws]
    w_stack, consts = pack_constants(folded, z_init, y_init)   # built once

    fwd = jax.jit(lambda dw_, x_: nonshared_model_forward(dw_, x_, w_stack, consts))
    y = fwd(dw, x)
    jax.block_until_ready(y)
    assert y.shape == (BATCH, 1)

    # correctness vs an unfused pure-JAX reference of the PyTorch math
    y_ref = reference_forward(dw, x, y_init, z_init, raws)
    np.testing.assert_allclose(np.asarray(y), np.asarray(y_ref),
                               rtol=1e-5, atol=1e-5)

    print("KERNEL_OK")
</pallas_src>

<mosaic_0001>
module attributes {stable_mosaic.version = 11 : i64} {
  func.func @bsde_fused_kernel(%arg0: i32, %arg1: memref<128x128xf32, #tpu.memory_space<vmem>>, %arg2: memref<3x128x128xf32, #tpu.memory_space<vmem>>, %arg3: memref<8x128xf32, #tpu.memory_space<vmem>>, %arg4: memref<128x1xf32, #tpu.memory_space<vmem>>) attributes {dimension_semantics = [#tpu.dimension_semantics<parallel>], iteration_bounds = array<i64: 2>, scalar_prefetch = 0 : i64, scratch_operands = 0 : i64, tpu.core_type = #tpu.core_type<tc>, window_params = [{transform_indices = @transform_0, window_bounds = array<i64: 128, 128>}, {pipeline_mode = #tpu.pipeline_mode<synchronous>, transform_indices = @transform_1, window_bounds = array<i64: 3, 128, 128>}, {pipeline_mode = #tpu.pipeline_mode<synchronous>, transform_indices = @transform_2, window_bounds = array<i64: 8, 128>}, {transform_indices = @transform_3, window_bounds = array<i64: 128, 1>}]} {
    %c0 = arith.constant 0 : index
    %c0_0 = arith.constant 0 : index
    %0 = vector.load %arg1[%c0, %c0_0] : memref<128x128xf32, #tpu.memory_space<vmem>>, vector<128x128xf32>
    %c0_1 = arith.constant 0 : index
    %c0_2 = arith.constant 0 : index
    %c0_3 = arith.constant 0 : index
    %1 = vector.load %arg2[%c0_1, %c0_2, %c0_3] : memref<3x128x128xf32, #tpu.memory_space<vmem>>, vector<1x128x128xf32>
    %2 = vector.shape_cast %1 : vector<1x128x128xf32> to vector<128x128xf32>
    %cst = arith.constant dense<0.000000e+00> : vector<128x128xf32>
    %3 = tpu.matmul %0, %2, %cst {dimension_numbers = #tpu.dot_dimension_numbers<[1], [0], [0], [1], [0, 0, 1, 1], [], []>, precision = #tpu.contract_precision<fp32>} : vector<128x128xf32>, vector<128x128xf32>, vector<128x128xf32> -> vector<128x128xf32>
    %c0_4 = arith.constant 0 : index
    %c0_5 = arith.constant 0 : index
    %4 = vector.load %arg3[%c0_4, %c0_5] : memref<8x128xf32, #tpu.memory_space<vmem>>, vector<1x128xf32>
    %5 = vector.broadcast %4 : vector<1x128xf32> to vector<128x128xf32>
    %6 = arith.addf %3, %5 : vector<128x128xf32>
    %cst_6 = arith.constant 0.000000e+00 : f32
    %7 = vector.broadcast %cst_6 : f32 to vector<128x128xf32>
    %8 = arith.maximumf %6, %7 : vector<128x128xf32>
    %c1 = arith.constant 1 : index
    %c0_7 = arith.constant 0 : index
    %c0_8 = arith.constant 0 : index
    %9 = vector.load %arg2[%c1, %c0_7, %c0_8] : memref<3x128x128xf32, #tpu.memory_space<vmem>>, vector<1x128x128xf32>
    %10 = vector.shape_cast %9 : vector<1x128x128xf32> to vector<128x128xf32>
    %cst_9 = arith.constant dense<0.000000e+00> : vector<128x128xf32>
    %11 = tpu.matmul %8, %10, %cst_9 {dimension_numbers = #tpu.dot_dimension_numbers<[1], [0], [0], [1], [0, 0, 1, 1], [], []>, precision = #tpu.contract_precision<fp32>} : vector<128x128xf32>, vector<128x128xf32>, vector<128x128xf32> -> vector<128x128xf32>
    %c1_10 = arith.constant 1 : index
    %c0_11 = arith.constant 0 : index
    %12 = vector.load %arg3[%c1_10, %c0_11] : memref<8x128xf32, #tpu.memory_space<vmem>>, vector<1x128xf32>
    %13 = vector.broadcast %12 : vector<1x128xf32> to vector<128x128xf32>
    %14 = arith.addf %11, %13 : vector<128x128xf32>
    %cst_12 = arith.constant 0.000000e+00 : f32
    %15 = vector.broadcast %cst_12 : f32 to vector<128x128xf32>
    %16 = arith.maximumf %14, %15 : vector<128x128xf32>
    %c2 = arith.constant 2 : index
    %c0_13 = arith.constant 0 : index
    %c0_14 = arith.constant 0 : index
    %17 = vector.load %arg2[%c2, %c0_13, %c0_14] : memref<3x128x128xf32, #tpu.memory_space<vmem>>, vector<1x128x128xf32>
    %18 = vector.shape_cast %17 : vector<1x128x128xf32> to vector<128x128xf32>
    %cst_15 = arith.constant dense<0.000000e+00> : vector<128x128xf32>
    %19 = tpu.matmul %16, %18, %cst_15 {dimension_numbers = #tpu.dot_dimension_numbers<[1], [0], [0], [1], [0, 0, 1, 1], [], []>, precision = #tpu.contract_precision<fp32>} : vector<128x128xf32>, vector<128x128xf32>, vector<128x128xf32> -> vector<128x128xf32>
    %c2_16 = arith.constant 2 : index
    %c0_17 = arith.constant 0 : index
    %20 = vector.load %arg3[%c2_16, %c0_17] : memref<8x128xf32, #tpu.memory_space<vmem>>, vector<1x128xf32>
    %21 = vector.broadcast %20 : vector<1x128xf32> to vector<128x128xf32>
    %22 = arith.addf %19, %21 : vector<128x128xf32>
    %23 = arith.mulf %22, %22 : vector<128x128xf32>
    %cst_18 = arith.constant 0.166666672 : f32
    %24 = vector.broadcast %cst_18 : f32 to vector<128x128xf32>
    %25 = arith.mulf %24, %23 : vector<128x128xf32>
    %26 = arith.mulf %22, %0 : vector<128x128xf32>
    %27 = arith.addf %25, %26 : vector<128x128xf32>
    %cst_19 = arith.constant dense<0.000000e+00> : vector<128xf32>
    %28 = vector.multi_reduction <add>, %27, %cst_19 [1] : vector<128x128xf32> to vector<128xf32>
    %29 = vector.shape_cast %28 : vector<128xf32> to vector<128x1xf32>
    %c3 = arith.constant 3 : index
    %c0_20 = arith.constant 0 : index
    %30 = vector.load %arg3[%c3, %c0_20] : memref<8x128xf32, #tpu.memory_space<vmem>>, vector<1x1xf32>
    %31 = vector.broadcast %30 : vector<1x1xf32> to vector<128x1xf32>
    %32 = arith.addf %29, %31 : vector<128x1xf32>
    %c0_21 = arith.constant 0 : index
    %c0_22 = arith.constant 0 : index
    %33 = vector.load %arg4[%c0_21, %c0_22] : memref<128x1xf32, #tpu.memory_space<vmem>>, vector<128x1xf32>
    tpu.vector_store %arg4[%c0_21, %c0_22], %32 {strides = array<i32>} : memref<128x1xf32, #tpu.memory_space<vmem>>, vector<128x1xf32>,
    return
  }
  func.func @transform_0(%arg0: i32) -> (i32, i32) {
    %c0_i32 = arith.constant 0 : i32
    %c0_i32_0 = arith.constant 0 : i32
    return %arg0, %c0_i32 : i32, i32
  }
  func.func @transform_1(%arg0: i32) -> (i32, i32, i32) {
    %c0_i32 = arith.constant 0 : i32
    %c0_i32_0 = arith.constant 0 : i32
    %c0_i32_1 = arith.constant 0 : i32
    %c0_i32_2 = arith.constant 0 : i32
    return %c0_i32, %c0_i32_0, %c0_i32_1 : i32, i32, i32
  }
  func.func @transform_2(%arg0: i32) -> (i32, i32) {
    %c0_i32 = arith.constant 0 : i32
    %c0_i32_0 = arith.constant 0 : i32
    %c0_i32_1 = arith.constant 0 : i32
    return %c0_i32, %c0_i32_0 : i32, i32
  }
  func.func @transform_3(%arg0: i32) -> (i32, i32) {
    %c0_i32 = arith.constant 0 : i32
    %c0_i32_0 = arith.constant 0 : i32
    return %arg0, %c0_i32 : i32, i32
  }
}

</mosaic_0001>

<llo_original>
// kernel: _lambda_.1
$region0: #{_lambda_.1}
  #allocation0 [shape = 'u32[]', space=smem, size = 0x4, offset = 0x4, fixed_abs, tag = 'smem constant byte address 0x4 - core index']
  #allocation1 [shape = 'u32[144,128]{1,0:T(1,128)}', space=vmem, size = 0x12000, scoped, tag = 'internal scratch']
  %s0 = inlined_call_operand.vmem [shape: f32[256,128], index: 0, kind: input, shape index: {}]
  %s1 = inlined_call_operand.vmem [shape: f32[3,128,128], index: 1, kind: input, shape index: {}]
  %s2 = inlined_call_operand.vmem [shape: f32[8,128], index: 2, kind: input, shape index: {}]
  %s3 = inlined_call_operand.vmem [shape: f32[256,1], index: 3, kind: output, shape index: {}]
  %s4 = sld [smem:[#allocation0]]
  $region45: #{_lambda_.1} parent=0
    _
  %s6 = ssub.s32 1, %s4
  %s7 = scalar_select 0, %s6, %s4
  loop: start=0, step=1, limit=4
  $region2: #{_lambda_.1} parent=0 // loop_pre_header
    _
  $region3: #{_lambda_.1} parent=0 // loop_header
    %s9 = sphi 0, %s13
    %p10 = scmp.ge.s32.totalorder %s9, 4
    %s19 = sphi 0, %s21
    %s22 = sphi 0, %s19
    %s23 = sphi 0, %s22
    %s39 = sphi 0, %s23
    %s43 = sphi 0, %s43
    %s45 = sphi 0, %s43
    %s46 = sphi 0, %s45
    %s60 = sphi 0, %s46
    %s64 = sphi 0, %s64
    %s66 = sphi 0, %s64
    %s67 = sphi 0, %s66
    %s81 = sphi 0, %s67
    %s87 = sphi 0, %s89
    %s90 = sphi 0, %s87
    %s91 = sphi 0, %s90
    %s107 = sphi 0, %s91
  $region4: #{_lambda_.1} parent=0 // loop_header_branch
    %12 = sbr.rel (%p10) target = $region8
  $region5: #{_lambda_.1} parent=0 // loop_body
    %s14 = ssub.s32 %s9, 1
    %s15 = ssub.s32 %s9, 2
    %s16 = sadd.s32 %s9, 1
    %s17 = ssub.s32 %s9, %s16
    %p18 = scmp.eq.s32.totalorder %s17, 0
    %s20 = sadd.s32 %s19, 1
    %s21 = scalar_select %p18, %s19, %s20
    %p24 = pneg %p18
    %p25 = scmp.eq.s32.totalorder %s9, 1
    %p26 = por %p24, %p25
    %p27 = scmp.ne.s32.totalorder %s19, %s22
    %p28 = scmp.eq.s32.totalorder %s9, 0
    %p29 = por %p27, %p28
    %p30 = scmp.ne.s32.totalorder %s19, %s22
    %p31 = scmp.eq.s32.totalorder %s14, 1
    %p32 = por %p30, %p31
    %p33 = scmp.ne.s32.totalorder %s22, %s23
    %p34 = scmp.eq.s32.totalorder %s14, 0
    %p35 = por %p33, %p34
    %p36 = scmp.ne.s32.totalorder %s22, %s23
    %p37 = scmp.eq.s32.totalorder %s15, 1
    %p38 = por %p36, %p37
    %p40 = scmp.ne.s32.totalorder %s23, %s39
    %p41 = scmp.eq.s32.totalorder %s15, 0
    %p42 = por %p40, %p41
    %s44 = sadd.s32 %s43, 1
    %p47 = scmp.eq.s32.totalorder %s9, 1
    %p48 = scmp.ne.s32.totalorder %s43, %s45
    %p49 = scmp.eq.s32.totalorder %s9, 0
    %p50 = por %p48, %p49
    %p51 = scmp.ne.s32.totalorder %s43, %s45
    %p52 = scmp.eq.s32.totalorder %s14, 1
    %p53 = por %p51, %p52
    %p54 = scmp.ne.s32.totalorder %s45, %s46
    %p55 = scmp.eq.s32.totalorder %s14, 0
    %p56 = por %p54, %p55
    %p57 = scmp.ne.s32.totalorder %s45, %s46
    %p58 = scmp.eq.s32.totalorder %s15, 1
    %p59 = por %p57, %p58
    %p61 = scmp.ne.s32.totalorder %s46, %s60
    %p62 = scmp.eq.s32.totalorder %s15, 0
    %p63 = por %p61, %p62
    %s65 = sadd.s32 %s64, 1
    %p68 = scmp.eq.s32.totalorder %s9, 1
    %p69 = scmp.ne.s32.totalorder %s64, %s66
    %p70 = scmp.eq.s32.totalorder %s9, 0
    %p71 = por %p69, %p70
    %p72 = scmp.ne.s32.totalorder %s64, %s66
    %p73 = scmp.eq.s32.totalorder %s14, 1
    %p74 = por %p72, %p73
    %p75 = scmp.ne.s32.totalorder %s66, %s67
    %p76 = scmp.eq.s32.totalorder %s14, 0
    %p77 = por %p75, %p76
    %p78 = scmp.ne.s32.totalorder %s66, %s67
    %p79 = scmp.eq.s32.totalorder %s15, 1
    %p80 = por %p78, %p79
    %p82 = scmp.ne.s32.totalorder %s67, %s81
    %p83 = scmp.eq.s32.totalorder %s15, 0
    %p84 = por %p82, %p83
    %s85 = ssub.s32 %s9, %s16
    %p86 = scmp.eq.s32.totalorder %s85, 0
    %s88 = sadd.s32 %s87, 1
    %s89 = scalar_select %p86, %s87, %s88
    %p92 = pneg %p86
    %p93 = scmp.eq.s32.totalorder %s9, 1
    %p94 = por %p92, %p93
    %p95 = scmp.ne.s32.totalorder %s87, %s90
    %p96 = scmp.eq.s32.totalorder %s9, 0
    %p97 = por %p95, %p96
    %p98 = scmp.ne.s32.totalorder %s87, %s90
    %p99 = scmp.eq.s32.totalorder %s14, 1
    %p100 = por %p98, %p99
    %p101 = scmp.ne.s32.totalorder %s90, %s91
    %p102 = scmp.eq.s32.totalorder %s14, 0
    %p103 = por %p101, %p102
    %p104 = scmp.ne.s32.totalorder %s90, %s91
    %p105 = scmp.eq.s32.totalorder %s15, 1
    %p106 = por %p104, %p105
    %p108 = scmp.ne.s32.totalorder %s91, %s107
    %p109 = scmp.eq.s32.totalorder %s15, 0
    %p110 = por %p108, %p109
    %p111 = scmp.le.s32.totalorder 1, %s9
    %p112 = scmp.lt.s32.totalorder %s9, 3
    %p113 = pnand %p111, %p112
    %p114 = pneg %p113
    // Predicated region
    $region9: #{_lambda_.1} parent=5 // pred_check
      _
    $region10: #{_lambda_.1} parent=5 // pred_check_branch
      %116 = sbr.rel (%p113) target = $region12
    $region11: #{_lambda_.1} parent=5 // pred_region
      %s117 = ssub.s32 %s9, 1
      // Predicated region
      $region13: #{_lambda_.1} parent=11 // pred_check
        %p118 = pneg %p56
      $region14: #{_lambda_.1} parent=11 // pred_check_branch
        %120 = sbr.rel (%p118) target = $region16
      $region15: #{_lambda_.1} parent=11 // pred_region
        _
      $region16: #{_lambda_.1} parent=11 // pred_fallthru
        _
      // Predicated region
      $region17: #{_lambda_.1} parent=11 // pred_check
        %p121 = pneg %p77
      $region18: #{_lambda_.1} parent=11 // pred_check_branch
        %123 = sbr.rel (%p121) target = $region20
      $region19: #{_lambda_.1} parent=11 // pred_region
        _
      $region20: #{_lambda_.1} parent=11 // pred_fallthru
        _
    $region12: #{_lambda_.1} parent=5 // pred_fallthru
      _
    %p124 = scmp.lt.s32.totalorder %s9, 2
    // Predicated region
    $region21: #{_lambda_.1} parent=5 // pred_check
      %p125 = pneg %p124
    $region22: #{_lambda_.1} parent=5 // pred_check_branch
      %127 = sbr.rel (%p125) target = $region24
    $region23: #{_lambda_.1} parent=5 // pred_region
      // Predicated region
      $region25: #{_lambda_.1} parent=23 // pred_check
        %p128 = pneg %p29
      $region26: #{_lambda_.1} parent=23 // pred_check_branch
        %130 = sbr.rel (%p128) target = $region28
      $region27: #{_lambda_.1} parent=23 // pred_region
        %s131 = smul.u32 16, %s9
        %p132 = scmp.lt.s32.totalorder %s131, 31
        %s133 = scalar_select %p132, %s131, 31
        %s134 = smul.addr %s133, 8
        %s135 = scalar_lea.vmem %s0, %s134
        %s136 = smul.u32 16, %s9
      $region28: #{_lambda_.1} parent=23 // pred_fallthru
        _
    $region24: #{_lambda_.1} parent=5 // pred_fallthru
      _
    %p137 = scmp.le.s32.totalorder 1, %s9
    %p138 = scmp.lt.s32.totalorder %s9, 3
    %p139 = pnand %p137, %p138
    %p140 = pneg %p139
    // Predicated region
    $region29: #{_lambda_.1} parent=5 // pred_check
      _
    $region30: #{_lambda_.1} parent=5 // pred_check_branch
      %142 = sbr.rel (%p139) target = $region32
    $region31: #{_lambda_.1} parent=5 // pred_region
      %s143 = ssub.s32 %s9, 1
      %s144 = smul.u32 16, %s14
      %p145 = scmp.lt.s32.totalorder %s144, 31
      %s146 = scalar_select %p145, %s144, 31
      %s147 = smul.addr %s146, 8
      %s148 = scalar_lea.vmem %s0, %s147
      %p149 = pneg %p35
      %p150 = pneg %p32
      %p151 = pneg %p56
      %p152 = pneg %p53
      %p153 = pneg %p77
      %p154 = pneg %p74
      %p155 = pneg %p103
      %p156 = pneg %p100
      %s157 = smul.u32 16, %s14
      %p158 = scmp.lt.s32.totalorder %s157, 31
      %s159 = scalar_select %p158, %s157, 31
      %s160 = smul.addr %s159, 8
      %s161 = scalar_lea.vmem %s3, %s160
      %s162 = smul.u32 16, %s14
      %p163 = scmp.lt.s32.totalorder %s162, 31
      %s164 = scalar_select %p163, %s162, 31
      %s165 = smul.addr %s164, 8
      %s166 = scalar_lea.vmem %s0, %s165
      %s167 = smul.u32 16, %s14
      %s168 = smul.u32 16, %s14
      %p169 = scmp.lt.s32.totalorder %s168, 31
      %s170 = scalar_select %p169, %s168, 31
      %s171 = smul.addr %s170, 8
      %s172 = scalar_lea.vmem %s3, %s171
      %s173 = smul.u32 16, %s14
      %v174 = vld [vmem:[%s166] sm:$0xff]
      %v175 = vld [vmem:[%s166 + $0x8] sm:$0xff]
      %v176 = vld [vmem:[%s166 + $0x10] sm:$0xff]
      %v177 = vld [vmem:[%s166 + $0x18] sm:$0xff]
      %v178 = vld [vmem:[%s166 + $0x20] sm:$0xff]
      %v179 = vld [vmem:[%s166 + $0x28] sm:$0xff]
      %v180 = vld [vmem:[%s166 + $0x30] sm:$0xff]
      %v181 = vld [vmem:[%s166 + $0x38] sm:$0xff]
      %v182 = vld [vmem:[%s166 + $0x40] sm:$0xff]
      %v183 = vld [vmem:[%s166 + $0x48] sm:$0xff]
      %v184 = vld [vmem:[%s166 + $0x50] sm:$0xff]
      %v185 = vld [vmem:[%s166 + $0x58] sm:$0xff]
      %v186 = vld [vmem:[%s166 + $0x60] sm:$0xff]
      %v187 = vld [vmem:[%s166 + $0x68] sm:$0xff]
      %v188 = vld [vmem:[%s166 + $0x70] sm:$0xff]
      %v189 = vld [vmem:[%s166 + $0x78] sm:$0xff]
      %v190 = vld [vmem:[%s1] sm:$0xff]
      %v191 = vld [vmem:[%s1 + $0x8] sm:$0xff]
      %v192 = vld [vmem:[%s1 + $0x10] sm:$0xff]
      %v193 = vld [vmem:[%s1 + $0x18] sm:$0xff]
      %v194 = vld [vmem:[%s1 + $0x20] sm:$0xff]
      %v195 = vld [vmem:[%s1 + $0x28] sm:$0xff]
      %v196 = vld [vmem:[%s1 + $0x30] sm:$0xff]
      %v197 = vld [vmem:[%s1 + $0x38] sm:$0xff]
      %v198 = vld [vmem:[%s1 + $0x40] sm:$0xff]
      %v199 = vld [vmem:[%s1 + $0x48] sm:$0xff]
      %v200 = vld [vmem:[%s1 + $0x50] sm:$0xff]
      %v201 = vld [vmem:[%s1 + $0x58] sm:$0xff]
      %v202 = vld [vmem:[%s1 + $0x60] sm:$0xff]
      %v203 = vld [vmem:[%s1 + $0x68] sm:$0xff]
      %v204 = vld [vmem:[%s1 + $0x70] sm:$0xff]
      %v205 = vld [vmem:[%s1 + $0x78] sm:$0xff]
      %v206 = vld [vmem:[%s2] sm:$0x1]
      %v207 = vlaneseq
      %v208 = vshrl.u32 %v207, 7
      %v209 = vsub.s32 0, %v208
      %v210 = vrot.slane %v206, %v209
      %211 = vmatprep.subr.mxu0 0.0
      %v212 = vand.u32 %v190, 4294901760
      %213 = vmatpush1.msra.mxu0 %v212
      %214 = vmatprep.subr.mxu0 0.0
      %v215 = vand.u32 %v191, 4294901760
      %216 = vmatpush1.msra.mxu0 %v215
      %217 = vmatprep.subr.mxu0 0.0
      %v218 = vand.u32 %v192, 4294901760
      %219 = vmatpush1.msra.mxu0 %v218
      %220 = vmatprep.subr.mxu0 0.0
      %v221 = vand.u32 %v193, 4294901760
      %222 = vmatpush1.msra.mxu0 %v221
      %223 = vmatprep.subr.mxu0 0.0
      %v224 = vand.u32 %v194, 4294901760
      %225 = vmatpush1.msra.mxu0 %v224
      %226 = vmatprep.subr.mxu0 0.0
      %v227 = vand.u32 %v195, 4294901760
      %228 = vmatpush1.msra.mxu0 %v227
      %229 = vmatprep.subr.mxu0 0.0
      %v230 = vand.u32 %v196, 4294901760
      %231 = vmatpush1.msra.mxu0 %v230
      %232 = vmatprep.subr.mxu0 0.0
      %v233 = vand.u32 %v197, 4294901760
      %234 = vmatpush1.msra.mxu0 %v233
      %235 = vmatprep.subr.mxu0 0.0
      %v236 = vand.u32 %v198, 4294901760
      %237 = vmatpush1.msra.mxu0 %v236
      %238 = vmatprep.subr.mxu0 0.0
      %v239 = vand.u32 %v199, 4294901760
      %240 = vmatpush1.msra.mxu0 %v239
      %241 = vmatprep.subr.mxu0 0.0
      %v242 = vand.u32 %v200, 4294901760
      %243 = vmatpush1.msra.mxu0 %v242
      %244 = vmatprep.subr.mxu0 0.0
      %v245 = vand.u32 %v201, 4294901760
      %246 = vmatpush1.msra.mxu0 %v245
      %247 = vmatprep.subr.mxu0 0.0
      %v248 = vand.u32 %v202, 4294901760
      %249 = vmatpush1.msra.mxu0 %v248
      %250 = vmatprep.subr.mxu0 0.0
      %v251 = vand.u32 %v203, 4294901760
      %252 = vmatpush1.msra.mxu0 %v251
      %253 = vmatprep.subr.mxu0 0.0
      %v254 = vand.u32 %v204, 4294901760
      %255 = vmatpush1.msra.mxu0 %v254
      %256 = vmatprep.subr.mxu0 0.0
      %v257 = vand.u32 %v205, 4294901760
      %258 = vmatpush1.msra.mxu0 %v257
      %259 = vmatprep.subr.mxu0 0.0
      %260 = vmatpush1.msra.mxu0 0.0
      %261 = vmatprep.subr.mxu0 0.0
      %262 = vmatpush1.msra.mxu0 0.0
      %263 = vmatprep.subr.mxu0 0.0
      %264 = vmatpush1.msra.mxu0 0.0
      %265 = vmatprep.subr.mxu0 0.0
      %266 = vmatpush1.msra.mxu0 0.0
      %267 = vmatprep.subr.mxu0 0.0
      %268 = vmatpush1.msra.mxu0 0.0
      %269 = vmatprep.subr.mxu0 0.0
      %270 = vmatpush1.msra.mxu0 0.0
      %271 = vmatprep.subr.mxu0 0.0
      %272 = vmatpush1.msra.mxu0 0.0
      %273 = vmatprep.subr.mxu0 0.0
      %274 = vmatpush1.msra.mxu0 0.0
      %275 = vmatprep.subr.mxu0 0.0
      %276 = vmatpush1.msra.mxu0 0.0
      %277 = vmatprep.subr.mxu0 0.0
      %278 = vmatpush1.msra.mxu0 0.0
      %279 = vmatprep.subr.mxu0 0.0
      %280 = vmatpush1.msra.mxu0 0.0
      %281 = vmatprep.subr.mxu0 0.0
      %282 = vmatpush1.msra.mxu0 0.0
      %283 = vmatprep.subr.mxu0 0.0
      %284 = vmatpush1.msra.mxu0 0.0
      %285 = vmatprep.subr.mxu0 0.0
      %286 = vmatpush1.msra.mxu0 0.0
      %287 = vmatprep.subr.mxu0 0.0
      %288 = vmatpush1.msra.mxu0 0.0
      %289 = vmatprep.subr.mxu0 0.0
      %290 = vmatpush1.msra.mxu0 0.0
      %291 = vmatprep.mubr.f32.mxu0 0.0
      %v292 = vand.u32 %v174, 4294901760
      %v293 = vsub.f32 %v174, %v292
      %v294 = vand.u32 %v293, 4294901760
      %v295 = vsub.f32 %v293, %v294
      %v296 = vand.u32 %v295, 4294901760
      %297 = vmatmul.mubr.f32.gmra.mrb[0].mxu0 %v296
      %v298 = vpop.f32.mrb[0].mxu0
      %v299 = vadd.f32 %v210, %v298
      %v300 = vpop.f32.mrb[0].mxu0
      %301 = vmatprep.mubr.f32.mxu0 0.0
      %v302 = vand.u32 %v175, 4294901760
      %v303 = vsub.f32 %v175, %v302
      %v304 = vand.u32 %v303, 4294901760
      %v305 = vsub.f32 %v303, %v304
      %v306 = vand.u32 %v305, 4294901760
      %307 = vmatmul.mubr.f32.gmra.mrb[0].mxu0 %v306
      %v308 = vpop.f32.mrb[0].mxu0
      %v309 = vadd.f32 %v210, %v308
      %v310 = vpop.f32.mrb[0].mxu0
      %311 = vmatprep.mubr.f32.mxu0 0.0
      %v312 = vand.u32 %v176, 4294901760
      %v313 = vsub.f32 %v176, %v312
      %v314 = vand.u32 %v313, 4294901760
      %v315 = vsub.f32 %v313, %v314
      %v316 = vand.u32 %v315, 4294901760
      %317 = vmatmul.mubr.f32.gmra.mrb[0].mxu0 %v316
      %v318 = vpop.f32.mrb[0].mxu0
      %v319 = vadd.f32 %v210, %v318
      %v320 = vpop.f32.mrb[0].mxu0
      %321 = vmatprep.mubr.f32.mxu0 0.0
      %v322 = vand.u32 %v177, 4294901760
      %v323 = vsub.f32 %v177, %v322
      %v324 = vand.u32 %v323, 4294901760
      %v325 = vsub.f32 %v323, %v324
      %v326 = vand.u32 %v325, 4294901760
      %327 = vmatmul.mubr.f32.gmra.mrb[0].mxu0 %v326
      %v328 = vpop.f32.mrb[0].mxu0
      %v329 = vadd.f32 %v210, %v328
      %v330 = vpop.f32.mrb[0].mxu0
      %331 = vmatprep.mubr.f32.mxu0 0.0
      %v332 = vand.u32 %v178, 4294901760
      %v333 = vsub.f32 %v178, %v332
      %v334 = vand.u32 %v333, 4294901760
      %v335 = vsub.f32 %v333, %v334
      %v336 = vand.u32 %v335, 4294901760
      %337 = vmatmul.mubr.f32.gmra.mrb[0].mxu0 %v336
      %v338 = vpop.f32.mrb[0].mxu0
      %v339 = vadd.f32 %v210, %v338
      %v340 = vpop.f32.mrb[0].mxu0
      %341 = vmatprep.mubr.f32.mxu0 0.0
      %v342 = vand.u32 %v179, 4294901760
      %v343 = vsub.f32 %v179, %v342
      %v344 = vand.u32 %v343, 4294901760
      %v345 = vsub.f32 %v343, %v344
      %v346 = vand.u32 %v345, 4294901760
      %347 = vmatmul.mubr.f32.gmra.mrb[0].mxu0 %v346
      %v348 = vpop.f32.mrb[0].mxu0
      %v349 = vadd.f32 %v210, %v348
      %v350 = vpop.f32.mrb[0].mxu0
      %351 = vmatprep.mubr.f32.mxu0 0.0
      %v352 = vand.u32 %v180, 4294901760
      %v353 = vsub.f32 %v180, %v352
      %v354 = vand.u32 %v353, 4294901760
      %v355 = vsub.f32 %v353, %v354
      %v356 = vand.u32 %v355, 4294901760
      %357 = vmatmul.mubr.f32.gmra.mrb[0].mxu0 %v356
      %v358 = vpop.f32.mrb[0].mxu0
      %v359 = vadd.f32 %v210, %v358
      %v360 = vpop.f32.mrb[0].mxu0
      %361 = vmatprep.mubr.f32.mxu0 0.0
      %v362 = vand.u32 %v181, 4294901760
      %v363 = vsub.f32 %v181, %v362
      %v364 = vand.u32 %v363, 4294901760
      %v365 = vsub.f32 %v363, %v364
      %v366 = vand.u32 %v365, 4294901760
      %367 = vmatmul.mubr.f32.gmra.mrb[0].mxu0 %v366
      %v368 = vpop.f32.mrb[0].mxu0
      %v369 = vadd.f32 %v210, %v368
      %v370 = vpop.f32.mrb[0].mxu0
      %371 = vmatprep.mubr.f32.mxu0 0.0
      %v372 = vand.u32 %v182, 4294901760
      %v373 = vsub.f32 %v182, %v372
      %v374 = vand.u32 %v373, 4294901760
      %v375 = vsub.f32 %v373, %v374
      %v376 = vand.u32 %v375, 4294901760
      %377 = vmatmul.mubr.f32.gmra.mrb[0].mxu0 %v376
      %v378 = vpop.f32.mrb[0].mxu0
      %v379 = vadd.f32 %v210, %v378
      %v380 = vpop.f32.mrb[0].mxu0
      %381 = vmatprep.mubr.f32.mxu0 0.0
      %v382 = vand.u32 %v183, 4294901760
      %v383 = vsub.f32 %v183, %v382
      %v384 = vand.u32 %v383, 4294901760
      %v385 = vsub.f32 %v383, %v384
      %v386 = vand.u32 %v385, 4294901760
      %387 = vmatmul.mubr.f32.gmra.mrb[0].mxu0 %v386
      %v388 = vpop.f32.mrb[0].mxu0
      %v389 = vadd.f32 %v210, %v388
      %v390 = vpop.f32.mrb[0].mxu0
      %391 = vmatprep.mubr.f32.mxu0 0.0
      %v392 = vand.u32 %v184, 4294901760
      %v393 = vsub.f32 %v184, %v392
      %v394 = vand.u32 %v393, 4294901760
      %v395 = vsub.f32 %v393, %v394
      %v396 = vand.u32 %v395, 4294901760
      %397 = vmatmul.mubr.f32.gmra.mrb[0].mxu0 %v396
      %v398 = vpop.f32.mrb[0].mxu0
      %v399 = vadd.f32 %v210, %v398
      %v400 = vpop.f32.mrb[0].mxu0
      %401 = vmatprep.mubr.f32.mxu0 0.0
      %v402 = vand.u32 %v185, 4294901760
      %v403 = vsub.f32 %v185, %v402
      %v404 = vand.u32 %v403, 4294901760
      %v405 = vsub.f32 %v403, %v404
      %v406 = vand.u32 %v405, 4294901760
      %407 = vmatmul.mubr.f32.gmra.mrb[0].mxu0 %v406
      %v408 = vpop.f32.mrb[0].mxu0
      %v409 = vadd.f32 %v210, %v408
      %v410 = vpop.f32.mrb[0].mxu0
      %411 = vmatprep.mubr.f32.mxu0 0.0
      %v412 = vand.u32 %v186, 4294901760
      %v413 = vsub.f32 %v186, %v412
      %v414 = vand.u32 %v413, 4294901760
      %v415 = vsub.f32 %v413, %v414
      %v416 = vand.u32 %v415, 4294901760
      %417 = vmatmul.mubr.f32.gmra.mrb[0].mxu0 %v416
      %v418 = vpop.f32.mrb[0].mxu0
      %v419 = vadd.f32 %v210, %v418
      %v420 = vpop.f32.mrb[0].mxu0
      %421 = vmatprep.mubr.f32.mxu0 0.0
      %v422 = vand.u32 %v187, 4294901760
      %v423 = vsub.f32 %v187, %v422
      %v424 = vand.u32 %v423, 4294901760
      %v425 = vsub.f32 %v423, %v424
      %v426 = vand.u32 %v425, 4294901760
      %427 = vmatmul.mubr.f32.gmra.mrb[0].mxu0 %v426
      %v428 = vpop.f32.mrb[0].mxu0
      %v429 = vadd.f32 %v210, %v428
      %v430 = vpop.f32.mrb[0].mxu0
      %431 = vmatprep.mubr.f32.mxu0 0.0
      %v432 = vand.u32 %v188, 4294901760
      %v433 = vsub.f32 %v188, %v432
      %v434 = vand.u32 %v433, 4294901760
      %v435 = vsub.f32 %v433, %v434
      %v436 = vand.u32 %v435, 4294901760
      %437 = vmatmul.mubr.f32.gmra.mrb[0].mxu0 %v436
      %v438 = vpop.f32.mrb[0].mxu0
      %v439 = vadd.f32 %v210, %v438
      %v440 = vpop.f32.mrb[0].mxu0
      %441 = vmatprep.mubr.f32.mxu0 0.0
      %v442 = vand.u32 %v189, 4294901760
      %v443 = vsub.f32 %v189, %v442
      %v444 = vand.u32 %v443, 4294901760
      %v445 = vsub.f32 %v443, %v444
      %v446 = vand.u32 %v445, 4294901760
      %447 = vmatmul.mubr.f32.gmra.mrb[0].mxu0 %v446
      %v448 = vpop.f32.mrb[0].mxu0
      %v449 = vadd.f32 %v210, %v448
      %v450 = vpop.f32.mrb[0].mxu0
      %451 = vdwg.mxu0
      %452 = vmatprep.subr.mxu0 0.0
      %v453 = vand.u32 %v190, 4294901760
      %v454 = vsub.f32 %v190, %v453
      %v455 = vand.u32 %v454, 4294901760
      %v456 = vsub.f32 %v454, %v455
      %v457 = vand.u32 %v456, 4294901760
      %458 = vmatpush1.msra.mxu0 %v457
      %459 = vmatprep.subr.mxu0 0.0
      %v460 = vand.u32 %v191, 4294901760
      %v461 = vsub.f32 %v191, %v460
      %v462 = vand.u32 %v461, 4294901760
      %v463 = vsub.f32 %v461, %v462
      %v464 = vand.u32 %v463, 4294901760
      %465 = vmatpush1.msra.mxu0 %v464
      %466 = vmatprep.subr.mxu0 0.0
      %v467 = vand.u32 %v192, 4294901760
      %v468 = vsub.f32 %v192, %v467
      %v469 = vand.u32 %v468, 4294901760
      %v470 = vsub.f32 %v468, %v469
      %v471 = vand.u32 %v470, 4294901760
      %472 = vmatpush1.msra.mxu0 %v471
      %473 = vmatprep.subr.mxu0 0.0
      %v474 = vand.u32 %v193, 4294901760
      %v475 = vsub.f32 %v193, %v474
      %v476 = vand.u32 %v475, 4294901760
      %v477 = vsub.f32 %v475, %v476
      %v478 = vand.u32 %v477, 4294901760
      %479 = vmatpush1.msra.mxu0 %v478
      %480 = vmatprep.subr.mxu0 0.0
      %v481 = vand.u32 %v194, 4294901760
      %v482 = vsub.f32 %v194, %v481
      %v483 = vand.u32 %v482, 4294901760
      %v484 = vsub.f32 %v482, %v483
      %v485 = vand.u32 %v484, 4294901760
      %486 = vmatpush1.msra.mxu0 %v485
      %487 = vmatprep.subr.mxu0 0.0
      %v488 = vand.u32 %v195, 4294901760
      %v489 = vsub.f32 %v195, %v488
      %v490 = vand.u32 %v489, 4294901760
      %v491 = vsub.f32 %v489, %v490
      %v492 = vand.u32 %v491, 4294901760
      %493 = vmatpush1.msra.mxu0 %v492
      %494 = vmatprep.subr.mxu0 0.0
      %v495 = vand.u32 %v196, 4294901760
      %v496 = vsub.f32 %v196, %v495
      %v497 = vand.u32 %v496, 4294901760
      %v498 = vsub.f32 %v496, %v497
      %v499 = vand.u32 %v498, 4294901760
      %500 = vmatpush1.msra.mxu0 %v499
      %501 = vmatprep.subr.mxu0 0.0
      %v502 = vand.u32 %v197, 4294901760
      %v503 = vsub.f32 %v197, %v502
      %v504 = vand.u32 %v503, 4294901760
      %v505 = vsub.f32 %v503, %v504
      %v506 = vand.u32 %v505, 4294901760
      %507 = vmatpush1.msra.mxu0 %v506
      %508 = vmatprep.subr.mxu0 0.0
      %v509 = vand.u32 %v198, 4294901760
      %v510 = vsub.f32 %v198, %v509
      %v511 = vand.u32 %v510, 4294901760
      %v512 = vsub.f32 %v510, %v511
      %v513 = vand.u32 %v512, 4294901760
      %514 = vmatpush1.msra.mxu0 %v513
      %515 = vmatprep.subr.mxu0 0.0
      %v516 = vand.u32 %v199, 4294901760
      %v517 = vsub.f32 %v199, %v516
      %v518 = vand.u32 %v517, 4294901760
      %v519 = vsub.f32 %v517, %v518
      %v520 = vand.u32 %v519, 4294901760
      %521 = vmatpush1.msra.mxu0 %v520
      %522 = vmatprep.subr.mxu0 0.0
      %v523 = vand.u32 %v200, 4294901760
      %v524 = vsub.f32 %v200, %v523
      %v525 = vand.u32 %v524, 4294901760
      %v526 = vsub.f32 %v524, %v525
      %v527 = vand.u32 %v526, 4294901760
      %528 = vmatpush1.msra.mxu0 %v527
      %529 = vmatprep.subr.mxu0 0.0
      %v530 = vand.u32 %v201, 4294901760
      %v531 = vsub.f32 %v201, %v530
      %v532 = vand.u32 %v531, 4294901760
      %v533 = vsub.f32 %v531, %v532
      %v534 = vand.u32 %v533, 4294901760
      %535 = vmatpush1.msra.mxu0 %v534
      %536 = vmatprep.subr.mxu0 0.0
      %v537 = vand.u32 %v202, 4294901760
      %v538 = vsub.f32 %v202, %v537
      %v539 = vand.u32 %v538, 4294901760
      %v540 = vsub.f32 %v538, %v539
      %v541 = vand.u32 %v540, 4294901760
      %542 = vmatpush1.msra.mxu0 %v541
      %543 = vmatprep.subr.mxu0 0.0
      %v544 = vand.u32 %v203, 4294901760
      %v545 = vsub.f32 %v203, %v544
      %v546 = vand.u32 %v545, 4294901760
      %v547 = vsub.f32 %v545, %v546
      %v548 = vand.u32 %v547, 4294901760
      %549 = vmatpush1.msra.mxu0 %v548
      %550 = vmatprep.subr.mxu0 0.0
      %v551 = vand.u32 %v204, 4294901760
      %v552 = vsub.f32 %v204, %v551
      %v553 = vand.u32 %v552, 4294901760
      %v554 = vsub.f32 %v552, %v553
      %v555 = vand.u32 %v554, 4294901760
      %556 = vmatpush1.msra.mxu0 %v555
      %557 = vmatprep.subr.mxu0 0.0
      %v558 = vand.u32 %v205, 4294901760
      %v559 = vsub.f32 %v205, %v558
      %v560 = vand.u32 %v559, 4294901760
      %v561 = vsub.f32 %v559, %v560
      %v562 = vand.u32 %v561, 4294901760
      %563 = vmatpush1.msra.mxu0 %v562
      %564 = vmatprep.subr.mxu0 0.0
      %565 = vmatpush1.msra.mxu0 0.0
      %566 = vmatprep.subr.mxu0 0.0
      %567 = vmatpush1.msra.mxu0 0.0
      %568 = vmatprep.subr.mxu0 0.0
      %569 = vmatpush1.msra.mxu0 0.0
      %570 = vmatprep.subr.mxu0 0.0
      %571 = vmatpush1.msra.mxu0 0.0
      %572 = vmatprep.subr.mxu0 0.0
      %573 = vmatpush1.msra.mxu0 0.0
      %574 = vmatprep.subr.mxu0 0.0
      %575 = vmatpush1.msra.mxu0 0.0
      %576 = vmatprep.subr.mxu0 0.0
      %577 = vmatpush1.msra.mxu0 0.0
      %578 = vmatprep.subr.mxu0 0.0
      %579 = vmatpush1.msra.mxu0 0.0
      %580 = vmatprep.subr.mxu0 0.0
      %581 = vmatpush1.msra.mxu0 0.0
      %582 = vmatprep.subr.mxu0 0.0
      %583 = vmatpush1.msra.mxu0 0.0
      %584 = vmatprep.subr.mxu0 0.0
      %585 = vmatpush1.msra.mxu0 0.0
      %586 = vmatprep.subr.mxu0 0.0
      %587 = vmatpush1.msra.mxu0 0.0
      %588 = vmatprep.subr.mxu0 0.0
      %589 = vmatpush1.msra.mxu0 0.0
      %590 = vmatprep.subr.mxu0 0.0
      %591 = vmatpush1.msra.mxu0 0.0
      %592 = vmatprep.subr.mxu0 0.0
      %593 = vmatpush1.msra.mxu0 0.0
      %594 = vmatprep.subr.mxu0 0.0
      %595 = vmatpush1.msra.mxu0 0.0
      %596 = vmatprep.mubr.f32.mxu0 0.0
      %v597 = vand.u32 %v174, 4294901760
      %598 = vmatmul.mubr.f32.gmra.mrb[0].mxu0 %v597
      %v599 = vpop.f32.mrb[0].mxu0
      %v600 = vadd.f32 %v299, %v599
      %v601 = vpop.f32.mrb[0].mxu0
      %602 = vmatprep.mubr.f32.mxu0 0.0
      %v603 = vand.u32 %v175, 4294901760
      %604 = vmatmul.mubr.f32.gmra.mrb[0].mxu0 %v603
      %v605 = vpop.f32.mrb[0].mxu0
      %v606 = vadd.f32 %v309, %v605
      %v607 = vpop.f32.mrb[0].mxu0
      %608 = vmatprep.mubr.f32.mxu0 0.0
      %v609 = vand.u32 %v176, 4294901760
      %610 = vmatmul.mubr.f32.gmra.mrb[0].mxu0 %v609
      %v611 = vpop.f32.mrb[0].mxu0
      %v612 = vadd.f32 %v319, %v611
      %v613 = vpop.f32.mrb[0].mxu0
      %614 = vmatprep.mubr.f32.mxu0 0.0
      %v615 = vand.u32 %v177, 4294901760
      %616 = vmatmul.mubr.f32.gmra.mrb[0].mxu0 %v615
      %v617 = vpop.f32.mrb[0].mxu0
      %v618 = vadd.f32 %v329, %v617
      %v619 = vpop.f32.mrb[0].mxu0
      %620 = vmatprep.mubr.f32.mxu0 0.0
      %v621 = vand.u32 %v178, 4294901760
      %622 = vmatmul.mubr.f32.gmra.mrb[0].mxu0 %v621
      %v623 = vpop.f32.mrb[0].mxu0
      %v624 = vadd.f32 %v339, %v623
      %v625 = vpop.f32.mrb[0].mxu0
      %626 = vmatprep.mubr.f32.mxu0 0.0
      %v627 = vand.u32 %v179, 4294901760
      %628 = vmatmul.mubr.f32.gmra.mrb[0].mxu0 %v627
      %v629 = vpop.f32.mrb[0].mxu0
      %v630 = vadd.f32 %v349, %v629
      %v631 = vpop.f32.mrb[0].mxu0
      %632 = vmatprep.mubr.f32.mxu0 0.0
      %v633 = vand.u32 %v180, 4294901760
      %634 = vmatmul.mubr.f32.gmra.mrb[0].mxu0 %v633
      %v635 = vpop.f32.mrb[0].mxu0
      %v636 = vadd.f32 %v359, %v635
      %v637 = vpop.f32.mrb[0].mxu0
      %638 = vmatprep.mubr.f32.mxu0 0.0
      %v639 = vand.u32 %v181, 4294901760
      %640 = vmatmul.mubr.f32.gmra.mrb[0].mxu0 %v639
      %v641 = vpop.f32.mrb[0].mxu0
      %v642 = vadd.f32 %v369, %v641
      %v643 = vpop.f32.mrb[0].mxu0
      %644 = vmatprep.mubr.f32.mxu0 0.0
      %v645 = vand.u32 %v182, 4294901760
      %646 = vmatmul.mubr.f32.gmra.mrb[0].mxu0 %v645
      %v647 = vpop.f32.mrb[0].mxu0
      %v648 = vadd.f32 %v379, %v647
      %v649 = vpop.f32.mrb[0].mxu0
      %650 = vmatprep.mubr.f32.mxu0 0.0
      %v651 = vand.u32 %v183, 4294901760
      %652 = vmatmul.mubr.f32.gmra.mrb[0].mxu0 %v651
      %v653 = vpop.f32.mrb[0].mxu0
      %v654 = vadd.f32 %v389, %v653
      %v655 = vpop.f32.mrb[0].mxu0
      %656 = vmatprep.mubr.f32.mxu0 0.0
      %v657 = vand.u32 %v184, 4294901760
      %658 = vmatmul.mubr.f32.gmra.mrb[0].mxu0 %v657
      %v659 = vpop.f32.mrb[0].mxu0
      %v660 = vadd.f32 %v399, %v659
      %v661 = vpop.f32.mrb[0].mxu0
      %662 = vmatprep.mubr.f32.mxu0 0.0
      %v663 = vand.u32 %v185, 4294901760
      %664 = vmatmul.mubr.f32.gmra.mrb[0].mxu0 %v663
      %v665 = vpop.f32.mrb[0].mxu0
      %v666 = vadd.f32 %v409, %v665
      %v667 = vpop.f32.mrb[0].mxu0
      %668 = vmatprep.mubr.f32.mxu0 0.0
      %v669 = vand.u32 %v186, 4294901760
      %670 = vmatmul.mubr.f32.gmra.mrb[0].mxu0 %v669
      %v671 = vpop.f32.mrb[0].mxu0
      %v672 = vadd.f32 %v419, %v671
      %v673 = vpop.f32.mrb[0].mxu0
      %674 = vmatprep.mubr.f32.mxu0 0.0
      %v675 = vand.u32 %v187, 4294901760
      %676 = vmatmul.mubr.f32.gmra.mrb[0].mxu0 %v675
      %v677 = vpop.f32.mrb[0].mxu0
      %v678 = vadd.f32 %v429, %v677
      %v679 = vpop.f32.mrb[0].mxu0
      %680 = vmatprep.mubr.f32.mxu0 0.0
      %v681 = vand.u32 %v188, 4294901760
      %682 = vmatmul.mubr.f32.gmra.mrb[0].mxu0 %v681
      %v683 = vpop.f32.mrb[0].mxu0
      %v684 = vadd.f32 %v439, %v683
      %v685 = vpop.f32.mrb[0].mxu0
      %686 = vmatprep.mubr.f32.mxu0 0.0
      %v687 = vand.u32 %v189, 4294901760
      %688 = vmatmul.mubr.f32.gmra.mrb[0].mxu0 %v687
      %v689 = vpop.f32.mrb[0].mxu0
      %v690 = vadd.f32 %v449, %v689
      %v691 = vpop.f32.mrb[0].mxu0
      %692 = vdwg.mxu0
      %693 = vmatprep.subr.mxu0 0.0
      %v694 = vand.u32 %v190, 4294901760
      %v695 = vsub.f32 %v190, %v694
      %696 = vmatpush1.msra.mxu0 %v695
      %697 = vmatprep.subr.mxu0 0.0
      %v698 = vand.u32 %v191, 4294901760
      %v699 = vsub.f32 %v191, %v698
      %700 = vmatpush1.msra.mxu0 %v699
      %701 = vmatprep.subr.mxu0 0.0
      %v702 = vand.u32 %v192, 4294901760
      %v703 = vsub.f32 %v192, %v702
      %704 = vmatpush1.msra.mxu0 %v703
      %705 = vmatprep.subr.mxu0 0.0
      %v706 = vand.u32 %v193, 4294901760
      %v707 = vsub.f32 %v193, %v706
      %708 = vmatpush1.msra.mxu0 %v707
      %709 = vmatprep.subr.mxu0 0.0
      %v710 = vand.u32 %v194, 4294901760
      %v711 = vsub.f32 %v194, %v710
      %712 = vmatpush1.msra.mxu0 %v711
      %713 = vmatprep.subr.mxu0 0.0
      %v714 = vand.u32 %v195, 4294901760
      %v715 = vsub.f32 %v195, %v714
      %716 = vmatpush1.msra.mxu0 %v715
      %717 = vmatprep.subr.mxu0 0.0
      %v718 = vand.u32 %v196, 4294901760
      %v719 = vsub.f32 %v196, %v718
      %720 = vmatpush1.msra.mxu0 %v719
      %721 = vmatprep.subr.mxu0 0.0
      %v722 = vand.u32 %v197, 4294901760
      %v723 = vsub.f32 %v197, %v722
      %724 = vmatpush1.msra.mxu0 %v723
      %725 = vmatprep.subr.mxu0 0.0
      %v726 = vand.u32 %v198, 4294901760
      %v727 = vsub.f32 %v198, %v726
      %728 = vmatpush1.msra.mxu0 %v727
      %729 = vmatprep.subr.mxu0 0.0
      %v730 = vand.u32 %v199, 4294901760
      %v731 = vsub.f32 %v199, %v730
      %732 = vmatpush1.msra.mxu0 %v731
      %733 = vmatprep.subr.mxu0 0.0
      %v734 = vand.u32 %v200, 4294901760
      %v735 = vsub.f32 %v200, %v734
      %736 = vmatpush1.msra.mxu0 %v735
      %737 = vmatprep.subr.mxu0 0.0
      %v738 = vand.u32 %v201, 4294901760
      %v739 = vsub.f32 %v201, %v738
      %740 = vmatpush1.msra.mxu0 %v739
      %741 = vmatprep.subr.mxu0 0.0
      %v742 = vand.u32 %v202, 4294901760
      %v743 = vsub.f32 %v202, %v742
      %744 = vmatpush1.msra.mxu0 %v743
      %745 = vmatprep.subr.mxu0 0.0
      %v746 = vand.u32 %v203, 4294901760
      %v747 = vsub.f32 %v203, %v746
      %748 = vmatpush1.msra.mxu0 %v747
      %749 = vmatprep.subr.mxu0 0.0
      %v750 = vand.u32 %v204, 4294901760
      %v751 = vsub.f32 %v204, %v750
      %752 = vmatpush1.msra.mxu0 %v751
      %753 = vmatprep.subr.mxu0 0.0
      %v754 = vand.u32 %v205, 4294901760
      %v755 = vsub.f32 %v205, %v754
      %756 = vmatpush1.msra.mxu0 %v755
      %757 = vmatprep.subr.mxu0 0.0
      %758 = vmatpush1.msra.mxu0 0.0
      %759 = vmatprep.subr.mxu0 0.0
      %760 = vmatpush1.msra.mxu0 0.0
      %761 = vmatprep.subr.mxu0 0.0
      %762 = vmatpush1.msra.mxu0 0.0
      %763 = vmatprep.subr.mxu0 0.0
      %764 = vmatpush1.msra.mxu0 0.0
      %765 = vmatprep.subr.mxu0 0.0
      %766 = vmatpush1.msra.mxu0 0.0
      %767 = vmatprep.subr.mxu0 0.0
      %768 = vmatpush1.msra.mxu0 0.0
      %769 = vmatprep.subr.mxu0 0.0
      %770 = vmatpush1.msra.mxu0 0.0
      %771 = vmatprep.subr.mxu0 0.0
      %772 = vmatpush1.msra.mxu0 0.0
      %773 = vmatprep.subr.mxu0 0.0
      %774 = vmatpush1.msra.mxu0 0.0
      %775 = vmatprep.subr.mxu0 0.0
      %776 = vmatpush1.msra.mxu0 0.0
      %777 = vmatprep.subr.mxu0 0.0
      %778 = vmatpush1.msra.mxu0 0.0
      %779 = vmatprep.subr.mxu0 0.0
      %780 = vmatpush1.msra.mxu0 0.0
      %781 = vmatprep.subr.mxu0 0.0
      %782 = vmatpush1.msra.mxu0 0.0
      %783 = vmatprep.subr.mxu0 0.0
      %784 = vmatpush1.msra.mxu0 0.0
      %785 = vmatprep.subr.mxu0 0.0
      %786 = vmatpush1.msra.mxu0 0.0
      %787 = vmatprep.subr.mxu0 0.0
      %788 = vmatpush1.msra.mxu0 0.0
      %789 = vmatprep.mubr.f32.mxu0 0.0
      %v790 = vand.u32 %v174, 4294901760
      %v791 = vsub.f32 %v174, %v790
      %792 = vmatmul.mubr.f32.gmra.mrb[0].mxu0 %v791
      %v793 = vpop.f32.mrb[0].mxu0
      %v794 = vadd.f32 %v600, %v793
      %v795 = vpop.f32.mrb[0].mxu0
      %796 = vmatprep.mubr.f32.mxu0 0.0
      %v797 = vand.u32 %v175, 4294901760
      %v798 = vsub.f32 %v175, %v797
      %799 = vmatmul.mubr.f32.gmra.mrb[0].mxu0 %v798
      %v800 = vpop.f32.mrb[0].mxu0
      %v801 = vadd.f32 %v606, %v800
      %v802 = vpop.f32.mrb[0].mxu0
      %803 = vmatprep.mubr.f32.mxu0 0.0
      %v804 = vand.u32 %v176, 4294901760
      %v805 = vsub.f32 %v176, %v804
      %806 = vmatmul.mubr.f32.gmra.mrb[0].mxu0 %v805
      %v807 = vpop.f32.mrb[0].mxu0
      %v808 = vadd.f32 %v612, %v807
      %v809 = vpop.f32.mrb[0].mxu0
      %810 = vmatprep.mubr.f32.mxu0 0.0
      %v811 = vand.u32 %v177, 4294901760
      %v812 = vsub.f32 %v177, %v811
      %813 = vmatmul.mubr.f32.gmra.mrb[0].mxu0 %v812
      %v814 = vpop.f32.mrb[0].mxu0
      %v815 = vadd.f32 %v618, %v814
      %v816 = vpop.f32.mrb[0].mxu0
      %817 = vmatprep.mubr.f32.mxu0 0.0
      %v818 = vand.u32 %v178, 4294901760
      %v819 = vsub.f32 %v178, %v818
      %820 = vmatmul.mubr.f32.gmra.mrb[0].mxu0 %v819
      %v821 = vpop.f32.mrb[0].mxu0
      %v822 = vadd.f32 %v624, %v821
      %v823 = vpop.f32.mrb[0].mxu0
      %824 = vmatprep.mubr.f32.mxu0 0.0
      %v825 = vand.u32 %v179, 4294901760
      %v826 = vsub.f32 %v179, %v825
      %827 = vmatmul.mubr.f32.gmra.mrb[0].mxu0 %v826
      %v828 = vpop.f32.mrb[0].mxu0
      %v829 = vadd.f32 %v630, %v828
      %v830 = vpop.f32.mrb[0].mxu0
      %831 = vmatprep.mubr.f32.mxu0 0.0
      %v832 = vand.u32 %v180, 4294901760
      %v833 = vsub.f32 %v180, %v832
      %834 = vmatmul.mubr.f32.gmra.mrb[0].mxu0 %v833
      %v835 = vpop.f32.mrb[0].mxu0
      %v836 = vadd.f32 %v636, %v835
      %v837 = vpop.f32.mrb[0].mxu0
      %838 = vmatprep.mubr.f32.mxu0 0.0
      %v839 = vand.u32 %v181, 4294901760
      %v840 = vsub.f32 %v181, %v839
      %841 = vmatmul.mubr.f32.gmra.mrb[0].mxu0 %v840
      %v842 = vpop.f32.mrb[0].mxu0
      %v843 = vadd.f32 %v642, %v842
      %v844 = vpop.f32.mrb[0].mxu0
      %845 = vmatprep.mubr.f32.mxu0 0.0
      %v846 = vand.u32 %v182, 4294901760
      %v847 = vsub.f32 %v182, %v846
      %848 = vmatmul.mubr.f32.gmra.mrb[0].mxu0 %v847
      %v849 = vpop.f32.mrb[0].mxu0
      %v850 = vadd.f32 %v648, %v849
      %v851 = vpop.f32.mrb[0].mxu0
      %852 = vmatprep.mubr.f32.mxu0 0.0
      %v853 = vand.u32 %v183, 4294901760
      %v854 = vsub.f32 %v183, %v853
      %855 = vmatmul.mubr.f32.gmra.mrb[0].mxu0 %v854
      %v856 = vpop.f32.mrb[0].mxu0
      %v857 = vadd.f32 %v654, %v856
      %v858 = vpop.f32.mrb[0].mxu0
      %859 = vmatprep.mubr.f32.mxu0 0.0
      %v860 = vand.u32 %v184, 4294901760
      %v861 = vsub.f32 %v184, %v860
      %862 = vmatmul.mubr.f32.gmra.mrb[0].mxu0 %v861
      %v863 = vpop.f32.mrb[0].mxu0
      %v864 = vadd.f32 %v660, %v863
      %v865 = vpop.f32.mrb[0].mxu0
      %866 = vmatprep.mubr.f32.mxu0 0.0
      %v867 = vand.u32 %v185, 4294901760
      %v868 = vsub.f32 %v185, %v867
      %869 = vmatmul.mubr.f32.gmra.mrb[0].mxu0 %v868
      %v870 = vpop.f32.mrb[0].mxu0
      %v871 = vadd.f32 %v666, %v870
      %v872 = vpop.f32.mrb[0].mxu0
      %873 = vmatprep.mubr.f32.mxu0 0.0
      %v874 = vand.u32 %v186, 4294901760
      %v875 = vsub.f32 %v186, %v874
      %876 = vmatmul.mubr.f32.gmra.mrb[0].mxu0 %v875
      %v877 = vpop.f32.mrb[0].mxu0
      %v878 = vadd.f32 %v672, %v877
      %v879 = vpop.f32.mrb[0].mxu0
      %880 = vmatprep.mubr.f32.mxu0 0.0
      %v881 = vand.u32 %v187, 4294901760
      %v882 = vsub.f32 %v187, %v881
      %883 = vmatmul.mubr.f32.gmra.mrb[0].mxu0 %v882
      %v884 = vpop.f32.mrb[0].mxu0
      %v885 = vadd.f32 %v678, %v884
      %v886 = vpop.f32.mrb[0].mxu0
      %887 = vmatprep.mubr.f32.mxu0 0.0
      %v888 = vand.u32 %v188, 4294901760
      %v889 = vsub.f32 %v188, %v888
      %890 = vmatmul.mubr.f32.gmra.mrb[0].mxu0 %v889
      %v891 = vpop.f32.mrb[0].mxu0
      %v892 = vadd.f32 %v684, %v891
      %v893 = vpop.f32.mrb[0].mxu0
      %894 = vmatprep.mubr.f32.mxu0 0.0
      %v895 = vand.u32 %v189, 4294901760
      %v896 = vsub.f32 %v189, %v895
      %897 = vmatmul.mubr.f32.gmra.mrb[0].mxu0 %v896
      %v898 = vpop.f32.mrb[0].mxu0
      %v899 = vadd.f32 %v690, %v898
      %v900 = vpop.f32.mrb[0].mxu0
      %901 = vdwg.mxu0
      %902 = vmatprep.subr.mxu0 0.0
      %v903 = vand.u32 %v190, 4294901760
      %904 = vmatpush1.msra.mxu0 %v903
      %905 = vmatprep.subr.mxu0 0.0
      %v906 = vand.u32 %v191, 4294901760
      %907 = vmatpush1.msra.mxu0 %v906
      %908 = vmatprep.subr.mxu0 0.0
      %v909 = vand.u32 %v192, 4294901760
      %910 = vmatpush1.msra.mxu0 %v909
      %911 = vmatprep.subr.mxu0 0.0
      %v912 = vand.u32 %v193, 4294901760
      %913 = vmatpush1.msra.mxu0 %v912
      %914 = vmatprep.subr.mxu0 0.0
      %v915 = vand.u32 %v194, 4294901760
      %916 = vmatpush1.msra.mxu0 %v915
      %917 = vmatprep.subr.mxu0 0.0
      %v918 = vand.u32 %v195, 4294901760
      %919 = vmatpush1.msra.mxu0 %v918
      %920 = vmatprep.subr.mxu0 0.0
      %v921 = vand.u32 %v196, 4294901760
      %922 = vmatpush1.msra.mxu0 %v921
      %923 = vmatprep.subr.mxu0 0.0
      %v924 = vand.u32 %v197, 4294901760
      %925 = vmatpush1.msra.mxu0 %v924
      %926 = vmatprep.subr.mxu0 0.0
      %v927 = vand.u32 %v198, 4294901760
      %928 = vmatpush1.msra.mxu0 %v927
      %929 = vmatprep.subr.mxu0 0.0
      %v930 = vand.u32 %v199, 4294901760
      %931 = vmatpush1.msra.mxu0 %v930
      %932 = vmatprep.subr.mxu0 0.0
      %v933 = vand.u32 %v200, 4294901760
      %934 = vmatpush1.msra.mxu0 %v933
      %935 = vmatprep.subr.mxu0 0.0
      %v936 = vand.u32 %v201, 4294901760
      %937 = vmatpush1.msra.mxu0 %v936
      %938 = vmatprep.subr.mxu0 0.0
      %v939 = vand.u32 %v202, 4294901760
      %940 = vmatpush1.msra.mxu0 %v939
      %941 = vmatprep.subr.mxu0 0.0
      %v942 = vand.u32 %v203, 4294901760
      %943 = vmatpush1.msra.mxu0 %v942
      %944 = vmatprep.subr.mxu0 0.0
      %v945 = vand.u32 %v204, 4294901760
      %946 = vmatpush1.msra.mxu0 %v945
      %947 = vmatprep.subr.mxu0 0.0
      %v948 = vand.u32 %v205, 4294901760
      %949 = vmatpush1.msra.mxu0 %v948
      %950 = vmatprep.subr.mxu0 0.0
      %951 = vmatpush1.msra.mxu0 0.0
      %952 = vmatprep.subr.mxu0 0.0
      %953 = vmatpush1.msra.mxu0 0.0
      %954 = vmatprep.subr.mxu0 0.0
      %955 = vmatpush1.msra.mxu0 0.0
      %956 = vmatprep.subr.mxu0 0.0
      %957 = vmatpush1.msra.mxu0 0.0
      %958 = vmatprep.subr.mxu0 0.0
      %959 = vmatpush1.msra.mxu0 0.0
      %960 = vmatprep.subr.mxu0 0.0
      %961 = vmatpush1.msra.mxu0 0.0
      %962 = vmatprep.subr.mxu0 0.0
      %963 = vmatpush1.msra.mxu0 0.0
      %964 = vmatprep.subr.mxu0 0.0
      %965 = vmatpush1.msra.mxu0 0.0
      %966 = vmatprep.subr.mxu0 0.0
      %967 = vmatpush1.msra.mxu0 0.0
      %968 = vmatprep.subr.mxu0 0.0
      %969 = vmatpush1.msra.mxu0 0.0
      %970 = vmatprep.subr.mxu0 0.0
      %971 = vmatpush1.msra.mxu0 0.0
      %972 = vmatprep.subr.mxu0 0.0
      %973 = vmatpush1.msra.mxu0 0.0
      %974 = vmatprep.subr.mxu0 0.0
      %975 = vmatpush1.msra.mxu0 0.0
      %976 = vmatprep.subr.mxu0 0.0
      %977 = vmatpush1.msra.mxu0 0.0
      %978 = vmatprep.subr.mxu0 0.0
      %979 = vmatpush1.msra.mxu0 0.0
      %980 = vmatprep.subr.mxu0 0.0
      %981 = vmatpush1.msra.mxu0 0.0
      %982 = vmatprep.mubr.f32.mxu0 0.0
      %v983 = vand.u32 %v174, 4294901760
      %v984 = vsub.f32 %v174, %v983
      %v985 = vand.u32 %v984, 4294901760
      %986 = vmatmul.mubr.f32.gmra.mrb[0].mxu0 %v985
      %v987 = vpop.f32.mrb[0].mxu0
      %v988 = vadd.f32 %v794, %v987
      %v989 = vpop.f32.mrb[0].mxu0
      %990 = vmatprep.mubr.f32.mxu0 0.0
      %v991 = vand.u32 %v175, 4294901760
      %v992 = vsub.f32 %v175, %v991
      %v993 = vand.u32 %v992, 4294901760
      %994 = vmatmul.mubr.f32.gmra.mrb[0].mxu0 %v993
      %v995 = vpop.f32.mrb[0].mxu0
      %v996 = vadd.f32 %v801, %v995
      %v997 = vpop.f32.mrb[0].mxu0
      %998 = vmatprep.mubr.f32.mxu0 0.0
      %v999 = vand.u32 %v176, 4294901760
      %v1000 = vsub.f32 %v176, %v999
      %v1001 = vand.u32 %v1000, 4294901760
      %1002 = vmatmul.mubr.f32.gmra.mrb[0].mxu0 %v1001
      %v1003 = vpop.f32.mrb[0].mxu0
      %v1004 = vadd.f32 %v808, %v1003
      %v1005 = vpop.f32.mrb[0].mxu0
      %1006 = vmatprep.mubr.f32.mxu0 0.0
      %v1007 = vand.u32 %v177, 4294901760
      %v1008 = vsub.f32 %v177, %v1007
      %v1009 = vand.u32 %v1008, 4294901760
      %1010 = vmatmul.mubr.f32.gmra.mrb[0].mxu0 %v1009
      %v1011 = vpop.f32.mrb[0].mxu0
      %v1012 = vadd.f32 %v815, %v1011
      %v1013 = vpop.f32.mrb[0].mxu0
      %1014 = vmatprep.mubr.f32.mxu0 0.0
      %v1015 = vand.u32 %v178, 4294901760
      %v1016 = vsub.f32 %v178, %v1015
      %v1017 = vand.u32 %v1016, 4294901760
      %1018 = vmatmul.mubr.f32.gmra.mrb[0].mxu0 %v1017
      %v1019 = vpop.f32.mrb[0].mxu0
      %v1020 = vadd.f32 %v822, %v1019
      %v1021 = vpop.f32.mrb[0].mxu0
      %1022 = vmatprep.mubr.f32.mxu0 0.0
      %v1023 = vand.u32 %v179, 4294901760
      %v1024 = vsub.f32 %v179, %v1023
      %v1025 = vand.u32 %v1024, 4294901760
      %1026 = vmatmul.mubr.f32.gmra.mrb[0].mxu0 %v1025
      %v1027 = vpop.f32.mrb[0].mxu0
      %v1028 = vadd.f32 %v829, %v1027
      %v1029 = vpop.f32.mrb[0].mxu0
      %1030 = vmatprep.mubr.f32.mxu0 0.0
      %v1031 = vand.u32 %v180, 4294901760
      %v1032 = vsub.f32 %v180, %v1031
      %v1033 = vand.u32 %v1032, 4294901760
      %1034 = vmatmul.mubr.f32.gmra.mrb[0].mxu0 %v1033
      %v1035 = vpop.f32.mrb[0].mxu0
      %v1036 = vadd.f32 %v836, %v1035
      %v1037 = vpop.f32.mrb[0].mxu0
      %1038 = vmatprep.mubr.f32.mxu0 0.0
      %v1039 = vand.u32 %v181, 4294901760
      %v1040 = vsub.f32 %v181, %v1039
      %v1041 = vand.u32 %v1040, 4294901760
      %1042 = vmatmul.mubr.f32.gmra.mrb[0].mxu0 %v1041
      %v1043 = vpop.f32.mrb[0].mxu0
      %v1044 = vadd.f32 %v843, %v1043
      %v1045 = vpop.f32.mrb[0].mxu0
      %1046 = vmatprep.mubr.f32.mxu0 0.0
      %v1047 = vand.u32 %v182, 4294901760
      %v1048 = vsub.f32 %v182, %v1047
      %v1049 = vand.u32 %v1048, 4294901760
      %1050 = vmatmul.mubr.f32.gmra.mrb[0].mxu0 %v1049
      %v1051 = vpop.f32.mrb[0].mxu0
      %v1052 = vadd.f32 %v850, %v1051
      %v1053 = vpop.f32.mrb[0].mxu0
      %1054 = vmatprep.mubr.f32.mxu0 0.0
      %v1055 = vand.u32 %v183, 4294901760
      %v1056 = vsub.f32 %v183, %v1055
      %v1057 = vand.u32 %v1056, 4294901760
      %1058 = vmatmul.mubr.f32.gmra.mrb[0].mxu0 %v1057
      %v1059 = vpop.f32.mrb[0].mxu0
      %v1060 = vadd.f32 %v857, %v1059
      %v1061 = vpop.f32.mrb[0].mxu0
      %1062 = vmatprep.mubr.f32.mxu0 0.0
      %v1063 = vand.u32 %v184, 4294901760
      %v1064 = vsub.f32 %v184, %v1063
      %v1065 = vand.u32 %v1064, 4294901760
      %1066 = vmatmul.mubr.f32.gmra.mrb[0].mxu0 %v1065
      %v1067 = vpop.f32.mrb[0].mxu0
      %v1068 = vadd.f32 %v864, %v1067
      %v1069 = vpop.f32.mrb[0].mxu0
      %1070 = vmatprep.mubr.f32.mxu0 0.0
      %v1071 = vand.u32 %v185, 4294901760
      %v1072 = vsub.f32 %v185, %v1071
      %v1073 = vand.u32 %v1072, 4294901760
      %1074 = vmatmul.mubr.f32.gmra.mrb[0].mxu0 %v1073
      %v1075 = vpop.f32.mrb[0].mxu0
      %v1076 = vadd.f32 %v871, %v1075
      %v1077 = vpop.f32.mrb[0].mxu0
      %1078 = vmatprep.mubr.f32.mxu0 0.0
      %v1079 = vand.u32 %v186, 4294901760
      %v1080 = vsub.f32 %v186, %v1079
      %v1081 = vand.u32 %v1080, 4294901760
      %1082 = vmatmul.mubr.f32.gmra.mrb[0].mxu0 %v1081
      %v1083 = vpop.f32.mrb[0].mxu0
      %v1084 = vadd.f32 %v878, %v1083
      %v1085 = vpop.f32.mrb[0].mxu0
      %1086 = vmatprep.mubr.f32.mxu0 0.0
      %v1087 = vand.u32 %v187, 4294901760
      %v1088 = vsub.f32 %v187, %v1087
      %v1089 = vand.u32 %v1088, 4294901760
      %1090 = vmatmul.mubr.f32.gmra.mrb[0].mxu0 %v1089
      %v1091 = vpop.f32.mrb[0].mxu0
      %v1092 = vadd.f32 %v885, %v1091
      %v1093 = vpop.f32.mrb[0].mxu0
      %1094 = vmatprep.mubr.f32.mxu0 0.0
      %v1095 = vand.u32 %v188, 4294901760
      %v1096 = vsub.f32 %v188, %v1095
      %v1097 = vand.u32 %v1096, 4294901760
      %1098 = vmatmul.mubr.f32.gmra.mrb[0].mxu0 %v1097
      %v1099 = vpop.f32.mrb[0].mxu0
      %v1100 = vadd.f32 %v892, %v1099
      %v1101 = vpop.f32.mrb[0].mxu0
      %1102 = vmatprep.mubr.f32.mxu0 0.0
      %v1103 = vand.u32 %v189, 4294901760
      %v1104 = vsub.f32 %v189, %v1103
      %v1105 = vand.u32 %v1104, 4294901760
      %1106 = vmatmul.mubr.f32.gmra.mrb[0].mxu0 %v1105
      %v1107 = vpop.f32.mrb[0].mxu0
      %v1108 = vadd.f32 %v899, %v1107
      %v1109 = vpop.f32.mrb[0].mxu0
      %1110 = vdwg.mxu0
      %1111 = vmatprep.subr.mxu0 0.0
      %v1112 = vand.u32 %v190, 4294901760
      %v1113 = vsub.f32 %v190, %v1112
      %v1114 = vand.u32 %v1113, 4294901760
      %1115 = vmatpush1.msra.mxu0 %v1114
      %1116 = vmatprep.subr.mxu0 0.0
      %v1117 = vand.u32 %v191, 4294901760
      %v1118 = vsub.f32 %v191, %v1117
      %v1119 = vand.u32 %v1118, 4294901760
      %1120 = vmatpush1.msra.mxu0 %v1119
      %1121 = vmatprep.subr.mxu0 0.0
      %v1122 = vand.u32 %v192, 4294901760
      %v1123 = vsub.f32 %v192, %v1122
      %v1124 = vand.u32 %v1123, 4294901760
      %1125 = vmatpush1.msra.mxu0 %v1124
      %1126 = vmatprep.subr.mxu0 0.0
      %v1127 = vand.u32 %v193, 4294901760
      %v1128 = vsub.f32 %v193, %v1127
      %v1129 = vand.u32 %v1128, 4294901760
      %1130 = vmatpush1.msra.mxu0 %v1129
      %1131 = vmatprep.subr.mxu0 0.0
      %v1132 = vand.u32 %v194, 4294901760
      %v1133 = vsub.f32 %v194, %v1132
      %v1134 = vand.u32 %v1133, 4294901760
      %1135 = vmatpush1.msra.mxu0 %v1134
      %1136 = vmatprep.subr.mxu0 0.0
      %v1137 = vand.u32 %v195, 4294901760
      %v1138 = vsub.f32 %v195, %v1137
      %v1139 = vand.u32 %v1138, 4294901760
      %1140 = vmatpush1.msra.mxu0 %v1139
      %1141 = vmatprep.subr.mxu0 0.0
      %v1142 = vand.u32 %v196, 4294901760
      %v1143 = vsub.f32 %v196, %v1142
      %v1144 = vand.u32 %v1143, 4294901760
      %1145 = vmatpush1.msra.mxu0 %v1144
      %1146 = vmatprep.subr.mxu0 0.0
      %v1147 = vand.u32 %v197, 4294901760
      %v1148 = vsub.f32 %v197, %v1147
      %v1149 = vand.u32 %v1148, 4294901760
      %1150 = vmatpush1.msra.mxu0 %v1149
      %1151 = vmatprep.subr.mxu0 0.0
      %v1152 = vand.u32 %v198, 4294901760
      %v1153 = vsub.f32 %v198, %v1152
      %v1154 = vand.u32 %v1153, 4294901760
      %1155 = vmatpush1.msra.mxu0 %v1154
      %1156 = vmatprep.subr.mxu0 0.0
      %v1157 = vand.u32 %v199, 4294901760
      %v1158 = vsub.f32 %v199, %v1157
      %v1159 = vand.u32 %v1158, 4294901760
      %1160 = vmatpush1.msra.mxu0 %v1159
      %1161 = vmatprep.subr.mxu0 0.0
      %v1162 = vand.u32 %v200, 4294901760
      %v1163 = vsub.f32 %v200, %v1162
      %v1164 = vand.u32 %v1163, 4294901760
      %1165 = vmatpush1.msra.mxu0 %v1164
      %1166 = vmatprep.subr.mxu0 0.0
      %v1167 = vand.u32 %v201, 4294901760
      %v1168 = vsub.f32 %v201, %v1167
      %v1169 = vand.u32 %v1168, 4294901760
      %1170 = vmatpush1.msra.mxu0 %v1169
      %1171 = vmatprep.subr.mxu0 0.0
      %v1172 = vand.u32 %v202, 4294901760
      %v1173 = vsub.f32 %v202, %v1172
      %v1174 = vand.u32 %v1173, 4294901760
      %1175 = vmatpush1.msra.mxu0 %v1174
      %1176 = vmatprep.subr.mxu0 0.0
      %v1177 = vand.u32 %v203, 4294901760
      %v1178 = vsub.f32 %v203, %v1177
      %v1179 = vand.u32 %v1178, 4294901760
      %1180 = vmatpush1.msra.mxu0 %v1179
      %1181 = vmatprep.subr.mxu0 0.0
      %v1182 = vand.u32 %v204, 4294901760
      %v1183 = vsub.f32 %v204, %v1182
      %v1184 = vand.u32 %v1183, 4294901760
      %1185 = vmatpush1.msra.mxu0 %v1184
      %1186 = vmatprep.subr.mxu0 0.0
      %v1187 = vand.u32 %v205, 4294901760
      %v1188 = vsub.f32 %v205, %v1187
      %v1189 = vand.u32 %v1188, 4294901760
      %1190 = vmatpush1.msra.mxu0 %v1189
      %1191 = vmatprep.subr.mxu0 0.0
      %1192 = vmatpush1.msra.mxu0 0.0
      %1193 = vmatprep.subr.mxu0 0.0
      %1194 = vmatpush1.msra.mxu0 0.0
      %1195 = vmatprep.subr.mxu0 0.0
      %1196 = vmatpush1.msra.mxu0 0.0
      %1197 = vmatprep.subr.mxu0 0.0
      %1198 = vmatpush1.msra.mxu0 0.0
      %1199 = vmatprep.subr.mxu0 0.0
      %1200 = vmatpush1.msra.mxu0 0.0
      %1201 = vmatprep.subr.mxu0 0.0
      %1202 = vmatpush1.msra.mxu0 0.0
      %1203 = vmatprep.subr.mxu0 0.0
      %1204 = vmatpush1.msra.mxu0 0.0
      %1205 = vmatprep.subr.mxu0 0.0
      %1206 = vmatpush1.msra.mxu0 0.0
      %1207 = vmatprep.subr.mxu0 0.0
      %1208 = vmatpush1.msra.mxu0 0.0
      %1209 = vmatprep.subr.mxu0 0.0
      %1210 = vmatpush1.msra.mxu0 0.0
      %1211 = vmatprep.subr.mxu0 0.0
      %1212 = vmatpush1.msra.mxu0 0.0
      %1213 = vmatprep.subr.mxu0 0.0
      %1214 = vmatpush1.msra.mxu0 0.0
      %1215 = vmatprep.subr.mxu0 0.0
      %1216 = vmatpush1.msra.mxu0 0.0
      %1217 = vmatprep.subr.mxu0 0.0
      %1218 = vmatpush1.msra.mxu0 0.0
      %1219 = vmatprep.subr.mxu0 0.0
      %1220 = vmatpush1.msra.mxu0 0.0
      %1221 = vmatprep.subr.mxu0 0.0
      %1222 = vmatpush1.msra.mxu0 0.0
      %1223 = vmatprep.mubr.f32.mxu0 0.0
      %v1224 = vand.u32 %v174, 4294901760
      %1225 = vmatmul.mubr.f32.gmra.mrb[0].mxu0 %v1224
      %v1226 = vpop.f32.mrb[0].mxu0
      %v1227 = vadd.f32 %v988, %v1226
      %v1228 = vpop.f32.mrb[0].mxu0
      %1229 = vmatprep.mubr.f32.mxu0 0.0
      %v1230 = vand.u32 %v175, 4294901760
      %1231 = vmatmul.mubr.f32.gmra.mrb[0].mxu0 %v1230
      %v1232 = vpop.f32.mrb[0].mxu0
      %v1233 = vadd.f32 %v996, %v1232
      %v1234 = vpop.f32.mrb[0].mxu0
      %1235 = vmatprep.mubr.f32.mxu0 0.0
      %v1236 = vand.u32 %v176, 4294901760
      %1237 = vmatmul.mubr.f32.gmra.mrb[0].mxu0 %v1236
      %v1238 = vpop.f32.mrb[0].mxu0
      %v1239 = vadd.f32 %v1004, %v1238
      %v1240 = vpop.f32.mrb[0].mxu0
      %1241 = vmatprep.mubr.f32.mxu0 0.0
      %v1242 = vand.u32 %v177, 4294901760
      %1243 = vmatmul.mubr.f32.gmra.mrb[0].mxu0 %v1242
      %v1244 = vpop.f32.mrb[0].mxu0
      %v1245 = vadd.f32 %v1012, %v1244
      %v1246 = vpop.f32.mrb[0].mxu0
      %1247 = vmatprep.mubr.f32.mxu0 0.0
      %v1248 = vand.u32 %v178, 4294901760
      %1249 = vmatmul.mubr.f32.gmra.mrb[0].mxu0 %v1248
      %v1250 = vpop.f32.mrb[0].mxu0
      %v1251 = vadd.f32 %v1020, %v1250
      %v1252 = vpop.f32.mrb[0].mxu0
      %1253 = vmatprep.mubr.f32.mxu0 0.0
      %v1254 = vand.u32 %v179, 4294901760
      %1255 = vmatmul.mubr.f32.gmra.mrb[0].mxu0 %v1254
      %v1256 = vpop.f32.mrb[0].mxu0
      %v1257 = vadd.f32 %v1028, %v1256
      %v1258 = vpop.f32.mrb[0].mxu0
      %1259 = vmatprep.mubr.f32.mxu0 0.0
      %v1260 = vand.u32 %v180, 4294901760
      %1261 = vmatmul.mubr.f32.gmra.mrb[0].mxu0 %v1260
      %v1262 = vpop.f32.mrb[0].mxu0
      %v1263 = vadd.f32 %v1036, %v1262
      %v1264 = vpop.f32.mrb[0].mxu0
      %1265 = vmatprep.mubr.f32.mxu0 0.0
      %v1266 = vand.u32 %v181, 4294901760
      %1267 = vmatmul.mubr.f32.gmra.mrb[0].mxu0 %v1266
      %v1268 = vpop.f32.mrb[0].mxu0
      %v1269 = vadd.f32 %v1044, %v1268
      %v1270 = vpop.f32.mrb[0].mxu0
      %1271 = vmatprep.mubr.f32.mxu0 0.0
      %v1272 = vand.u32 %v182, 4294901760
      %1273 = vmatmul.mubr.f32.gmra.mrb[0].mxu0 %v1272
      %v1274 = vpop.f32.mrb[0].mxu0
      %v1275 = vadd.f32 %v1052, %v1274
      %v1276 = vpop.f32.mrb[0].mxu0
      %1277 = vmatprep.mubr.f32.mxu0 0.0
      %v1278 = vand.u32 %v183, 4294901760
      %1279 = vmatmul.mubr.f32.gmra.mrb[0].mxu0 %v1278
      %v1280 = vpop.f32.mrb[0].mxu0
      %v1281 = vadd.f32 %v1060, %v1280
      %v1282 = vpop.f32.mrb[0].mxu0
      %1283 = vmatprep.mubr.f32.mxu0 0.0
      %v1284 = vand.u32 %v184, 4294901760
      %1285 = vmatmul.mubr.f32.gmra.mrb[0].mxu0 %v1284
      %v1286 = vpop.f32.mrb[0].mxu0
      %v1287 = vadd.f32 %v1068, %v1286
      %v1288 = vpop.f32.mrb[0].mxu0
      %1289 = vmatprep.mubr.f32.mxu0 0.0
      %v1290 = vand.u32 %v185, 4294901760
      %1291 = vmatmul.mubr.f32.gmra.mrb[0].mxu0 %v1290
      %v1292 = vpop.f32.mrb[0].mxu0
      %v1293 = vadd.f32 %v1076, %v1292
      %v1294 = vpop.f32.mrb[0].mxu0
      %1295 = vmatprep.mubr.f32.mxu0 0.0
      %v1296 = vand.u32 %v186, 4294901760
      %1297 = vmatmul.mubr.f32.gmra.mrb[0].mxu0 %v1296
      %v1298 = vpop.f32.mrb[0].mxu0
      %v1299 = vadd.f32 %v1084, %v1298
      %v1300 = vpop.f32.mrb[0].mxu0
      %1301 = vmatprep.mubr.f32.mxu0 0.0
      %v1302 = vand.u32 %v187, 4294901760
      %1303 = vmatmul.mubr.f32.gmra.mrb[0].mxu0 %v1302
      %v1304 = vpop.f32.mrb[0].mxu0
      %v1305 = vadd.f32 %v1092, %v1304
      %v1306 = vpop.f32.mrb[0].mxu0
      %1307 = vmatprep.mubr.f32.mxu0 0.0
      %v1308 = vand.u32 %v188, 4294901760
      %1309 = vmatmul.mubr.f32.gmra.mrb[0].mxu0 %v1308
      %v1310 = vpop.f32.mrb[0].mxu0
      %v1311 = vadd.f32 %v1100, %v1310
      %v1312 = vpop.f32.mrb[0].mxu0
      %1313 = vmatprep.mubr.f32.mxu0 0.0
      %v1314 = vand.u32 %v189, 4294901760
      %1315 = vmatmul.mubr.f32.gmra.mrb[0].mxu0 %v1314
      %v1316 = vpop.f32.mrb[0].mxu0
      %v1317 = vadd.f32 %v1108, %v1316
      %v1318 = vpop.f32.mrb[0].mxu0
      %1319 = vdwg.mxu0
      %1320 = vmatprep.subr.mxu0 0.0
      %v1321 = vand.u32 %v190, 4294901760
      %1322 = vmatpush1.msra.mxu0 %v1321
      %1323 = vmatprep.subr.mxu0 0.0
      %v1324 = vand.u32 %v191, 4294901760
      %1325 = vmatpush1.msra.mxu0 %v1324
      %1326 = vmatprep.subr.mxu0 0.0
      %v1327 = vand.u32 %v192, 4294901760
      %1328 = vmatpush1.msra.mxu0 %v1327
      %1329 = vmatprep.subr.mxu0 0.0
      %v1330 = vand.u32 %v193, 4294901760
      %1331 = vmatpush1.msra.mxu0 %v1330
      %1332 = vmatprep.subr.mxu0 0.0
      %v1333 = vand.u32 %v194, 4294901760
      %1334 = vmatpush1.msra.mxu0 %v1333
      %1335 = vmatprep.subr.mxu0 0.0
      %v1336 = vand.u32 %v195, 4294901760
      %1337 = vmatpush1.msra.mxu0 %v1336
      %1338 = vmatprep.subr.mxu0 0.0
      %v1339 = vand.u32 %v196, 4294901760
      %1340 = vmatpush1.msra.mxu0 %v1339
      %1341 = vmatprep.subr.mxu0 0.0
      %v1342 = vand.u32 %v197, 4294901760
      %1343 = vmatpush1.msra.mxu0 %v1342
      %1344 = vmatprep.subr.mxu0 0.0
      %v1345 = vand.u32 %v198, 4294901760
      %1346 = vmatpush1.msra.mxu0 %v1345
      %1347 = vmatprep.subr.mxu0 0.0
      %v1348 = vand.u32 %v199, 4294901760
      %1349 = vmatpush1.msra.mxu0 %v1348
      %1350 = vmatprep.subr.mxu0 0.0
      %v1351 = vand.u32 %v200, 4294901760
      %1352 = vmatpush1.msra.mxu0 %v1351
      %1353 = vmatprep.subr.mxu0 0.0
      %v1354 = vand.u32 %v201, 4294901760
      %1355 = vmatpush1.msra.mxu0 %v1354
      %1356 = vmatprep.subr.mxu0 0.0
      %v1357 = vand.u32 %v202, 4294901760
      %1358 = vmatpush1.msra.mxu0 %v1357
      %1359 = vmatprep.subr.mxu0 0.0
      %v1360 = vand.u32 %v203, 4294901760
      %1361 = vmatpush1.msra.mxu0 %v1360
      %1362 = vmatprep.subr.mxu0 0.0
      %v1363 = vand.u32 %v204, 4294901760
      %1364 = vmatpush1.msra.mxu0 %v1363
      %1365 = vmatprep.subr.mxu0 0.0
      %v1366 = vand.u32 %v205, 4294901760
      %1367 = vmatpush1.msra.mxu0 %v1366
      %1368 = vmatprep.subr.mxu0 0.0
      %1369 = vmatpush1.msra.mxu0 0.0
      %1370 = vmatprep.subr.mxu0 0.0
      %1371 = vmatpush1.msra.mxu0 0.0
      %1372 = vmatprep.subr.mxu0 0.0
      %1373 = vmatpush1.msra.mxu0 0.0
      %1374 = vmatprep.subr.mxu0 0.0
      %1375 = vmatpush1.msra.mxu0 0.0
      %1376 = vmatprep.subr.mxu0 0.0
      %1377 = vmatpush1.msra.mxu0 0.0
      %1378 = vmatprep.subr.mxu0 0.0
      %1379 = vmatpush1.msra.mxu0 0.0
      %1380 = vmatprep.subr.mxu0 0.0
      %1381 = vmatpush1.msra.mxu0 0.0
      %1382 = vmatprep.subr.mxu0 0.0
      %1383 = vmatpush1.msra.mxu0 0.0
      %1384 = vmatprep.subr.mxu0 0.0
      %1385 = vmatpush1.msra.mxu0 0.0
      %1386 = vmatprep.subr.mxu0 0.0
      %1387 = vmatpush1.msra.mxu0 0.0
      %1388 = vmatprep.subr.mxu0 0.0
      %1389 = vmatpush1.msra.mxu0 0.0
      %1390 = vmatprep.subr.mxu0 0.0
      %1391 = vmatpush1.msra.mxu0 0.0
      %1392 = vmatprep.subr.mxu0 0.0
      %1393 = vmatpush1.msra.mxu0 0.0
      %1394 = vmatprep.subr.mxu0 0.0
      %1395 = vmatpush1.msra.mxu0 0.0
      %1396 = vmatprep.subr.mxu0 0.0
      %1397 = vmatpush1.msra.mxu0 0.0
      %1398 = vmatprep.subr.mxu0 0.0
      %1399 = vmatpush1.msra.mxu0 0.0
      %1400 = vmatprep.mubr.f32.mxu0 0.0
      %v1401 = vand.u32 %v174, 4294901760
      %1402 = vmatmul.mubr.f32.gmra.mrb[0].mxu0 %v1401
      %v1403 = vpop.f32.mrb[0].mxu0
      %v1404 = vadd.f32 %v1227, %v1403
      %v1405 = vpop.f32.mrb[0].mxu0
      %1406 = vmatprep.mubr.f32.mxu0 0.0
      %v1407 = vand.u32 %v175, 4294901760
      %1408 = vmatmul.mubr.f32.gmra.mrb[0].mxu0 %v1407
      %v1409 = vpop.f32.mrb[0].mxu0
      %v1410 = vadd.f32 %v1233, %v1409
      %v1411 = vpop.f32.mrb[0].mxu0
      %1412 = vmatprep.mubr.f32.mxu0 0.0
      %v1413 = vand.u32 %v176, 4294901760
      %1414 = vmatmul.mubr.f32.gmra.mrb[0].mxu0 %v1413
      %v1415 = vpop.f32.mrb[0].mxu0
      %v1416 = vadd.f32 %v1239, %v1415
      %v1417 = vpop.f32.mrb[0].mxu0
      %1418 = vmatprep.mubr.f32.mxu0 0.0
      %v1419 = vand.u32 %v177, 4294901760
      %1420 = vmatmul.mubr.f32.gmra.mrb[0].mxu0 %v1419
      %v1421 = vpop.f32.mrb[0].mxu0
      %v1422 = vadd.f32 %v1245, %v1421
      %v1423 = vpop.f32.mrb[0].mxu0
      %1424 = vmatprep.mubr.f32.mxu0 0.0
      %v1425 = vand.u32 %v178, 4294901760
      %1426 = vmatmul.mubr.f32.gmra.mrb[0].mxu0 %v1425
      %v1427 = vpop.f32.mrb[0].mxu0
      %v1428 = vadd.f32 %v1251, %v1427
      %v1429 = vpop.f32.mrb[0].mxu0
      %1430 = vmatprep.mubr.f32.mxu0 0.0
      %v1431 = vand.u32 %v179, 4294901760
      %1432 = vmatmul.mubr.f32.gmra.mrb[0].mxu0 %v1431
      %v1433 = vpop.f32.mrb[0].mxu0
      %v1434 = vadd.f32 %v1257, %v1433
      %v1435 = vpop.f32.mrb[0].mxu0
      %1436 = vmatprep.mubr.f32.mxu0 0.0
      %v1437 = vand.u32 %v180, 4294901760
      %1438 = vmatmul.mubr.f32.gmra.mrb[0].mxu0 %v1437
      %v1439 = vpop.f32.mrb[0].mxu0
      %v1440 = vadd.f32 %v1263, %v1439
      %v1441 = vpop.f32.mrb[0].mxu0
      %1442 = vmatprep.mubr.f32.mxu0 0.0
      %v1443 = vand.u32 %v181, 4294901760
      %1444 = vmatmul.mubr.f32.gmra.mrb[0].mxu0 %v1443
      %v1445 = vpop.f32.mrb[0].mxu0
      %v1446 = vadd.f32 %v1269, %v1445
      %v1447 = vpop.f32.mrb[0].mxu0
      %1448 = vmatprep.mubr.f32.mxu0 0.0
      %v1449 = vand.u32 %v182, 4294901760
      %1450 = vmatmul.mubr.f32.gmra.mrb[0].mxu0 %v1449
      %v1451 = vpop.f32.mrb[0].mxu0
      %v1452 = vadd.f32 %v1275, %v1451
      %v1453 = vpop.f32.mrb[0].mxu0
      %1454 = vmatprep.mubr.f32.mxu0 0.0
      %v1455 = vand.u32 %v183, 4294901760
      %1456 = vmatmul.mubr.f32.gmra.mrb[0].mxu0 %v1455
      %v1457 = vpop.f32.mrb[0].mxu0
      %v1458 = vadd.f32 %v1281, %v1457
      %v1459 = vpop.f32.mrb[0].mxu0
      %1460 = vmatprep.mubr.f32.mxu0 0.0
      %v1461 = vand.u32 %v184, 4294901760
      %1462 = vmatmul.mubr.f32.gmra.mrb[0].mxu0 %v1461
      %v1463 = vpop.f32.mrb[0].mxu0
      %v1464 = vadd.f32 %v1287, %v1463
      %v1465 = vpop.f32.mrb[0].mxu0
      %1466 = vmatprep.mubr.f32.mxu0 0.0
      %v1467 = vand.u32 %v185, 4294901760
      %1468 = vmatmul.mubr.f32.gmra.mrb[0].mxu0 %v1467
      %v1469 = vpop.f32.mrb[0].mxu0
      %v1470 = vadd.f32 %v1293, %v1469
      %v1471 = vpop.f32.mrb[0].mxu0
      %1472 = vmatprep.mubr.f32.mxu0 0.0
      %v1473 = vand.u32 %v186, 4294901760
      %1474 = vmatmul.mubr.f32.gmra.mrb[0].mxu0 %v1473
      %v1475 = vpop.f32.mrb[0].mxu0
      %v1476 = vadd.f32 %v1299, %v1475
      %v1477 = vpop.f32.mrb[0].mxu0
      %1478 = vmatprep.mubr.f32.mxu0 0.0
      %v1479 = vand.u32 %v187, 4294901760
      %1480 = vmatmul.mubr.f32.gmra.mrb[0].mxu0 %v1479
      %v1481 = vpop.f32.mrb[0].mxu0
      %v1482 = vadd.f32 %v1305, %v1481
      %v1483 = vpop.f32.mrb[0].mxu0
      %1484 = vmatprep.mubr.f32.mxu0 0.0
      %v1485 = vand.u32 %v188, 4294901760
      %1486 = vmatmul.mubr.f32.gmra.mrb[0].mxu0 %v1485
      %v1487 = vpop.f32.mrb[0].mxu0
      %v1488 = vadd.f32 %v1311, %v1487
      %v1489 = vpop.f32.mrb[0].mxu0
      %1490 = vmatprep.mubr.f32.mxu0 0.0
      %v1491 = vand.u32 %v189, 4294901760
      %1492 = vmatmul.mubr.f32.gmra.mrb[0].mxu0 %v1491
      %v1493 = vpop.f32.mrb[0].mxu0
      %v1494 = vadd.f32 %v1317, %v1493
      %v1495 = vpop.f32.mrb[0].mxu0
      %1496 = vdwg.mxu0
      %v1497 = vmax.f32 %v1404, 0.0
      %v1498 = vmax.f32 %v1410, 0.0
      %v1499 = vmax.f32 %v1416, 0.0
      %v1500 = vmax.f32 %v1422, 0.0
      %v1501 = vmax.f32 %v1428, 0.0
      %v1502 = vmax.f32 %v1434, 0.0
      %v1503 = vmax.f32 %v1440, 0.0
      %v1504 = vmax.f32 %v1446, 0.0
      %v1505 = vmax.f32 %v1452, 0.0
      %v1506 = vmax.f32 %v1458, 0.0
      %v1507 = vmax.f32 %v1464, 0.0
      %v1508 = vmax.f32 %v1470, 0.0
      %v1509 = vmax.f32 %v1476, 0.0
      %v1510 = vmax.f32 %v1482, 0.0
      %v1511 = vmax.f32 %v1488, 0.0
      %v1512 = vmax.f32 %v1494, 0.0
      %s1513 = scalar_lea.vmem %s1, 128
      %v1514 = vld [vmem:[%s1513] sm:$0xff]
      %v1515 = vld [vmem:[%s1513 + $0x8] sm:$0xff]
      %v1516 = vld [vmem:[%s1513 + $0x10] sm:$0xff]
      %v1517 = vld [vmem:[%s1513 + $0x18] sm:$0xff]
      %v1518 = vld [vmem:[%s1513 + $0x20] sm:$0xff]
      %v1519 = vld [vmem:[%s1513 + $0x28] sm:$0xff]
      %v1520 = vld [vmem:[%s1513 + $0x30] sm:$0xff]
      %v1521 = vld [vmem:[%s1513 + $0x38] sm:$0xff]
      %v1522 = vld [vmem:[%s1513 + $0x40] sm:$0xff]
      %v1523 = vld [vmem:[%s1513 + $0x48] sm:$0xff]
      %v1524 = vld [vmem:[%s1513 + $0x50] sm:$0xff]
      %v1525 = vld [vmem:[%s1513 + $0x58] sm:$0xff]
      %v1526 = vld [vmem:[%s1513 + $0x60] sm:$0xff]
      %v1527 = vld [vmem:[%s1513 + $0x68] sm:$0xff]
      %v1528 = vld [vmem:[%s1513 + $0x70] sm:$0xff]
      %v1529 = vld [vmem:[%s1513 + $0x78] sm:$0xff]
      %v1530 = vld [vmem:[%s2 + $0x1] sm:$0x1]
      %v1531 = vlaneseq
      %v1532 = vshrl.u32 %v1531, 7
      %v1533 = vsub.s32 0, %v1532
      %v1534 = vrot.slane %v1530, %v1533
      %1535 = vmatprep.subr.mxu0 0.0
      %v1536 = vand.u32 %v1514, 4294901760
      %1537 = vmatpush1.msra.mxu0 %v1536
      %1538 = vmatprep.subr.mxu0 0.0
      %v1539 = vand.u32 %v1515, 4294901760
      %1540 = vmatpush1.msra.mxu0 %v1539
      %1541 = vmatprep.subr.mxu0 0.0
      %v1542 = vand.u32 %v1516, 4294901760
      %1543 = vmatpush1.msra.mxu0 %v1542
      %1544 = vmatprep.subr.mxu0 0.0
      %v1545 = vand.u32 %v1517, 4294901760
      %1546 = vmatpush1.msra.mxu0 %v1545
      %1547 = vmatprep.subr.mxu0 0.0
      %v1548 = vand.u32 %v1518, 4294901760
      %1549 = vmatpush1.msra.mxu0 %v1548
      %1550 = vmatprep.subr.mxu0 0.0
      %v1551 = vand.u32 %v1519, 4294901760
      %1552 = vmatpush1.msra.mxu0 %v1551
      %1553 = vmatprep.subr.mxu0 0.0
      %v1554 = vand.u32 %v1520, 4294901760
      %1555 = vmatpush1.msra.mxu0 %v1554
      %1556 = vmatprep.subr.mxu0 0.0
      %v1557 = vand.u32 %v1521, 4294901760
      %1558 = vmatpush1.msra.mxu0 %v1557
      %1559 = vmatprep.subr.mxu0 0.0
      %v1560 = vand.u32 %v1522, 4294901760
      %1561 = vmatpush1.msra.mxu0 %v1560
      %1562 = vmatprep.subr.mxu0 0.0
      %v1563 = vand.u32 %v1523, 4294901760
      %1564 = vmatpush1.msra.mxu0 %v1563
      %1565 = vmatprep.subr.mxu0 0.0
      %v1566 = vand.u32 %v1524, 4294901760
      %1567 = vmatpush1.msra.mxu0 %v1566
      %1568 = vmatprep.subr.mxu0 0.0
      %v1569 = vand.u32 %v1525, 4294901760
      %1570 = vmatpush1.msra.mxu0 %v1569
      %1571 = vmatprep.subr.mxu0 0.0
      %v1572 = vand.u32 %v1526, 4294901760
      %1573 = vmatpush1.msra.mxu0 %v1572
      %1574 = vmatprep.subr.mxu0 0.0
      %v1575 = vand.u32 %v1527, 4294901760
      %1576 = vmatpush1.msra.mxu0 %v1575
      %1577 = vmatprep.subr.mxu0 0.0
      %v1578 = vand.u32 %v1528, 4294901760
      %1579 = vmatpush1.msra.mxu0 %v1578
      %1580 = vmatprep.subr.mxu0 0.0
      %v1581 = vand.u32 %v1529, 4294901760
      %1582 = vmatpush1.msra.mxu0 %v1581
      %1583 = vmatprep.subr.mxu0 0.0
      %1584 = vmatpush1.msra.mxu0 0.0
      %1585 = vmatprep.subr.mxu0 0.0
      %1586 = vmatpush1.msra.mxu0 0.0
      %1587 = vmatprep.subr.mxu0 0.0
      %1588 = vmatpush1.msra.mxu0 0.0
      %1589 = vmatprep.subr.mxu0 0.0
      %1590 = vmatpush1.msra.mxu0 0.0
      %1591 = vmatprep.subr.mxu0 0.0
      %1592 = vmatpush1.msra.mxu0 0.0
      %1593 = vmatprep.subr.mxu0 0.0
      %1594 = vmatpush1.msra.mxu0 0.0
      %1595 = vmatprep.subr.mxu0 0.0
      %1596 = vmatpush1.msra.mxu0 0.0
      %1597 = vmatprep.subr.mxu0 0.0
      %1598 = vmatpush1.msra.mxu0 0.0
      %1599 = vmatprep.subr.mxu0 0.0
      %1600 = vmatpush1.msra.mxu0 0.0
      %1601 = vmatprep.subr.mxu0 0.0
      %1602 = vmatpush1.msra.mxu0 0.0
      %1603 = vmatprep.subr.mxu0 0.0
      %1604 = vmatpush1.msra.mxu0 0.0
      %1605 = vmatprep.subr.mxu0 0.0
      %1606 = vmatpush1.msra.mxu0 0.0
      %1607 = vmatprep.subr.mxu0 0.0
      %1608 = vmatpush1.msra.mxu0 0.0
      %1609 = vmatprep.subr.mxu0 0.0
      %1610 = vmatpush1.msra.mxu0 0.0
      %1611 = vmatprep.subr.mxu0 0.0
      %1612 = vmatpush1.msra.mxu0 0.0
      %1613 = vmatprep.subr.mxu0 0.0
      %1614 = vmatpush1.msra.mxu0 0.0
      %1615 = vmatprep.mubr.f32.mxu0 0.0
      %v1616 = vand.u32 %v1497, 4294901760
      %v1617 = vsub.f32 %v1497, %v1616
      %v1618 = vand.u32 %v1617, 4294901760
      %v1619 = vsub.f32 %v1617, %v1618
      %v1620 = vand.u32 %v1619, 4294901760
      %1621 = vmatmul.mubr.f32.gmra.mrb[0].mxu0 %v1620
      %v1622 = vpop.f32.mrb[0].mxu0
      %v1623 = vadd.f32 %v1534, %v1622
      %v1624 = vpop.f32.mrb[0].mxu0
      %1625 = vmatprep.mubr.f32.mxu0 0.0
      %v1626 = vand.u32 %v1498, 4294901760
      %v1627 = vsub.f32 %v1498, %v1626
      %v1628 = vand.u32 %v1627, 4294901760
      %v1629 = vsub.f32 %v1627, %v1628
      %v1630 = vand.u32 %v1629, 4294901760
      %1631 = vmatmul.mubr.f32.gmra.mrb[0].mxu0 %v1630
      %v1632 = vpop.f32.mrb[0].mxu0
      %v1633 = vadd.f32 %v1534, %v1632
      %v1634 = vpop.f32.mrb[0].mxu0
      %1635 = vmatprep.mubr.f32.mxu0 0.0
      %v1636 = vand.u32 %v1499, 4294901760
      %v1637 = vsub.f32 %v1499, %v1636
      %v1638 = vand.u32 %v1637, 4294901760
      %v1639 = vsub.f32 %v1637, %v1638
      %v1640 = vand.u32 %v1639, 4294901760
      %1641 = vmatmul.mubr.f32.gmra.mrb[0].mxu0 %v1640
      %v1642 = vpop.f32.mrb[0].mxu0
      %v1643 = vadd.f32 %v1534, %v1642
      %v1644 = vpop.f32.mrb[0].mxu0
      %1645 = vmatprep.mubr.f32.mxu0 0.0
      %v1646 = vand.u32 %v1500, 4294901760
      %v1647 = vsub.f32 %v1500, %v1646
      %v1648 = vand.u32 %v1647, 4294901760
      %v1649 = vsub.f32 %v1647, %v1648
      %v1650 = vand.u32 %v1649, 4294901760
      %1651 = vmatmul.mubr.f32.gmra.mrb[0].mxu0 %v1650
      %v1652 = vpop.f32.mrb[0].mxu0
      %v1653 = vadd.f32 %v1534, %v1652
      %v1654 = vpop.f32.mrb[0].mxu0
      %1655 = vmatprep.mubr.f32.mxu0 0.0
      %v1656 = vand.u32 %v1501, 4294901760
      %v1657 = vsub.f32 %v1501, %v1656
      %v1658 = vand.u32 %v1657, 4294901760
      %v1659 = vsub.f32 %v1657, %v1658
      %v1660 = vand.u32 %v1659, 4294901760
      %1661 = vmatmul.mubr.f32.gmra.mrb[0].mxu0 %v1660
      %v1662 = vpop.f32.mrb[0].mxu0
      %v1663 = vadd.f32 %v1534, %v1662
      %v1664 = vpop.f32.mrb[0].mxu0
      %1665 = vmatprep.mubr.f32.mxu0 0.0
      %v1666 = vand.u32 %v1502, 4294901760
      %v1667 = vsub.f32 %v1502, %v1666
      %v1668 = vand.u32 %v1667, 4294901760
      %v1669 = vsub.f32 %v1667, %v1668
      %v1670 = vand.u32 %v1669, 4294901760
      %1671 = vmatmul.mubr.f32.gmra.mrb[0].mxu0 %v1670
      %v1672 = vpop.f32.mrb[0].mxu0
      %v1673 = vadd.f32 %v1534, %v1672
      %v1674 = vpop.f32.mrb[0].mxu0
      %1675 = vmatprep.mubr.f32.mxu0 0.0
      %v1676 = vand.u32 %v1503, 4294901760
      %v1677 = vsub.f32 %v1503, %v1676
      %v1678 = vand.u32 %v1677, 4294901760
      %v1679 = vsub.f32 %v1677, %v1678
      %v1680 = vand.u32 %v1679, 4294901760
      %1681 = vmatmul.mubr.f32.gmra.mrb[0].mxu0 %v1680
      %v1682 = vpop.f32.mrb[0].mxu0
      %v1683 = vadd.f32 %v1534, %v1682
      %v1684 = vpop.f32.mrb[0].mxu0
      %1685 = vmatprep.mubr.f32.mxu0 0.0
      %v1686 = vand.u32 %v1504, 4294901760
      %v1687 = vsub.f32 %v1504, %v1686
      %v1688 = vand.u32 %v1687, 4294901760
      %v1689 = vsub.f32 %v1687, %v1688
      %v1690 = vand.u32 %v1689, 4294901760
      %1691 = vmatmul.mubr.f32.gmra.mrb[0].mxu0 %v1690
      %v1692 = vpop.f32.mrb[0].mxu0
      %v1693 = vadd.f32 %v1534, %v1692
      %v1694 = vpop.f32.mrb[0].mxu0
      %1695 = vmatprep.mubr.f32.mxu0 0.0
      %v1696 = vand.u32 %v1505, 4294901760
      %v1697 = vsub.f32 %v1505, %v1696
      %v1698 = vand.u32 %v1697, 4294901760
      %v1699 = vsub.f32 %v1697, %v1698
      %v1700 = vand.u32 %v1699, 4294901760
      %1701 = vmatmul.mubr.f32.gmra.mrb[0].mxu0 %v1700
      %v1702 = vpop.f32.mrb[0].mxu0
      %v1703 = vadd.f32 %v1534, %v1702
      %v1704 = vpop.f32.mrb[0].mxu0
      %1705 = vmatprep.mubr.f32.mxu0 0.0
      %v1706 = vand.u32 %v1506, 4294901760
      %v1707 = vsub.f32 %v1506, %v1706
      %v1708 = vand.u32 %v1707, 4294901760
      %v1709 = vsub.f32 %v1707, %v1708
      %v1710 = vand.u32 %v1709, 4294901760
      %1711 = vmatmul.mubr.f32.gmra.mrb[0].mxu0 %v1710
      %v1712 = vpop.f32.mrb[0].mxu0
      %v1713 = vadd.f32 %v1534, %v1712
      %v1714 = vpop.f32.mrb[0].mxu0
      %1715 = vmatprep.mubr.f32.mxu0 0.0
      %v1716 = vand.u32 %v1507, 4294901760
      %v1717 = vsub.f32 %v1507, %v1716
      %v1718 = vand.u32 %v1717, 4294901760
      %v1719 = vsub.f32 %v1717, %v1718
      %v1720 = vand.u32 %v1719, 4294901760
      %1721 = vmatmul.mubr.f32.gmra.mrb[0].mxu0 %v1720
      %v1722 = vpop.f32.mrb[0].mxu0
      %v1723 = vadd.f32 %v1534, %v1722
      %v1724 = vpop.f32.mrb[0].mxu0
      %1725 = vmatprep.mubr.f32.mxu0 0.0
      %v1726 = vand.u32 %v1508, 4294901760
      %v1727 = vsub.f32 %v1508, %v1726
      %v1728 = vand.u32 %v1727, 4294901760
      %v1729 = vsub.f32 %v1727, %v1728
      %v1730 = vand.u32 %v1729, 4294901760
      %1731 = vmatmul.mubr.f32.gmra.mrb[0].mxu0 %v1730
      %v1732 = vpop.f32.mrb[0].mxu0
      %v1733 = vadd.f32 %v1534, %v1732
      %v1734 = vpop.f32.mrb[0].mxu0
      %1735 = vmatprep.mubr.f32.mxu0 0.0
      %v1736 = vand.u32 %v1509, 4294901760
      %v1737 = vsub.f32 %v1509, %v1736
      %v1738 = vand.u32 %v1737, 4294901760
      %v1739 = vsub.f32 %v1737, %v1738
      %v1740 = vand.u32 %v1739, 4294901760
      %1741 = vmatmul.mubr.f32.gmra.mrb[0].mxu0 %v1740
      %v1742 = vpop.f32.mrb[0].mxu0
      %v1743 = vadd.f32 %v1534, %v1742
      %v1744 = vpop.f32.mrb[0].mxu0
      %1745 = vmatprep.mubr.f32.mxu0 0.0
      %v1746 = vand.u32 %v1510, 4294901760
      %v1747 = vsub.f32 %v1510, %v1746
      %v1748 = vand.u32 %v1747, 4294901760
      %v1749 = vsub.f32 %v1747, %v1748
      %v1750 = vand.u32 %v1749, 4294901760
      %1751 = vmatmul.mubr.f32.gmra.mrb[0].mxu0 %v1750
      %v1752 = vpop.f32.mrb[0].mxu0
      %v1753 = vadd.f32 %v1534, %v1752
      %v1754 = vpop.f32.mrb[0].mxu0
      %1755 = vmatprep.mubr.f32.mxu0 0.0
      %v1756 = vand.u32 %v1511, 4294901760
      %v1757 = vsub.f32 %v1511, %v1756
      %v1758 = vand.u32 %v1757, 4294901760
      %v1759 = vsub.f32 %v1757, %v1758
      %v1760 = vand.u32 %v1759, 4294901760
      %1761 = vmatmul.mubr.f32.gmra.mrb[0].mxu0 %v1760
      %v1762 = vpop.f32.mrb[0].mxu0
      %v1763 = vadd.f32 %v1534, %v1762
      %v1764 = vpop.f32.mrb[0].mxu0
      %1765 = vmatprep.mubr.f32.mxu0 0.0
      %v1766 = vand.u32 %v1512, 4294901760
      %v1767 = vsub.f32 %v1512, %v1766
      %v1768 = vand.u32 %v1767, 4294901760
      %v1769 = vsub.f32 %v1767, %v1768
      %v1770 = vand.u32 %v1769, 4294901760
      %1771 = vmatmul.mubr.f32.gmra.mrb[0].mxu0 %v1770
      %v1772 = vpop.f32.mrb[0].mxu0
      %v1773 = vadd.f32 %v1534, %v1772
      %v1774 = vpop.f32.mrb[0].mxu0
      %1775 = vdwg.mxu0
      %1776 = vmatprep.subr.mxu0 0.0
      %v1777 = vand.u32 %v1514, 4294901760
      %v1778 = vsub.f32 %v1514, %v1777
      %v1779 = vand.u32 %v1778, 4294901760
      %v1780 = vsub.f32 %v1778, %v1779
      %v1781 = vand.u32 %v1780, 4294901760
      %1782 = vmatpush1.msra.mxu0 %v1781
      %1783 = vmatprep.subr.mxu0 0.0
      %v1784 = vand.u32 %v1515, 4294901760
      %v1785 = vsub.f32 %v1515, %v1784
      %v1786 = vand.u32 %v1785, 4294901760
      %v1787 = vsub.f32 %v1785, %v1786
      %v1788 = vand.u32 %v1787, 4294901760
      %1789 = vmatpush1.msra.mxu0 %v1788
      %1790 = vmatprep.subr.mxu0 0.0
      %v1791 = vand.u32 %v1516, 4294901760
      %v1792 = vsub.f32 %v1516, %v1791
      %v1793 = vand.u32 %v1792, 4294901760
      %v1794 = vsub.f32 %v1792, %v1793
      %v1795 = vand.u32 %v1794, 4294901760
      %1796 = vmatpush1.msra.mxu0 %v1795
      %1797 = vmatprep.subr.mxu0 0.0
      %v1798 = vand.u32 %v1517, 4294901760
      %v1799 = vsub.f32 %v1517, %v1798
      %v1800 = vand.u32 %v1799, 4294901760
      %v1801 = vsub.f32 %v1799, %v1800
      %v1802 = vand.u32 %v1801, 4294901760
      %1803 = vmatpush1.msra.mxu0 %v1802
      %1804 = vmatprep.subr.mxu0 0.0
      %v1805 = vand.u32 %v1518, 4294901760
      %v1806 = vsub.f32 %v1518, %v1805
      %v1807 = vand.u32 %v1806, 4294901760
      %v1808 = vsub.f32 %v1806, %v1807
      %v1809 = vand.u32 %v1808, 4294901760
      %1810 = vmatpush1.msra.mxu0 %v1809
      %1811 = vmatprep.subr.mxu0 0.0
      %v1812 = vand.u32 %v1519, 4294901760
      %v1813 = vsub.f32 %v1519, %v1812
      %v1814 = vand.u32 %v1813, 4294901760
      %v1815 = vsub.f32 %v1813, %v1814
      %v1816 = vand.u32 %v1815, 4294901760
      %1817 = vmatpush1.msra.mxu0 %v1816
      %1818 = vmatprep.subr.mxu0 0.0
      %v1819 = vand.u32 %v1520, 4294901760
      %v1820 = vsub.f32 %v1520, %v1819
      %v1821 = vand.u32 %v1820, 4294901760
      %v1822 = vsub.f32 %v1820, %v1821
      %v1823 = vand.u32 %v1822, 4294901760
      %1824 = vmatpush1.msra.mxu0 %v1823
      %1825 = vmatprep.subr.mxu0 0.0
      %v1826 = vand.u32 %v1521, 4294901760
      %v1827 = vsub.f32 %v1521, %v1826
      %v1828 = vand.u32 %v1827, 4294901760
      %v1829 = vsub.f32 %v1827, %v1828
      %v1830 = vand.u32 %v1829, 4294901760
      %1831 = vmatpush1.msra.mxu0 %v1830
      %1832 = vmatprep.subr.mxu0 0.0
      %v1833 = vand.u32 %v1522, 4294901760
      %v1834 = vsub.f32 %v1522, %v1833
      %v1835 = vand.u32 %v1834, 4294901760
      %v1836 = vsub.f32 %v1834, %v1835
      %v1837 = vand.u32 %v1836, 4294901760
      %1838 = vmatpush1.msra.mxu0 %v1837
      %1839 = vmatprep.subr.mxu0 0.0
      %v1840 = vand.u32 %v1523, 4294901760
      %v1841 = vsub.f32 %v1523, %v1840
      %v1842 = vand.u32 %v1841, 4294901760
      %v1843 = vsub.f32 %v1841, %v1842
      %v1844 = vand.u32 %v1843, 4294901760
      %1845 = vmatpush1.msra.mxu0 %v1844
      %1846 = vmatprep.subr.mxu0 0.0
      %v1847 = vand.u32 %v1524, 4294901760
      %v1848 = vsub.f32 %v1524, %v1847
      %v1849 = vand.u32 %v1848, 4294901760
      %v1850 = vsub.f32 %v1848, %v1849
      %v1851 = vand.u32 %v1850, 4294901760
      %1852 = vmatpush1.msra.mxu0 %v1851
      %1853 = vmatprep.subr.mxu0 0.0
      %v1854 = vand.u32 %v1525, 4294901760
      %v1855 = vsub.f32 %v1525, %v1854
      %v1856 = vand.u32 %v1855, 4294901760
      %v1857 = vsub.f32 %v1855, %v1856
      %v1858 = vand.u32 %v1857, 4294901760
      %1859 = vmatpush1.msra.mxu0 %v1858
      %1860 = vmatprep.subr.mxu0 0.0
      %v1861 = vand.u32 %v1526, 4294901760
      %v1862 = vsub.f32 %v1526, %v1861
      %v1863 = vand.u32 %v1862, 4294901760
      %v1864 = vsub.f32 %v1862, %v1863
      %v1865 = vand.u32 %v1864, 4294901760
      %1866 = vmatpush1.msra.mxu0 %v1865
      %1867 = vmatprep.subr.mxu0 0.0
      %v1868 = vand.u32 %v1527, 4294901760
      %v1869 = vsub.f32 %v1527, %v1868
      %v1870 = vand.u32 %v1869, 4294901760
      %v1871 = vsub.f32 %v1869, %v1870
      %v1872 = vand.u32 %v1871, 4294901760
      %1873 = vmatpush1.msra.mxu0 %v1872
      %1874 = vmatprep.subr.mxu0 0.0
      %v1875 = vand.u32 %v1528, 4294901760
      %v1876 = vsub.f32 %v1528, %v1875
      %v1877 = vand.u32 %v1876, 4294901760
      %v1878 = vsub.f32 %v1876, %v1877
      %v1879 = vand.u32 %v1878, 4294901760
      %1880 = vmatpush1.msra.mxu0 %v1879
      %1881 = vmatprep.subr.mxu0 0.0
      %v1882 = vand.u32 %v1529, 4294901760
      %v1883 = vsub.f32 %v1529, %v1882
      %v1884 = vand.u32 %v1883, 4294901760
      %v1885 = vsub.f32 %v1883, %v1884
      %v1886 = vand.u32 %v1885, 4294901760
      %1887 = vmatpush1.msra.mxu0 %v1886
      %1888 = vmatprep.subr.mxu0 0.0
      %1889 = vmatpush1.msra.mxu0 0.0
      %1890 = vmatprep.subr.mxu0 0.0
      %1891 = vmatpush1.msra.mxu0 0.0
      %1892 = vmatprep.subr.mxu0 0.0
      %1893 = vmatpush1.msra.mxu0 0.0
      %1894 = vmatprep.subr.mxu0 0.0
      %1895 = vmatpush1.msra.mxu0 0.0
      %1896 = vmatprep.subr.mxu0 0.0
      %1897 = vmatpush1.msra.mxu0 0.0
      %1898 = vmatprep.subr.mxu0 0.0
      %1899 = vmatpush1.msra.mxu0 0.0
      %1900 = vmatprep.subr.mxu0 0.0
      %1901 = vmatpush1.msra.mxu0 0.0
      %1902 = vmatprep.subr.mxu0 0.0
      %1903 = vmatpush1.msra.mxu0 0.0
      %1904 = vmatprep.subr.mxu0 0.0
      %1905 = vmatpush1.msra.mxu0 0.0
      %1906 = vmatprep.subr.mxu0 0.0
      %1907 = vmatpush1.msra.mxu0 0.0
      %1908 = vmatprep.subr.mxu0 0.0
      %1909 = vmatpush1.msra.mxu0 0.0
      %1910 = vmatprep.subr.mxu0 0.0
      %1911 = vmatpush1.msra.mxu0 0.0
      %1912 = vmatprep.subr.mxu0 0.0
      %1913 = vmatpush1.msra.mxu0 0.0
      %1914 = vmatprep.subr.mxu0 0.0
      %1915 = vmatpush1.msra.mxu0 0.0
      %1916 = vmatprep.subr.mxu0 0.0
      %1917 = vmatpush1.msra.mxu0 0.0
      %1918 = vmatprep.subr.mxu0 0.0
      %1919 = vmatpush1.msra.mxu0 0.0
      %1920 = vmatprep.mubr.f32.mxu0 0.0
      %v1921 = vand.u32 %v1497, 4294901760
      %1922 = vmatmul.mubr.f32.gmra.mrb[0].mxu0 %v1921
      %v1923 = vpop.f32.mrb[0].mxu0
      %v1924 = vadd.f32 %v1623, %v1923
      %v1925 = vpop.f32.mrb[0].mxu0
      %1926 = vmatprep.mubr.f32.mxu0 0.0
      %v1927 = vand.u32 %v1498, 4294901760
      %1928 = vmatmul.mubr.f32.gmra.mrb[0].mxu0 %v1927
      %v1929 = vpop.f32.mrb[0].mxu0
      %v1930 = vadd.f32 %v1633, %v1929
      %v1931 = vpop.f32.mrb[0].mxu0
      %1932 = vmatprep.mubr.f32.mxu0 0.0
      %v1933 = vand.u32 %v1499, 4294901760
      %1934 = vmatmul.mubr.f32.gmra.mrb[0].mxu0 %v1933
      %v1935 = vpop.f32.mrb[0].mxu0
      %v1936 = vadd.f32 %v1643, %v1935
      %v1937 = vpop.f32.mrb[0].mxu0
      %1938 = vmatprep.mubr.f32.mxu0 0.0
      %v1939 = vand.u32 %v1500, 4294901760
      %1940 = vmatmul.mubr.f32.gmra.mrb[0].mxu0 %v1939
      %v1941 = vpop.f32.mrb[0].mxu0
      %v1942 = vadd.f32 %v1653, %v1941
      %v1943 = vpop.f32.mrb[0].mxu0
      %1944 = vmatprep.mubr.f32.mxu0 0.0
      %v1945 = vand.u32 %v1501, 4294901760
      %1946 = vmatmul.mubr.f32.gmra.mrb[0].mxu0 %v1945
      %v1947 = vpop.f32.mrb[0].mxu0
      %v1948 = vadd.f32 %v1663, %v1947
      %v1949 = vpop.f32.mrb[0].mxu0
      %1950 = vmatprep.mubr.f32.mxu0 0.0
      %v1951 = vand.u32 %v1502, 4294901760
      %1952 = vmatmul.mubr.f32.gmra.mrb[0].mxu0 %v1951
      %v1953 = vpop.f32.mrb[0].mxu0
      %v1954 = vadd.f32 %v1673, %v1953
      %v1955 = vpop.f32.mrb[0].mxu0
      %1956 = vmatprep.mubr.f32.mxu0 0.0
      %v1957 = vand.u32 %v1503, 4294901760
      %1958 = vmatmul.mubr.f32.gmra.mrb[0].mxu0 %v1957
      %v1959 = vpop.f32.mrb[0].mxu0
      %v1960 = vadd.f32 %v1683, %v1959
      %v1961 = vpop.f32.mrb[0].mxu0
      %1962 = vmatprep.mubr.f32.mxu0 0.0
      %v1963 = vand.u32 %v1504, 4294901760
      %1964 = vmatmul.mubr.f32.gmra.mrb[0].mxu0 %v1963
      %v1965 = vpop.f32.mrb[0].mxu0
      %v1966 = vadd.f32 %v1693, %v1965
      %v1967 = vpop.f32.mrb[0].mxu0
      %1968 = vmatprep.mubr.f32.mxu0 0.0
      %v1969 = vand.u32 %v1505, 4294901760
      %1970 = vmatmul.mubr.f32.gmra.mrb[0].mxu0 %v1969
      %v1971 = vpop.f32.mrb[0].mxu0
      %v1972 = vadd.f32 %v1703, %v1971
      %v1973 = vpop.f32.mrb[0].mxu0
      %1974 = vmatprep.mubr.f32.mxu0 0.0
      %v1975 = vand.u32 %v1506, 4294901760
      %1976 = vmatmul.mubr.f32.gmra.mrb[0].mxu0 %v1975
      %v1977 = vpop.f32.mrb[0].mxu0
      %v1978 = vadd.f32 %v1713, %v1977
      %v1979 = vpop.f32.mrb[0].mxu0
      %1980 = vmatprep.mubr.f32.mxu0 0.0
      %v1981 = vand.u32 %v1507, 4294901760
      %1982 = vmatmul.mubr.f32.gmra.mrb[0].mxu0 %v1981
      %v1983 = vpop.f32.mrb[0].mxu0
      %v1984 = vadd.f32 %v1723, %v1983
      %v1985 = vpop.f32.mrb[0].mxu0
      %1986 = vmatprep.mubr.f32.mxu0 0.0
      %v1987 = vand.u32 %v1508, 4294901760
      %1988 = vmatmul.mubr.f32.gmra.mrb[0].mxu0 %v1987
      %v1989 = vpop.f32.mrb[0].mxu0
      %v1990 = vadd.f32 %v1733, %v1989
      %v1991 = vpop.f32.mrb[0].mxu0
      %1992 = vmatprep.mubr.f32.mxu0 0.0
      %v1993 = vand.u32 %v1509, 4294901760
      %1994 = vmatmul.mubr.f32.gmra.mrb[0].mxu0 %v1993
      %v1995 = vpop.f32.mrb[0].mxu0
      %v1996 = vadd.f32 %v1743, %v1995
      %v1997 = vpop.f32.mrb[0].mxu0
      %1998 = vmatprep.mubr.f32.mxu0 0.0
      %v1999 = vand.u32 %v1510, 4294901760
      %2000 = vmatmul.mubr.f32.gmra.mrb[0].mxu0 %v1999
      %v2001 = vpop.f32.mrb[0].mxu0
      %v2002 = vadd.f32 %v1753, %v2001
      %v2003 = vpop.f32.mrb[0].mxu0
      %2004 = vmatprep.mubr.f32.mxu0 0.0
      %v2005 = vand.u32 %v1511, 4294901760
      %2006 = vmatmul.mubr.f32.gmra.mrb[0].mxu0 %v2005
      %v2007 = vpop.f32.mrb[0].mxu0
      %v2008 = vadd.f32 %v1763, %v2007
      %v2009 = vpop.f32.mrb[0].mxu0
      %2010 = vmatprep.mubr.f32.mxu0 0.0
      %v2011 = vand.u32 %v1512, 4294901760
      %2012 = vmatmul.mubr.f32.gmra.mrb[0].mxu0 %v2011
      %v2013 = vpop.f32.mrb[0].mxu0
      %v2014 = vadd.f32 %v1773, %v2013
      %v2015 = vpop.f32.mrb[0].mxu0
      %2016 = vdwg.mxu0
      %2017 = vmatprep.subr.mxu0 0.0
      %v2018 = vand.u32 %v1514, 4294901760
      %v2019 = vsub.f32 %v1514, %v2018
      %2020 = vmatpush1.msra.mxu0 %v2019
      %2021 = vmatprep.subr.mxu0 0.0
      %v2022 = vand.u32 %v1515, 4294901760
      %v2023 = vsub.f32 %v1515, %v2022
      %2024 = vmatpush1.msra.mxu0 %v2023
      %2025 = vmatprep.subr.mxu0 0.0
      %v2026 = vand.u32 %v1516, 4294901760
      %v2027 = vsub.f32 %v1516, %v2026
      %2028 = vmatpush1.msra.mxu0 %v2027
      %2029 = vmatprep.subr.mxu0 0.0
      %v2030 = vand.u32 %v1517, 4294901760
      %v2031 = vsub.f32 %v1517, %v2030
      %2032 = vmatpush1.msra.mxu0 %v2031
      %2033 = vmatprep.subr.mxu0 0.0
      %v2034 = vand.u32 %v1518, 4294901760
      %v2035 = vsub.f32 %v1518, %v2034
      %2036 = vmatpush1.msra.mxu0 %v2035
      %2037 = vmatprep.subr.mxu0 0.0
      %v2038 = vand.u32 %v1519, 4294901760
      %v2039 = vsub.f32 %v1519, %v2038
      %2040 = vmatpush1.msra.mxu0 %v2039
      %2041 = vmatprep.subr.mxu0 0.0
      %v2042 = vand.u32 %v1520, 4294901760
      %v2043 = vsub.f32 %v1520, %v2042
      %2044 = vmatpush1.msra.mxu0 %v2043
      %2045 = vmatprep.subr.mxu0 0.0
      %v2046 = vand.u32 %v1521, 4294901760
      %v2047 = vsub.f32 %v1521, %v2046
      %2048 = vmatpush1.msra.mxu0 %v2047
      %2049 = vmatprep.subr.mxu0 0.0
      %v2050 = vand.u32 %v1522, 4294901760
      %v2051 = vsub.f32 %v1522, %v2050
      %2052 = vmatpush1.msra.mxu0 %v2051
      %2053 = vmatprep.subr.mxu0 0.0
      %v2054 = vand.u32 %v1523, 4294901760
      %v2055 = vsub.f32 %v1523, %v2054
      %2056 = vmatpush1.msra.mxu0 %v2055
      %2057 = vmatprep.subr.mxu0 0.0
      %v2058 = vand.u32 %v1524, 4294901760
      %v2059 = vsub.f32 %v1524, %v2058
      %2060 = vmatpush1.msra.mxu0 %v2059
      %2061 = vmatprep.subr.mxu0 0.0
      %v2062 = vand.u32 %v1525, 4294901760
      %v2063 = vsub.f32 %v1525, %v2062
      %2064 = vmatpush1.msra.mxu0 %v2063
      %2065 = vmatprep.subr.mxu0 0.0
      %v2066 = vand.u32 %v1526, 4294901760
      %v2067 = vsub.f32 %v1526, %v2066
      %2068 = vmatpush1.msra.mxu0 %v2067
      %2069 = vmatprep.subr.mxu0 0.0
      %v2070 = vand.u32 %v1527, 4294901760
      %v2071 = vsub.f32 %v1527, %v2070
      %2072 = vmatpush1.msra.mxu0 %v2071
      %2073 = vmatprep.subr.mxu0 0.0
      %v2074 = vand.u32 %v1528, 4294901760
      %v2075 = vsub.f32 %v1528, %v2074
      %2076 = vmatpush1.msra.mxu0 %v2075
      %2077 = vmatprep.subr.mxu0 0.0
      %v2078 = vand.u32 %v1529, 4294901760
      %v2079 = vsub.f32 %v1529, %v2078
      %2080 = vmatpush1.msra.mxu0 %v2079
      %2081 = vmatprep.subr.mxu0 0.0
      %2082 = vmatpush1.msra.mxu0 0.0
      %2083 = vmatprep.subr.mxu0 0.0
      %2084 = vmatpush1.msra.mxu0 0.0
      %2085 = vmatprep.subr.mxu0 0.0
      %2086 = vmatpush1.msra.mxu0 0.0
      %2087 = vmatprep.subr.mxu0 0.0
      %2088 = vmatpush1.msra.mxu0 0.0
      %2089 = vmatprep.subr.mxu0 0.0
      %2090 = vmatpush1.msra.mxu0 0.0
      %2091 = vmatprep.subr.mxu0 0.0
      %2092 = vmatpush1.msra.mxu0 0.0
      %2093 = vmatprep.subr.mxu0 0.0
      %2094 = vmatpush1.msra.mxu0 0.0
      %2095 = vmatprep.subr.mxu0 0.0
      %2096 = vmatpush1.msra.mxu0 0.0
      %2097 = vmatprep.subr.mxu0 0.0
      %2098 = vmatpush1.msra.mxu0 0.0
      %2099 = vmatprep.subr.mxu0 0.0
      %2100 = vmatpush1.msra.mxu0 0.0
      %2101 = vmatprep.subr.mxu0 0.0
      %2102 = vmatpush1.msra.mxu0 0.0
      %2103 = vmatprep.subr.mxu0 0.0
      %2104 = vmatpush1.msra.mxu0 0.0
      %2105 = vmatprep.subr.mxu0 0.0
      %2106 = vmatpush1.msra.mxu0 0.0
      %2107 = vmatprep.subr.mxu0 0.0
      %2108 = vmatpush1.msra.mxu0 0.0
      %2109 = vmatprep.subr.mxu0 0.0
      %2110 = vmatpush1.msra.mxu0 0.0
      %2111 = vmatprep.subr.mxu0 0.0
      %2112 = vmatpush1.msra.mxu0 0.0
      %2113 = vmatprep.mubr.f32.mxu0 0.0
      %v2114 = vand.u32 %v1497, 4294901760
      %v2115 = vsub.f32 %v1497, %v2114
      %2116 = vmatmul.mubr.f32.gmra.mrb[0].mxu0 %v2115
      %v2117 = vpop.f32.mrb[0].mxu0
      %v2118 = vadd.f32 %v1924, %v2117
      %v2119 = vpop.f32.mrb[0].mxu0
      %2120 = vmatprep.mubr.f32.mxu0 0.0
      %v2121 = vand.u32 %v1498, 4294901760
      %v2122 = vsub.f32 %v1498, %v2121
      %2123 = vmatmul.mubr.f32.gmra.mrb[0].mxu0 %v2122
      %v2124 = vpop.f32.mrb[0].mxu0
      %v2125 = vadd.f32 %v1930, %v2124
      %v2126 = vpop.f32.mrb[0].mxu0
      %2127 = vmatprep.mubr.f32.mxu0 0.0
      %v2128 = vand.u32 %v1499, 4294901760
      %v2129 = vsub.f32 %v1499, %v2128
      %2130 = vmatmul.mubr.f32.gmra.mrb[0].mxu0 %v2129
      %v2131 = vpop.f32.mrb[0].mxu0
      %v2132 = vadd.f32 %v1936, %v2131
      %v2133 = vpop.f32.mrb[0].mxu0
      %2134 = vmatprep.mubr.f32.mxu0 0.0
      %v2135 = vand.u32 %v1500, 4294901760
      %v2136 = vsub.f32 %v1500, %v2135
      %2137 = vmatmul.mubr.f32.gmra.mrb[0].mxu0 %v2136
      %v2138 = vpop.f32.mrb[0].mxu0
      %v2139 = vadd.f32 %v1942, %v2138
      %v2140 = vpop.f32.mrb[0].mxu0
      %2141 = vmatprep.mubr.f32.mxu0 0.0
      %v2142 = vand.u32 %v1501, 4294901760
      %v2143 = vsub.f32 %v1501, %v2142
      %2144 = vmatmul.mubr.f32.gmra.mrb[0].mxu0 %v2143
      %v2145 = vpop.f32.mrb[0].mxu0
      %v2146 = vadd.f32 %v1948, %v2145
      %v2147 = vpop.f32.mrb[0].mxu0
      %2148 = vmatprep.mubr.f32.mxu0 0.0
      %v2149 = vand.u32 %v1502, 4294901760
      %v2150 = vsub.f32 %v1502, %v2149
      %2151 = vmatmul.mubr.f32.gmra.mrb[0].mxu0 %v2150
      %v2152 = vpop.f32.mrb[0].mxu0
      %v2153 = vadd.f32 %v1954, %v2152
      %v2154 = vpop.f32.mrb[0].mxu0
      %2155 = vmatprep.mubr.f32.mxu0 0.0
      %v2156 = vand.u32 %v1503, 4294901760
      %v2157 = vsub.f32 %v1503, %v2156
      %2158 = vmatmul.mubr.f32.gmra.mrb[0].mxu0 %v2157
      %v2159 = vpop.f32.mrb[0].mxu0
      %v2160 = vadd.f32 %v1960, %v2159
      %v2161 = vpop.f32.mrb[0].mxu0
      %2162 = vmatprep.mubr.f32.mxu0 0.0
      %v2163 = vand.u32 %v1504, 4294901760
      %v2164 = vsub.f32 %v1504, %v2163
      %2165 = vmatmul.mubr.f32.gmra.mrb[0].mxu0 %v2164
      %v2166 = vpop.f32.mrb[0].mxu0
      %v2167 = vadd.f32 %v1966, %v2166
      %v2168 = vpop.f32.mrb[0].mxu0
      %2169 = vmatprep.mubr.f32.mxu0 0.0
      %v2170 = vand.u32 %v1505, 4294901760
      %v2171 = vsub.f32 %v1505, %v2170
      %2172 = vmatmul.mubr.f32.gmra.mrb[0].mxu0 %v2171
      %v2173 = vpop.f32.mrb[0].mxu0
      %v2174 = vadd.f32 %v1972, %v2173
      %v2175 = vpop.f32.mrb[0].mxu0
      %2176 = vmatprep.mubr.f32.mxu0 0.0
      %v2177 = vand.u32 %v1506, 4294901760
      %v2178 = vsub.f32 %v1506, %v2177
      %2179 = vmatmul.mubr.f32.gmra.mrb[0].mxu0 %v2178
      %v2180 = vpop.f32.mrb[0].mxu0
      %v2181 = vadd.f32 %v1978, %v2180
      %v2182 = vpop.f32.mrb[0].mxu0
      %2183 = vmatprep.mubr.f32.mxu0 0.0
      %v2184 = vand.u32 %v1507, 4294901760
      %v2185 = vsub.f32 %v1507, %v2184
      %2186 = vmatmul.mubr.f32.gmra.mrb[0].mxu0 %v2185
      %v2187 = vpop.f32.mrb[0].mxu0
      %v2188 = vadd.f32 %v1984, %v2187
      %v2189 = vpop.f32.mrb[0].mxu0
      %2190 = vmatprep.mubr.f32.mxu0 0.0
      %v2191 = vand.u32 %v1508, 4294901760
      %v2192 = vsub.f32 %v1508, %v2191
      %2193 = vmatmul.mubr.f32.gmra.mrb[0].mxu0 %v2192
      %v2194 = vpop.f32.mrb[0].mxu0
      %v2195 = vadd.f32 %v1990, %v2194
      %v2196 = vpop.f32.mrb[0].mxu0
      %2197 = vmatprep.mubr.f32.mxu0 0.0
      %v2198 = vand.u32 %v1509, 4294901760
      %v2199 = vsub.f32 %v1509, %v2198
      %2200 = vmatmul.mubr.f32.gmra.mrb[0].mxu0 %v2199
      %v2201 = vpop.f32.mrb[0].mxu0
      %v2202 = vadd.f32 %v1996, %v2201
      %v2203 = vpop.f32.mrb[0].mxu0
      %2204 = vmatprep.mubr.f32.mxu0 0.0
      %v2205 = vand.u32 %v1510, 4294901760
      %v2206 = vsub.f32 %v1510, %v2205
      %2207 = vmatmul.mubr.f32.gmra.mrb[0].mxu0 %v2206
      %v2208 = vpop.f32.mrb[0].mxu0
      %v2209 = vadd.f32 %v2002, %v2208
      %v2210 = vpop.f32.mrb[0].mxu0
      %2211 = vmatprep.mubr.f32.mxu0 0.0
      %v2212 = vand.u32 %v1511, 4294901760
      %v2213 = vsub.f32 %v1511, %v2212
      %2214 = vmatmul.mubr.f32.gmra.mrb[0].mxu0 %v2213
      %v2215 = vpop.f32.mrb[0].mxu0
      %v2216 = vadd.f32 %v2008, %v2215
      %v2217 = vpop.f32.mrb[0].mxu0
      %2218 = vmatprep.mubr.f32.mxu0 0.0
      %v2219 = vand.u32 %v1512, 4294901760
      %v2220 = vsub.f32 %v1512, %v2219
      %2221 = vmatmul.mubr.f32.gmra.mrb[0].mxu0 %v2220
      %v2222 = vpop.f32.mrb[0].mxu0
      %v2223 = vadd.f32 %v2014, %v2222
      %v2224 = vpop.f32.mrb[0].mxu0
      %2225 = vdwg.mxu0
      %2226 = vmatprep.subr.mxu0 0.0
      %v2227 = vand.u32 %v1514, 4294901760
      %2228 = vmatpush1.msra.mxu0 %v2227
      %2229 = vmatprep.subr.mxu0 0.0
      %v2230 = vand.u32 %v1515, 4294901760
      %2231 = vmatpush1.msra.mxu0 %v2230
      %2232 = vmatprep.subr.mxu0 0.0
      %v2233 = vand.u32 %v1516, 4294901760
      %2234 = vmatpush1.msra.mxu0 %v2233
      %2235 = vmatprep.subr.mxu0 0.0
      %v2236 = vand.u32 %v1517, 4294901760
      %2237 = vmatpush1.msra.mxu0 %v2236
      %2238 = vmatprep.subr.mxu0 0.0
      %v2239 = vand.u32 %v1518, 4294901760
      %2240 = vmatpush1.msra.mxu0 %v2239
      %2241 = vmatprep.subr.mxu0 0.0
      %v2242 = vand.u32 %v1519, 4294901760
      %2243 = vmatpush1.msra.mxu0 %v2242
      %2244 = vmatprep.subr.mxu0 0.0
      %v2245 = vand.u32 %v1520, 4294901760
      %2246 = vmatpush1.msra.mxu0 %v2245
      %2247 = vmatprep.subr.mxu0 0.0
      %v2248 = vand.u32 %v1521, 4294901760
      %2249 = vmatpush1.msra.mxu0 %v2248
      %2250 = vmatprep.subr.mxu0 0.0
      %v2251 = vand.u32 %v1522, 4294901760
      %2252 = vmatpush1.msra.mxu0 %v2251
      %2253 = vmatprep.subr.mxu0 0.0
      %v2254 = vand.u32 %v1523, 4294901760
      %2255 = vmatpush1.msra.mxu0 %v2254
      %2256 = vmatprep.subr.mxu0 0.0
      %v2257 = vand.u32 %v1524, 4294901760
      %2258 = vmatpush1.msra.mxu0 %v2257
      %2259 = vmatprep.subr.mxu0 0.0
      %v2260 = vand.u32 %v1525, 4294901760
      %2261 = vmatpush1.msra.mxu0 %v2260
      %2262 = vmatprep.subr.mxu0 0.0
      %v2263 = vand.u32 %v1526, 4294901760
      %2264 = vmatpush1.msra.mxu0 %v2263
      %2265 = vmatprep.subr.mxu0 0.0
      %v2266 = vand.u32 %v1527, 4294901760
      %2267 = vmatpush1.msra.mxu0 %v2266
      %2268 = vmatprep.subr.mxu0 0.0
      %v2269 = vand.u32 %v1528, 4294901760
      %2270 = vmatpush1.msra.mxu0 %v2269
      %2271 = vmatprep.subr.mxu0 0.0
      %v2272 = vand.u32 %v1529, 4294901760
      %2273 = vmatpush1.msra.mxu0 %v2272
      %2274 = vmatprep.subr.mxu0 0.0
      %2275 = vmatpush1.msra.mxu0 0.0
      %2276 = vmatprep.subr.mxu0 0.0
      %2277 = vmatpush1.msra.mxu0 0.0
      %2278 = vmatprep.subr.mxu0 0.0
      %2279 = vmatpush1.msra.mxu0 0.0
      %2280 = vmatprep.subr.mxu0 0.0
      %2281 = vmatpush1.msra.mxu0 0.0
      %2282 = vmatprep.subr.mxu0 0.0
      %2283 = vmatpush1.msra.mxu0 0.0
      %2284 = vmatprep.subr.mxu0 0.0
      %2285 = vmatpush1.msra.mxu0 0.0
      %2286 = vmatprep.subr.mxu0 0.0
      %2287 = vmatpush1.msra.mxu0 0.0
      %2288 = vmatprep.subr.mxu0 0.0
      %2289 = vmatpush1.msra.mxu0 0.0
      %2290 = vmatprep.subr.mxu0 0.0
      %2291 = vmatpush1.msra.mxu0 0.0
      %2292 = vmatprep.subr.mxu0 0.0
      %2293 = vmatpush1.msra.mxu0 0.0
      %2294 = vmatprep.subr.mxu0 0.0
      %2295 = vmatpush1.msra.mxu0 0.0
      %2296 = vmatprep.subr.mxu0 0.0
      %2297 = vmatpush1.msra.mxu0 0.0
      %2298 = vmatprep.subr.mxu0 0.0
      %2299 = vmatpush1.msra.mxu0 0.0
      %2300 = vmatprep.subr.mxu0 0.0
      %2301 = vmatpush1.msra.mxu0 0.0
      %2302 = vmatprep.subr.mxu0 0.0
      %2303 = vmatpush1.msra.mxu0 0.0
      %2304 = vmatprep.subr.mxu0 0.0
      %2305 = vmatpush1.msra.mxu0 0.0
      %2306 = vmatprep.mubr.f32.mxu0 0.0
      %v2307 = vand.u32 %v1497, 4294901760
      %v2308 = vsub.f32 %v1497, %v2307
      %v2309 = vand.u32 %v2308, 4294901760
      %2310 = vmatmul.mubr.f32.gmra.mrb[0].mxu0 %v2309
      %v2311 = vpop.f32.mrb[0].mxu0
      %v2312 = vadd.f32 %v2118, %v2311
      %v2313 = vpop.f32.mrb[0].mxu0
      %2314 = vmatprep.mubr.f32.mxu0 0.0
      %v2315 = vand.u32 %v1498, 4294901760
      %v2316 = vsub.f32 %v1498, %v2315
      %v2317 = vand.u32 %v2316, 4294901760
      %2318 = vmatmul.mubr.f32.gmra.mrb[0].mxu0 %v2317
      %v2319 = vpop.f32.mrb[0].mxu0
      %v2320 = vadd.f32 %v2125, %v2319
      %v2321 = vpop.f32.mrb[0].mxu0
      %2322 = vmatprep.mubr.f32.mxu0 0.0
      %v2323 = vand.u32 %v1499, 4294901760
      %v2324 = vsub.f32 %v1499, %v2323
      %v2325 = vand.u32 %v2324, 4294901760
      %2326 = vmatmul.mubr.f32.gmra.mrb[0].mxu0 %v2325
      %v2327 = vpop.f32.mrb[0].mxu0
      %v2328 = vadd.f32 %v2132, %v2327
      %v2329 = vpop.f32.mrb[0].mxu0
      %2330 = vmatprep.mubr.f32.mxu0 0.0
      %v2331 = vand.u32 %v1500, 4294901760
      %v2332 = vsub.f32 %v1500, %v2331
      %v2333 = vand.u32 %v2332, 4294901760
      %2334 = vmatmul.mubr.f32.gmra.mrb[0].mxu0 %v2333
      %v2335 = vpop.f32.mrb[0].mxu0
      %v2336 = vadd.f32 %v2139, %v2335
      %v2337 = vpop.f32.mrb[0].mxu0
      %2338 = vmatprep.mubr.f32.mxu0 0.0
      %v2339 = vand.u32 %v1501, 4294901760
      %v2340 = vsub.f32 %v1501, %v2339
      %v2341 = vand.u32 %v2340, 4294901760
      %2342 = vmatmul.mubr.f32.gmra.mrb[0].mxu0 %v2341
      %v2343 = vpop.f32.mrb[0].mxu0
      %v2344 = vadd.f32 %v2146, %v2343
      %v2345 = vpop.f32.mrb[0].mxu0
      %2346 = vmatprep.mubr.f32.mxu0 0.0
      %v2347 = vand.u32 %v1502, 4294901760
      %v2348 = vsub.f32 %v1502, %v2347
      %v2349 = vand.u32 %v2348, 4294901760
      %2350 = vmatmul.mubr.f32.gmra.mrb[0].mxu0 %v2349
      %v2351 = vpop.f32.mrb[0].mxu0
      %v2352 = vadd.f32 %v2153, %v2351
      %v2353 = vpop.f32.mrb[0].mxu0
      %2354 = vmatprep.mubr.f32.mxu0 0.0
      %v2355 = vand.u32 %v1503, 4294901760
      %v2356 = vsub.f32 %v1503, %v2355
      %v2357 = vand.u32 %v2356, 4294901760
      %2358 = vmatmul.mubr.f32.gmra.mrb[0].mxu0 %v2357
      %v2359 = vpop.f32.mrb[0].mxu0
      %v2360 = vadd.f32 %v2160, %v2359
      %v2361 = vpop.f32.mrb[0].mxu0
      %2362 = vmatprep.mubr.f32.mxu0 0.0
      %v2363 = vand.u32 %v1504, 4294901760
      %v2364 = vsub.f32 %v1504, %v2363
      %v2365 = vand.u32 %v2364, 4294901760
      %2366 = vmatmul.mubr.f32.gmra.mrb[0].mxu0 %v2365
      %v2367 = vpop.f32.mrb[0].mxu0
      %v2368 = vadd.f32 %v2167, %v2367
      %v2369 = vpop.f32.mrb[0].mxu0
      %2370 = vmatprep.mubr.f32.mxu0 0.0
      %v2371 = vand.u32 %v1505, 4294901760
      %v2372 = vsub.f32 %v1505, %v2371
      %v2373 = vand.u32 %v2372, 4294901760
      %2374 = vmatmul.mubr.f32.gmra.mrb[0].mxu0 %v2373
      %v2375 = vpop.f32.mrb[0].mxu0
      %v2376 = vadd.f32 %v2174, %v2375
      %v2377 = vpop.f32.mrb[0].mxu0
      %2378 = vmatprep.mubr.f32.mxu0 0.0
      %v2379 = vand.u32 %v1506, 4294901760
      %v2380 = vsub.f32 %v1506, %v2379
      %v2381 = vand.u32 %v2380, 4294901760
      %2382 = vmatmul.mubr.f32.gmra.mrb[0].mxu0 %v2381
      %v2383 = vpop.f32.mrb[0].mxu0
      %v2384 = vadd.f32 %v2181, %v2383
      %v2385 = vpop.f32.mrb[0].mxu0
      %2386 = vmatprep.mubr.f32.mxu0 0.0
      %v2387 = vand.u32 %v1507, 4294901760
      %v2388 = vsub.f32 %v1507, %v2387
      %v2389 = vand.u32 %v2388, 4294901760
      %2390 = vmatmul.mubr.f32.gmra.mrb[0].mxu0 %v2389
      %v2391 = vpop.f32.mrb[0].mxu0
      %v2392 = vadd.f32 %v2188, %v2391
      %v2393 = vpop.f32.mrb[0].mxu0
      %2394 = vmatprep.mubr.f32.mxu0 0.0
      %v2395 = vand.u32 %v1508, 4294901760
      %v2396 = vsub.f32 %v1508, %v2395
      %v2397 = vand.u32 %v2396, 4294901760
      %2398 = vmatmul.mubr.f32.gmra.mrb[0].mxu0 %v2397
      %v2399 = vpop.f32.mrb[0].mxu0
      %v2400 = vadd.f32 %v2195, %v2399
      %v2401 = vpop.f32.mrb[0].mxu0
      %2402 = vmatprep.mubr.f32.mxu0 0.0
      %v2403 = vand.u32 %v1509, 4294901760
      %v2404 = vsub.f32 %v1509, %v2403
      %v2405 = vand.u32 %v2404, 4294901760
      %2406 = vmatmul.mubr.f32.gmra.mrb[0].mxu0 %v2405
      %v2407 = vpop.f32.mrb[0].mxu0
      %v2408 = vadd.f32 %v2202, %v2407
      %v2409 = vpop.f32.mrb[0].mxu0
      %2410 = vmatprep.mubr.f32.mxu0 0.0
      %v2411 = vand.u32 %v1510, 4294901760
      %v2412 = vsub.f32 %v1510, %v2411
      %v2413 = vand.u32 %v2412, 4294901760
      %2414 = vmatmul.mubr.f32.gmra.mrb[0].mxu0 %v2413
      %v2415 = vpop.f32.mrb[0].mxu0
      %v2416 = vadd.f32 %v2209, %v2415
      %v2417 = vpop.f32.mrb[0].mxu0
      %2418 = vmatprep.mubr.f32.mxu0 0.0
      %v2419 = vand.u32 %v1511, 4294901760
      %v2420 = vsub.f32 %v1511, %v2419
      %v2421 = vand.u32 %v2420, 4294901760
      %2422 = vmatmul.mubr.f32.gmra.mrb[0].mxu0 %v2421
      %v2423 = vpop.f32.mrb[0].mxu0
      %v2424 = vadd.f32 %v2216, %v2423
      %v2425 = vpop.f32.mrb[0].mxu0
      %2426 = vmatprep.mubr.f32.mxu0 0.0
      %v2427 = vand.u32 %v1512, 4294901760
      %v2428 = vsub.f32 %v1512, %v2427
      %v2429 = vand.u32 %v2428, 4294901760
      %2430 = vmatmul.mubr.f32.gmra.mrb[0].mxu0 %v2429
      %v2431 = vpop.f32.mrb[0].mxu0
      %v2432 = vadd.f32 %v2223, %v2431
      %v2433 = vpop.f32.mrb[0].mxu0
      %2434 = vdwg.mxu0
      %2435 = vmatprep.subr.mxu0 0.0
      %v2436 = vand.u32 %v1514, 4294901760
      %v2437 = vsub.f32 %v1514, %v2436
      %v2438 = vand.u32 %v2437, 4294901760
      %2439 = vmatpush1.msra.mxu0 %v2438
      %2440 = vmatprep.subr.mxu0 0.0
      %v2441 = vand.u32 %v1515, 4294901760
      %v2442 = vsub.f32 %v1515, %v2441
      %v2443 = vand.u32 %v2442, 4294901760
      %2444 = vmatpush1.msra.mxu0 %v2443
      %2445 = vmatprep.subr.mxu0 0.0
      %v2446 = vand.u32 %v1516, 4294901760
      %v2447 = vsub.f32 %v1516, %v2446
      %v2448 = vand.u32 %v2447, 4294901760
      %2449 = vmatpush1.msra.mxu0 %v2448
      %2450 = vmatprep.subr.mxu0 0.0
      %v2451 = vand.u32 %v1517, 4294901760
      %v2452 = vsub.f32 %v1517, %v2451
      %v2453 = vand.u32 %v2452, 4294901760
      %2454 = vmatpush1.msra.mxu0 %v2453
      %2455 = vmatprep.subr.mxu0 0.0
      %v2456 = vand.u32 %v1518, 4294901760
      %v2457 = vsub.f32 %v1518, %v2456
      %v2458 = vand.u32 %v2457, 4294901760
      %2459 = vmatpush1.msra.mxu0 %v2458
      %2460 = vmatprep.subr.mxu0 0.0
      %v2461 = vand.u32 %v1519, 4294901760
      %v2462 = vsub.f32 %v1519, %v2461
      %v2463 = vand.u32 %v2462, 4294901760
      %2464 = vmatpush1.msra.mxu0 %v2463
      %2465 = vmatprep.subr.mxu0 0.0
      %v2466 = vand.u32 %v1520, 4294901760
      %v2467 = vsub.f32 %v1520, %v2466
      %v2468 = vand.u32 %v2467, 4294901760
      %2469 = vmatpush1.msra.mxu0 %v2468
      %2470 = vmatprep.subr.mxu0 0.0
      %v2471 = vand.u32 %v1521, 4294901760
      %v2472 = vsub.f32 %v1521, %v2471
      %v2473 = vand.u32 %v2472, 4294901760
      %2474 = vmatpush1.msra.mxu0 %v2473
      %2475 = vmatprep.subr.mxu0 0.0
      %v2476 = vand.u32 %v1522, 4294901760
      %v2477 = vsub.f32 %v1522, %v2476
      %v2478 = vand.u32 %v2477, 4294901760
      %2479 = vmatpush1.msra.mxu0 %v2478
      %2480 = vmatprep.subr.mxu0 0.0
      %v2481 = vand.u32 %v1523, 4294901760
      %v2482 = vsub.f32 %v1523, %v2481
      %v2483 = vand.u32 %v2482, 4294901760
      %2484 = vmatpush1.msra.mxu0 %v2483
      %2485 = vmatprep.subr.mxu0 0.0
      %v2486 = vand.u32 %v1524, 4294901760
      %v2487 = vsub.f32 %v1524, %v2486
      %v2488 = vand.u32 %v2487, 4294901760
      %2489 = vmatpush1.msra.mxu0 %v2488
      %2490 = vmatprep.subr.mxu0 0.0
      %v2491 = vand.u32 %v1525, 4294901760
      %v2492 = vsub.f32 %v1525, %v2491
      %v2493 = vand.u32 %v2492, 4294901760
      %2494 = vmatpush1.msra.mxu0 %v2493
      %2495 = vmatprep.subr.mxu0 0.0
      %v2496 = vand.u32 %v1526, 4294901760
      %v2497 = vsub.f32 %v1526, %v2496
      %v2498 = vand.u32 %v2497, 4294901760
      %2499 = vmatpush1.msra.mxu0 %v2498
      %2500 = vmatprep.subr.mxu0 0.0
      %v2501 = vand.u32 %v1527, 4294901760
      %v2502 = vsub.f32 %v1527, %v2501
      %v2503 = vand.u32 %v2502, 4294901760
      %2504 = vmatpush1.msra.mxu0 %v2503
      %2505 = vmatprep.subr.mxu0 0.0
      %v2506 = vand.u32 %v1528, 4294901760
      %v2507 = vsub.f32 %v1528, %v2506
      %v2508 = vand.u32 %v2507, 4294901760
      %2509 = vmatpush1.msra.mxu0 %v2508
      %2510 = vmatprep.subr.mxu0 0.0
      %v2511 = vand.u32 %v1529, 4294901760
      %v2512 = vsub.f32 %v1529, %v2511
      %v2513 = vand.u32 %v2512, 4294901760
      %2514 = vmatpush1.msra.mxu0 %v2513
      %2515 = vmatprep.subr.mxu0 0.0
      %2516 = vmatpush1.msra.mxu0 0.0
      %2517 = vmatprep.subr.mxu0 0.0
      %2518 = vmatpush1.msra.mxu0 0.0
      %2519 = vmatprep.subr.mxu0 0.0
      %2520 = vmatpush1.msra.mxu0 0.0
      %2521 = vmatprep.subr.mxu0 0.0
      %2522 = vmatpush1.msra.mxu0 0.0
      %2523 = vmatprep.subr.mxu0 0.0
      %2524 = vmatpush1.msra.mxu0 0.0
      %2525 = vmatprep.subr.mxu0 0.0
      %2526 = vmatpush1.msra.mxu0 0.0
      %2527 = vmatprep.subr.mxu0 0.0
      %2528 = vmatpush1.msra.mxu0 0.0
      %2529 = vmatprep.subr.mxu0 0.0
      %2530 = vmatpush1.msra.mxu0 0.0
      %2531 = vmatprep.subr.mxu0 0.0
      %2532 = vmatpush1.msra.mxu0 0.0
      %2533 = vmatprep.subr.mxu0 0.0
      %2534 = vmatpush1.msra.mxu0 0.0
      %2535 = vmatprep.subr.mxu0 0.0
      %2536 = vmatpush1.msra.mxu0 0.0
      %2537 = vmatprep.subr.mxu0 0.0
      %2538 = vmatpush1.msra.mxu0 0.0
      %2539 = vmatprep.subr.mxu0 0.0
      %2540 = vmatpush1.msra.mxu0 0.0
      %2541 = vmatprep.subr.mxu0 0.0
      %2542 = vmatpush1.msra.mxu0 0.0
      %2543 = vmatprep.subr.mxu0 0.0
      %2544 = vmatpush1.msra.mxu0 0.0
      %2545 = vmatprep.subr.mxu0 0.0
      %2546 = vmatpush1.msra.mxu0 0.0
      %2547 = vmatprep.mubr.f32.mxu0 0.0
      %v2548 = vand.u32 %v1497, 4294901760
      %2549 = vmatmul.mubr.f32.gmra.mrb[0].mxu0 %v2548
      %v2550 = vpop.f32.mrb[0].mxu0
      %v2551 = vadd.f32 %v2312, %v2550
      %v2552 = vpop.f32.mrb[0].mxu0
      %2553 = vmatprep.mubr.f32.mxu0 0.0
      %v2554 = vand.u32 %v1498, 4294901760
      %2555 = vmatmul.mubr.f32.gmra.mrb[0].mxu0 %v2554
      %v2556 = vpop.f32.mrb[0].mxu0
      %v2557 = vadd.f32 %v2320, %v2556
      %v2558 = vpop.f32.mrb[0].mxu0
      %2559 = vmatprep.mubr.f32.mxu0 0.0
      %v2560 = vand.u32 %v1499, 4294901760
      %2561 = vmatmul.mubr.f32.gmra.mrb[0].mxu0 %v2560
      %v2562 = vpop.f32.mrb[0].mxu0
      %v2563 = vadd.f32 %v2328, %v2562
      %v2564 = vpop.f32.mrb[0].mxu0
      %2565 = vmatprep.mubr.f32.mxu0 0.0
      %v2566 = vand.u32 %v1500, 4294901760
      %2567 = vmatmul.mubr.f32.gmra.mrb[0].mxu0 %v2566
      %v2568 = vpop.f32.mrb[0].mxu0
      %v2569 = vadd.f32 %v2336, %v2568
      %v2570 = vpop.f32.mrb[0].mxu0
      %2571 = vmatprep.mubr.f32.mxu0 0.0
      %v2572 = vand.u32 %v1501, 4294901760
      %2573 = vmatmul.mubr.f32.gmra.mrb[0].mxu0 %v2572
      %v2574 = vpop.f32.mrb[0].mxu0
      %v2575 = vadd.f32 %v2344, %v2574
      %v2576 = vpop.f32.mrb[0].mxu0
      %2577 = vmatprep.mubr.f32.mxu0 0.0
      %v2578 = vand.u32 %v1502, 4294901760
      %2579 = vmatmul.mubr.f32.gmra.mrb[0].mxu0 %v2578
      %v2580 = vpop.f32.mrb[0].mxu0
      %v2581 = vadd.f32 %v2352, %v2580
      %v2582 = vpop.f32.mrb[0].mxu0
      %2583 = vmatprep.mubr.f32.mxu0 0.0
      %v2584 = vand.u32 %v1503, 4294901760
      %2585 = vmatmul.mubr.f32.gmra.mrb[0].mxu0 %v2584
      %v2586 = vpop.f32.mrb[0].mxu0
      %v2587 = vadd.f32 %v2360, %v2586
      %v2588 = vpop.f32.mrb[0].mxu0
      %2589 = vmatprep.mubr.f32.mxu0 0.0
      %v2590 = vand.u32 %v1504, 4294901760
      %2591 = vmatmul.mubr.f32.gmra.mrb[0].mxu0 %v2590
      %v2592 = vpop.f32.mrb[0].mxu0
      %v2593 = vadd.f32 %v2368, %v2592
      %v2594 = vpop.f32.mrb[0].mxu0
      %2595 = vmatprep.mubr.f32.mxu0 0.0
      %v2596 = vand.u32 %v1505, 4294901760
      %2597 = vmatmul.mubr.f32.gmra.mrb[0].mxu0 %v2596
      %v2598 = vpop.f32.mrb[0].mxu0
      %v2599 = vadd.f32 %v2376, %v2598
      %v2600 = vpop.f32.mrb[0].mxu0
      %2601 = vmatprep.mubr.f32.mxu0 0.0
      %v2602 = vand.u32 %v1506, 4294901760
      %2603 = vmatmul.mubr.f32.gmra.mrb[0].mxu0 %v2602
      %v2604 = vpop.f32.mrb[0].mxu0
      %v2605 = vadd.f32 %v2384, %v2604
      %v2606 = vpop.f32.mrb[0].mxu0
      %2607 = vmatprep.mubr.f32.mxu0 0.0
      %v2608 = vand.u32 %v1507, 4294901760
      %2609 = vmatmul.mubr.f32.gmra.mrb[0].mxu0 %v2608
      %v2610 = vpop.f32.mrb[0].mxu0
      %v2611 = vadd.f32 %v2392, %v2610
      %v2612 = vpop.f32.mrb[0].mxu0
      %2613 = vmatprep.mubr.f32.mxu0 0.0
      %v2614 = vand.u32 %v1508, 4294901760
      %2615 = vmatmul.mubr.f32.gmra.mrb[0].mxu0 %v2614
      %v2616 = vpop.f32.mrb[0].mxu0
      %v2617 = vadd.f32 %v2400, %v2616
      %v2618 = vpop.f32.mrb[0].mxu0
      %2619 = vmatprep.mubr.f32.mxu0 0.0
      %v2620 = vand.u32 %v1509, 4294901760
      %2621 = vmatmul.mubr.f32.gmra.mrb[0].mxu0 %v2620
      %v2622 = vpop.f32.mrb[0].mxu0
      %v2623 = vadd.f32 %v2408, %v2622
      %v2624 = vpop.f32.mrb[0].mxu0
      %2625 = vmatprep.mubr.f32.mxu0 0.0
      %v2626 = vand.u32 %v1510, 4294901760
      %2627 = vmatmul.mubr.f32.gmra.mrb[0].mxu0 %v2626
      %v2628 = vpop.f32.mrb[0].mxu0
      %v2629 = vadd.f32 %v2416, %v2628
      %v2630 = vpop.f32.mrb[0].mxu0
      %2631 = vmatprep.mubr.f32.mxu0 0.0
      %v2632 = vand.u32 %v1511, 4294901760
      %2633 = vmatmul.mubr.f32.gmra.mrb[0].mxu0 %v2632
      %v2634 = vpop.f32.mrb[0].mxu0
      %v2635 = vadd.f32 %v2424, %v2634
      %v2636 = vpop.f32.mrb[0].mxu0
      %2637 = vmatprep.mubr.f32.mxu0 0.0
      %v2638 = vand.u32 %v1512, 4294901760
      %2639 = vmatmul.mubr.f32.gmra.mrb[0].mxu0 %v2638
      %v2640 = vpop.f32.mrb[0].mxu0
      %v2641 = vadd.f32 %v2432, %v2640
      %v2642 = vpop.f32.mrb[0].mxu0
      %2643 = vdwg.mxu0
      %2644 = vmatprep.subr.mxu0 0.0
      %v2645 = vand.u32 %v1514, 4294901760
      %2646 = vmatpush1.msra.mxu0 %v2645
      %2647 = vmatprep.subr.mxu0 0.0
      %v2648 = vand.u32 %v1515, 4294901760
      %2649 = vmatpush1.msra.mxu0 %v2648
      %2650 = vmatprep.subr.mxu0 0.0
      %v2651 = vand.u32 %v1516, 4294901760
      %2652 = vmatpush1.msra.mxu0 %v2651
      %2653 = vmatprep.subr.mxu0 0.0
      %v2654 = vand.u32 %v1517, 4294901760
      %2655 = vmatpush1.msra.mxu0 %v2654
      %2656 = vmatprep.subr.mxu0 0.0
      %v2657 = vand.u32 %v1518, 4294901760
      %2658 = vmatpush1.msra.mxu0 %v2657
      %2659 = vmatprep.subr.mxu0 0.0
      %v2660 = vand.u32 %v1519, 4294901760
      %2661 = vmatpush1.msra.mxu0 %v2660
      %2662 = vmatprep.subr.mxu0 0.0
      %v2663 = vand.u32 %v1520, 4294901760
      %2664 = vmatpush1.msra.mxu0 %v2663
      %2665 = vmatprep.subr.mxu0 0.0
      %v2666 = vand.u32 %v1521, 4294901760
      %2667 = vmatpush1.msra.mxu0 %v2666
      %2668 = vmatprep.subr.mxu0 0.0
      %v2669 = vand.u32 %v1522, 4294901760
      %2670 = vmatpush1.msra.mxu0 %v2669
      %2671 = vmatprep.subr.mxu0 0.0
      %v2672 = vand.u32 %v1523, 4294901760
      %2673 = vmatpush1.msra.mxu0 %v2672
      %2674 = vmatprep.subr.mxu0 0.0
      %v2675 = vand.u32 %v1524, 4294901760
      %2676 = vmatpush1.msra.mxu0 %v2675
      %2677 = vmatprep.subr.mxu0 0.0
      %v2678 = vand.u32 %v1525, 4294901760
      %2679 = vmatpush1.msra.mxu0 %v2678
      %2680 = vmatprep.subr.mxu0 0.0
      %v2681 = vand.u32 %v1526, 4294901760
      %2682 = vmatpush1.msra.mxu0 %v2681
      %2683 = vmatprep.subr.mxu0 0.0
      %v2684 = vand.u32 %v1527, 4294901760
      %2685 = vmatpush1.msra.mxu0 %v2684
      %2686 = vmatprep.subr.mxu0 0.0
      %v2687 = vand.u32 %v1528, 4294901760
      %2688 = vmatpush1.msra.mxu0 %v2687
      %2689 = vmatprep.subr.mxu0 0.0
      %v2690 = vand.u32 %v1529, 4294901760
      %2691 = vmatpush1.msra.mxu0 %v2690
      %2692 = vmatprep.subr.mxu0 0.0
      %2693 = vmatpush1.msra.mxu0 0.0
      %2694 = vmatprep.subr.mxu0 0.0
      %2695 = vmatpush1.msra.mxu0 0.0
      %2696 = vmatprep.subr.mxu0 0.0
      %2697 = vmatpush1.msra.mxu0 0.0
      %2698 = vmatprep.subr.mxu0 0.0
      %2699 = vmatpush1.msra.mxu0 0.0
      %2700 = vmatprep.subr.mxu0 0.0
      %2701 = vmatpush1.msra.mxu0 0.0
      %2702 = vmatprep.subr.mxu0 0.0
      %2703 = vmatpush1.msra.mxu0 0.0
      %2704 = vmatprep.subr.mxu0 0.0
      %2705 = vmatpush1.msra.mxu0 0.0
      %2706 = vmatprep.subr.mxu0 0.0
      %2707 = vmatpush1.msra.mxu0 0.0
      %2708 = vmatprep.subr.mxu0 0.0
      %2709 = vmatpush1.msra.mxu0 0.0
      %2710 = vmatprep.subr.mxu0 0.0
      %2711 = vmatpush1.msra.mxu0 0.0
      %2712 = vmatprep.subr.mxu0 0.0
      %2713 = vmatpush1.msra.mxu0 0.0
      %2714 = vmatprep.subr.mxu0 0.0
      %2715 = vmatpush1.msra.mxu0 0.0
      %2716 = vmatprep.subr.mxu0 0.0
      %2717 = vmatpush1.msra.mxu0 0.0
      %2718 = vmatprep.subr.mxu0 0.0
      %2719 = vmatpush1.msra.mxu0 0.0
      %2720 = vmatprep.subr.mxu0 0.0
      %2721 = vmatpush1.msra.mxu0 0.0
      %2722 = vmatprep.subr.mxu0 0.0
      %2723 = vmatpush1.msra.mxu0 0.0
      %2724 = vmatprep.mubr.f32.mxu0 0.0
      %v2725 = vand.u32 %v1497, 4294901760
      %2726 = vmatmul.mubr.f32.gmra.mrb[0].mxu0 %v2725
      %v2727 = vpop.f32.mrb[0].mxu0
      %v2728 = vadd.f32 %v2551, %v2727
      %v2729 = vpop.f32.mrb[0].mxu0
      %2730 = vmatprep.mubr.f32.mxu0 0.0
      %v2731 = vand.u32 %v1498, 4294901760
      %2732 = vmatmul.mubr.f32.gmra.mrb[0].mxu0 %v2731
      %v2733 = vpop.f32.mrb[0].mxu0
      %v2734 = vadd.f32 %v2557, %v2733
      %v2735 = vpop.f32.mrb[0].mxu0
      %2736 = vmatprep.mubr.f32.mxu0 0.0
      %v2737 = vand.u32 %v1499, 4294901760
      %2738 = vmatmul.mubr.f32.gmra.mrb[0].mxu0 %v2737
      %v2739 = vpop.f32.mrb[0].mxu0
      %v2740 = vadd.f32 %v2563, %v2739
      %v2741 = vpop.f32.mrb[0].mxu0
      %2742 = vmatprep.mubr.f32.mxu0 0.0
      %v2743 = vand.u32 %v1500, 4294901760
      %2744 = vmatmul.mubr.f32.gmra.mrb[0].mxu0 %v2743
      %v2745 = vpop.f32.mrb[0].mxu0
      %v2746 = vadd.f32 %v2569, %v2745
      %v2747 = vpop.f32.mrb[0].mxu0
      %2748 = vmatprep.mubr.f32.mxu0 0.0
      %v2749 = vand.u32 %v1501, 4294901760
      %2750 = vmatmul.mubr.f32.gmra.mrb[0].mxu0 %v2749
      %v2751 = vpop.f32.mrb[0].mxu0
      %v2752 = vadd.f32 %v2575, %v2751
      %v2753 = vpop.f32.mrb[0].mxu0
      %2754 = vmatprep.mubr.f32.mxu0 0.0
      %v2755 = vand.u32 %v1502, 4294901760
      %2756 = vmatmul.mubr.f32.gmra.mrb[0].mxu0 %v2755
      %v2757 = vpop.f32.mrb[0].mxu0
      %v2758 = vadd.f32 %v2581, %v2757
      %v2759 = vpop.f32.mrb[0].mxu0
      %2760 = vmatprep.mubr.f32.mxu0 0.0
      %v2761 = vand.u32 %v1503, 4294901760
      %2762 = vmatmul.mubr.f32.gmra.mrb[0].mxu0 %v2761
      %v2763 = vpop.f32.mrb[0].mxu0
      %v2764 = vadd.f32 %v2587, %v2763
      %v2765 = vpop.f32.mrb[0].mxu0
      %2766 = vmatprep.mubr.f32.mxu0 0.0
      %v2767 = vand.u32 %v1504, 4294901760
      %2768 = vmatmul.mubr.f32.gmra.mrb[0].mxu0 %v2767
      %v2769 = vpop.f32.mrb[0].mxu0
      %v2770 = vadd.f32 %v2593, %v2769
      %v2771 = vpop.f32.mrb[0].mxu0
      %2772 = vmatprep.mubr.f32.mxu0 0.0
      %v2773 = vand.u32 %v1505, 4294901760
      %2774 = vmatmul.mubr.f32.gmra.mrb[0].mxu0 %v2773
      %v2775 = vpop.f32.mrb[0].mxu0
      %v2776 = vadd.f32 %v2599, %v2775
      %v2777 = vpop.f32.mrb[0].mxu0
      %2778 = vmatprep.mubr.f32.mxu0 0.0
      %v2779 = vand.u32 %v1506, 4294901760
      %2780 = vmatmul.mubr.f32.gmra.mrb[0].mxu0 %v2779
      %v2781 = vpop.f32.mrb[0].mxu0
      %v2782 = vadd.f32 %v2605, %v2781
      %v2783 = vpop.f32.mrb[0].mxu0
      %2784 = vmatprep.mubr.f32.mxu0 0.0
      %v2785 = vand.u32 %v1507, 4294901760
      %2786 = vmatmul.mubr.f32.gmra.mrb[0].mxu0 %v2785
      %v2787 = vpop.f32.mrb[0].mxu0
      %v2788 = vadd.f32 %v2611, %v2787
      %v2789 = vpop.f32.mrb[0].mxu0
      %2790 = vmatprep.mubr.f32.mxu0 0.0
      %v2791 = vand.u32 %v1508, 4294901760
      %2792 = vmatmul.mubr.f32.gmra.mrb[0].mxu0 %v2791
      %v2793 = vpop.f32.mrb[0].mxu0
      %v2794 = vadd.f32 %v2617, %v2793
      %v2795 = vpop.f32.mrb[0].mxu0
      %2796 = vmatprep.mubr.f32.mxu0 0.0
      %v2797 = vand.u32 %v1509, 4294901760
      %2798 = vmatmul.mubr.f32.gmra.mrb[0].mxu0 %v2797
      %v2799 = vpop.f32.mrb[0].mxu0
      %v2800 = vadd.f32 %v2623, %v2799
      %v2801 = vpop.f32.mrb[0].mxu0
      %2802 = vmatprep.mubr.f32.mxu0 0.0
      %v2803 = vand.u32 %v1510, 4294901760
      %2804 = vmatmul.mubr.f32.gmra.mrb[0].mxu0 %v2803
      %v2805 = vpop.f32.mrb[0].mxu0
      %v2806 = vadd.f32 %v2629, %v2805
      %v2807 = vpop.f32.mrb[0].mxu0
      %2808 = vmatprep.mubr.f32.mxu0 0.0
      %v2809 = vand.u32 %v1511, 4294901760
      %2810 = vmatmul.mubr.f32.gmra.mrb[0].mxu0 %v2809
      %v2811 = vpop.f32.mrb[0].mxu0
      %v2812 = vadd.f32 %v2635, %v2811
      %v2813 = vpop.f32.mrb[0].mxu0
      %2814 = vmatprep.mubr.f32.mxu0 0.0
      %v2815 = vand.u32 %v1512, 4294901760
      %2816 = vmatmul.mubr.f32.gmra.mrb[0].mxu0 %v2815
      %v2817 = vpop.f32.mrb[0].mxu0
      %v2818 = vadd.f32 %v2641, %v2817
      %v2819 = vpop.f32.mrb[0].mxu0
      %2820 = vdwg.mxu0
      %v2821 = vmax.f32 %v2728, 0.0
      %v2822 = vmax.f32 %v2734, 0.0
      %v2823 = vmax.f32 %v2740, 0.0
      %v2824 = vmax.f32 %v2746, 0.0
      %v2825 = vmax.f32 %v2752, 0.0
      %v2826 = vmax.f32 %v2758, 0.0
      %v2827 = vmax.f32 %v2764, 0.0
      %v2828 = vmax.f32 %v2770, 0.0
      %v2829 = vmax.f32 %v2776, 0.0
      %v2830 = vmax.f32 %v2782, 0.0
      %v2831 = vmax.f32 %v2788, 0.0
      %v2832 = vmax.f32 %v2794, 0.0
      %v2833 = vmax.f32 %v2800, 0.0
      %v2834 = vmax.f32 %v2806, 0.0
      %v2835 = vmax.f32 %v2812, 0.0
      %v2836 = vmax.f32 %v2818, 0.0
      %s2837 = scalar_lea.vmem %s1, 256
      %v2838 = vld [vmem:[%s2837] sm:$0xff]
      %v2839 = vld [vmem:[%s2837 + $0x8] sm:$0xff]
      %v2840 = vld [vmem:[%s2837 + $0x10] sm:$0xff]
      %v2841 = vld [vmem:[%s2837 + $0x18] sm:$0xff]
      %v2842 = vld [vmem:[%s2837 + $0x20] sm:$0xff]
      %v2843 = vld [vmem:[%s2837 + $0x28] sm:$0xff]
      %v2844 = vld [vmem:[%s2837 + $0x30] sm:$0xff]
      %v2845 = vld [vmem:[%s2837 + $0x38] sm:$0xff]
      %v2846 = vld [vmem:[%s2837 + $0x40] sm:$0xff]
      %v2847 = vld [vmem:[%s2837 + $0x48] sm:$0xff]
      %v2848 = vld [vmem:[%s2837 + $0x50] sm:$0xff]
      %v2849 = vld [vmem:[%s2837 + $0x58] sm:$0xff]
      %v2850 = vld [vmem:[%s2837 + $0x60] sm:$0xff]
      %v2851 = vld [vmem:[%s2837 + $0x68] sm:$0xff]
      %v2852 = vld [vmem:[%s2837 + $0x70] sm:$0xff]
      %v2853 = vld [vmem:[%s2837 + $0x78] sm:$0xff]
      %v2854 = vld [vmem:[%s2 + $0x2] sm:$0x1]
      %v2855 = vlaneseq
      %v2856 = vshrl.u32 %v2855, 7
      %v2857 = vsub.s32 0, %v2856
      %v2858 = vrot.slane %v2854, %v2857
      %2859 = vmatprep.subr.mxu0 0.0
      %v2860 = vand.u32 %v2838, 4294901760
      %2861 = vmatpush1.msra.mxu0 %v2860
      %2862 = vmatprep.subr.mxu0 0.0
      %v2863 = vand.u32 %v2839, 4294901760
      %2864 = vmatpush1.msra.mxu0 %v2863
      %2865 = vmatprep.subr.mxu0 0.0
      %v2866 = vand.u32 %v2840, 4294901760
      %2867 = vmatpush1.msra.mxu0 %v2866
      %2868 = vmatprep.subr.mxu0 0.0
      %v2869 = vand.u32 %v2841, 4294901760
      %2870 = vmatpush1.msra.mxu0 %v2869
      %2871 = vmatprep.subr.mxu0 0.0
      %v2872 = vand.u32 %v2842, 4294901760
      %2873 = vmatpush1.msra.mxu0 %v2872
      %2874 = vmatprep.subr.mxu0 0.0
      %v2875 = vand.u32 %v2843, 4294901760
      %2876 = vmatpush1.msra.mxu0 %v2875
      %2877 = vmatprep.subr.mxu0 0.0
      %v2878 = vand.u32 %v2844, 4294901760
      %2879 = vmatpush1.msra.mxu0 %v2878
      %2880 = vmatprep.subr.mxu0 0.0
      %v2881 = vand.u32 %v2845, 4294901760
      %2882 = vmatpush1.msra.mxu0 %v2881
      %2883 = vmatprep.subr.mxu0 0.0
      %v2884 = vand.u32 %v2846, 4294901760
      %2885 = vmatpush1.msra.mxu0 %v2884
      %2886 = vmatprep.subr.mxu0 0.0
      %v2887 = vand.u32 %v2847, 4294901760
      %2888 = vmatpush1.msra.mxu0 %v2887
      %2889 = vmatprep.subr.mxu0 0.0
      %v2890 = vand.u32 %v2848, 4294901760
      %2891 = vmatpush1.msra.mxu0 %v2890
      %2892 = vmatprep.subr.mxu0 0.0
      %v2893 = vand.u32 %v2849, 4294901760
      %2894 = vmatpush1.msra.mxu0 %v2893
      %2895 = vmatprep.subr.mxu0 0.0
      %v2896 = vand.u32 %v2850, 4294901760
      %2897 = vmatpush1.msra.mxu0 %v2896
      %2898 = vmatprep.subr.mxu0 0.0
      %v2899 = vand.u32 %v2851, 4294901760
      %2900 = vmatpush1.msra.mxu0 %v2899
      %2901 = vmatprep.subr.mxu0 0.0
      %v2902 = vand.u32 %v2852, 4294901760
      %2903 = vmatpush1.msra.mxu0 %v2902
      %2904 = vmatprep.subr.mxu0 0.0
      %v2905 = vand.u32 %v2853, 4294901760
      %2906 = vmatpush1.msra.mxu0 %v2905
      %2907 = vmatprep.subr.mxu0 0.0
      %2908 = vmatpush1.msra.mxu0 0.0
      %2909 = vmatprep.subr.mxu0 0.0
      %2910 = vmatpush1.msra.mxu0 0.0
      %2911 = vmatprep.subr.mxu0 0.0
      %2912 = vmatpush1.msra.mxu0 0.0
      %2913 = vmatprep.subr.mxu0 0.0
      %2914 = vmatpush1.msra.mxu0 0.0
      %2915 = vmatprep.subr.mxu0 0.0
      %2916 = vmatpush1.msra.mxu0 0.0
      %2917 = vmatprep.subr.mxu0 0.0
      %2918 = vmatpush1.msra.mxu0 0.0
      %2919 = vmatprep.subr.mxu0 0.0
      %2920 = vmatpush1.msra.mxu0 0.0
      %2921 = vmatprep.subr.mxu0 0.0
      %2922 = vmatpush1.msra.mxu0 0.0
      %2923 = vmatprep.subr.mxu0 0.0
      %2924 = vmatpush1.msra.mxu0 0.0
      %2925 = vmatprep.subr.mxu0 0.0
      %2926 = vmatpush1.msra.mxu0 0.0
      %2927 = vmatprep.subr.mxu0 0.0
      %2928 = vmatpush1.msra.mxu0 0.0
      %2929 = vmatprep.subr.mxu0 0.0
      %2930 = vmatpush1.msra.mxu0 0.0
      %2931 = vmatprep.subr.mxu0 0.0
      %2932 = vmatpush1.msra.mxu0 0.0
      %2933 = vmatprep.subr.mxu0 0.0
      %2934 = vmatpush1.msra.mxu0 0.0
      %2935 = vmatprep.subr.mxu0 0.0
      %2936 = vmatpush1.msra.mxu0 0.0
      %2937 = vmatprep.subr.mxu0 0.0
      %2938 = vmatpush1.msra.mxu0 0.0
      %2939 = vmatprep.mubr.f32.mxu0 0.0
      %v2940 = vand.u32 %v2821, 4294901760
      %v2941 = vsub.f32 %v2821, %v2940
      %v2942 = vand.u32 %v2941, 4294901760
      %v2943 = vsub.f32 %v2941, %v2942
      %v2944 = vand.u32 %v2943, 4294901760
      %2945 = vmatmul.mubr.f32.gmra.mrb[0].mxu0 %v2944
      %v2946 = vpop.f32.mrb[0].mxu0
      %v2947 = vadd.f32 %v2858, %v2946
      %v2948 = vpop.f32.mrb[0].mxu0
      %2949 = vmatprep.mubr.f32.mxu0 0.0
      %v2950 = vand.u32 %v2822, 4294901760
      %v2951 = vsub.f32 %v2822, %v2950
      %v2952 = vand.u32 %v2951, 4294901760
      %v2953 = vsub.f32 %v2951, %v2952
      %v2954 = vand.u32 %v2953, 4294901760
      %2955 = vmatmul.mubr.f32.gmra.mrb[0].mxu0 %v2954
      %v2956 = vpop.f32.mrb[0].mxu0
      %v2957 = vadd.f32 %v2858, %v2956
      %v2958 = vpop.f32.mrb[0].mxu0
      %2959 = vmatprep.mubr.f32.mxu0 0.0
      %v2960 = vand.u32 %v2823, 4294901760
      %v2961 = vsub.f32 %v2823, %v2960
      %v2962 = vand.u32 %v2961, 4294901760
      %v2963 = vsub.f32 %v2961, %v2962
      %v2964 = vand.u32 %v2963, 4294901760
      %2965 = vmatmul.mubr.f32.gmra.mrb[0].mxu0 %v2964
      %v2966 = vpop.f32.mrb[0].mxu0
      %v2967 = vadd.f32 %v2858, %v2966
      %v2968 = vpop.f32.mrb[0].mxu0
      %2969 = vmatprep.mubr.f32.mxu0 0.0
      %v2970 = vand.u32 %v2824, 4294901760
      %v2971 = vsub.f32 %v2824, %v2970
      %v2972 = vand.u32 %v2971, 4294901760
      %v2973 = vsub.f32 %v2971, %v2972
      %v2974 = vand.u32 %v2973, 4294901760
      %2975 = vmatmul.mubr.f32.gmra.mrb[0].mxu0 %v2974
      %v2976 = vpop.f32.mrb[0].mxu0
      %v2977 = vadd.f32 %v2858, %v2976
      %v2978 = vpop.f32.mrb[0].mxu0
      %2979 = vmatprep.mubr.f32.mxu0 0.0
      %v2980 = vand.u32 %v2825, 4294901760
      %v2981 = vsub.f32 %v2825, %v2980
      %v2982 = vand.u32 %v2981, 4294901760
      %v2983 = vsub.f32 %v2981, %v2982
      %v2984 = vand.u32 %v2983, 4294901760
      %2985 = vmatmul.mubr.f32.gmra.mrb[0].mxu0 %v2984
      %v2986 = vpop.f32.mrb[0].mxu0
      %v2987 = vadd.f32 %v2858, %v2986
      %v2988 = vpop.f32.mrb[0].mxu0
      %2989 = vmatprep.mubr.f32.mxu0 0.0
      %v2990 = vand.u32 %v2826, 4294901760
      %v2991 = vsub.f32 %v2826, %v2990
      %v2992 = vand.u32 %v2991, 4294901760
      %v2993 = vsub.f32 %v2991, %v2992
      %v2994 = vand.u32 %v2993, 4294901760
      %2995 = vmatmul.mubr.f32.gmra.mrb[0].mxu0 %v2994
      %v2996 = vpop.f32.mrb[0].mxu0
      %v2997 = vadd.f32 %v2858, %v2996
      %v2998 = vpop.f32.mrb[0].mxu0
      %2999 = vmatprep.mubr.f32.mxu0 0.0
      %v3000 = vand.u32 %v2827, 4294901760
      %v3001 = vsub.f32 %v2827, %v3000
      %v3002 = vand.u32 %v3001, 4294901760
      %v3003 = vsub.f32 %v3001, %v3002
      %v3004 = vand.u32 %v3003, 4294901760
      %3005 = vmatmul.mubr.f32.gmra.mrb[0].mxu0 %v3004
      %v3006 = vpop.f32.mrb[0].mxu0
      %v3007 = vadd.f32 %v2858, %v3006
      %v3008 = vpop.f32.mrb[0].mxu0
      %3009 = vmatprep.mubr.f32.mxu0 0.0
      %v3010 = vand.u32 %v2828, 4294901760
      %v3011 = vsub.f32 %v2828, %v3010
      %v3012 = vand.u32 %v3011, 4294901760
      %v3013 = vsub.f32 %v3011, %v3012
      %v3014 = vand.u32 %v3013, 4294901760
      %3015 = vmatmul.mubr.f32.gmra.mrb[0].mxu0 %v3014
      %v3016 = vpop.f32.mrb[0].mxu0
      %v3017 = vadd.f32 %v2858, %v3016
      %v3018 = vpop.f32.mrb[0].mxu0
      %3019 = vmatprep.mubr.f32.mxu0 0.0
      %v3020 = vand.u32 %v2829, 4294901760
      %v3021 = vsub.f32 %v2829, %v3020
      %v3022 = vand.u32 %v3021, 4294901760
      %v3023 = vsub.f32 %v3021, %v3022
      %v3024 = vand.u32 %v3023, 4294901760
      %3025 = vmatmul.mubr.f32.gmra.mrb[0].mxu0 %v3024
      %v3026 = vpop.f32.mrb[0].mxu0
      %v3027 = vadd.f32 %v2858, %v3026
      %v3028 = vpop.f32.mrb[0].mxu0
      %3029 = vmatprep.mubr.f32.mxu0 0.0
      %v3030 = vand.u32 %v2830, 4294901760
      %v3031 = vsub.f32 %v2830, %v3030
      %v3032 = vand.u32 %v3031, 4294901760
      %v3033 = vsub.f32 %v3031, %v3032
      %v3034 = vand.u32 %v3033, 4294901760
      %3035 = vmatmul.mubr.f32.gmra.mrb[0].mxu0 %v3034
      %v3036 = vpop.f32.mrb[0].mxu0
      %v3037 = vadd.f32 %v2858, %v3036
      %v3038 = vpop.f32.mrb[0].mxu0
      %3039 = vmatprep.mubr.f32.mxu0 0.0
      %v3040 = vand.u32 %v2831, 4294901760
      %v3041 = vsub.f32 %v2831, %v3040
      %v3042 = vand.u32 %v3041, 4294901760
      %v3043 = vsub.f32 %v3041, %v3042
      %v3044 = vand.u32 %v3043, 4294901760
      %3045 = vmatmul.mubr.f32.gmra.mrb[0].mxu0 %v3044
      %v3046 = vpop.f32.mrb[0].mxu0
      %v3047 = vadd.f32 %v2858, %v3046
      %v3048 = vpop.f32.mrb[0].mxu0
      %3049 = vmatprep.mubr.f32.mxu0 0.0
      %v3050 = vand.u32 %v2832, 4294901760
      %v3051 = vsub.f32 %v2832, %v3050
      %v3052 = vand.u32 %v3051, 4294901760
      %v3053 = vsub.f32 %v3051, %v3052
      %v3054 = vand.u32 %v3053, 4294901760
      %3055 = vmatmul.mubr.f32.gmra.mrb[0].mxu0 %v3054
      %v3056 = vpop.f32.mrb[0].mxu0
      %v3057 = vadd.f32 %v2858, %v3056
      %v3058 = vpop.f32.mrb[0].mxu0
      %3059 = vmatprep.mubr.f32.mxu0 0.0
      %v3060 = vand.u32 %v2833, 4294901760
      %v3061 = vsub.f32 %v2833, %v3060
      %v3062 = vand.u32 %v3061, 4294901760
      %v3063 = vsub.f32 %v3061, %v3062
      %v3064 = vand.u32 %v3063, 4294901760
      %3065 = vmatmul.mubr.f32.gmra.mrb[0].mxu0 %v3064
      %v3066 = vpop.f32.mrb[0].mxu0
      %v3067 = vadd.f32 %v2858, %v3066
      %v3068 = vpop.f32.mrb[0].mxu0
      %3069 = vmatprep.mubr.f32.mxu0 0.0
      %v3070 = vand.u32 %v2834, 4294901760
      %v3071 = vsub.f32 %v2834, %v3070
      %v3072 = vand.u32 %v3071, 4294901760
      %v3073 = vsub.f32 %v3071, %v3072
      %v3074 = vand.u32 %v3073, 4294901760
      %3075 = vmatmul.mubr.f32.gmra.mrb[0].mxu0 %v3074
      %v3076 = vpop.f32.mrb[0].mxu0
      %v3077 = vadd.f32 %v2858, %v3076
      %v3078 = vpop.f32.mrb[0].mxu0
      %3079 = vmatprep.mubr.f32.mxu0 0.0
      %v3080 = vand.u32 %v2835, 4294901760
      %v3081 = vsub.f32 %v2835, %v3080
      %v3082 = vand.u32 %v3081, 4294901760
      %v3083 = vsub.f32 %v3081, %v3082
      %v3084 = vand.u32 %v3083, 4294901760
      %3085 = vmatmul.mubr.f32.gmra.mrb[0].mxu0 %v3084
      %v3086 = vpop.f32.mrb[0].mxu0
      %v3087 = vadd.f32 %v2858, %v3086
      %v3088 = vpop.f32.mrb[0].mxu0
      %3089 = vmatprep.mubr.f32.mxu0 0.0
      %v3090 = vand.u32 %v2836, 4294901760
      %v3091 = vsub.f32 %v2836, %v3090
      %v3092 = vand.u32 %v3091, 4294901760
      %v3093 = vsub.f32 %v3091, %v3092
      %v3094 = vand.u32 %v3093, 4294901760
      %3095 = vmatmul.mubr.f32.gmra.mrb[0].mxu0 %v3094
      %v3096 = vpop.f32.mrb[0].mxu0
      %v3097 = vadd.f32 %v2858, %v3096
      %v3098 = vpop.f32.mrb[0].mxu0
      %3099 = vdwg.mxu0
      %3100 = vmatprep.subr.mxu0 0.0
      %v3101 = vand.u32 %v2838, 4294901760
      %v3102 = vsub.f32 %v2838, %v3101
      %v3103 = vand.u32 %v3102, 4294901760
      %v3104 = vsub.f32 %v3102, %v3103
      %v3105 = vand.u32 %v3104, 4294901760
      %3106 = vmatpush1.msra.mxu0 %v3105
      %3107 = vmatprep.subr.mxu0 0.0
      %v3108 = vand.u32 %v2839, 4294901760
      %v3109 = vsub.f32 %v2839, %v3108
      %v3110 = vand.u32 %v3109, 4294901760
      %v3111 = vsub.f32 %v3109, %v3110
      %v3112 = vand.u32 %v3111, 4294901760
      %3113 = vmatpush1.msra.mxu0 %v3112
      %3114 = vmatprep.subr.mxu0 0.0
      %v3115 = vand.u32 %v2840, 4294901760
      %v3116 = vsub.f32 %v2840, %v3115
      %v3117 = vand.u32 %v3116, 4294901760
      %v3118 = vsub.f32 %v3116, %v3117
      %v3119 = vand.u32 %v3118, 4294901760
      %3120 = vmatpush1.msra.mxu0 %v3119
      %3121 = vmatprep.subr.mxu0 0.0
      %v3122 = vand.u32 %v2841, 4294901760
      %v3123 = vsub.f32 %v2841, %v3122
      %v3124 = vand.u32 %v3123, 4294901760
      %v3125 = vsub.f32 %v3123, %v3124
      %v3126 = vand.u32 %v3125, 4294901760
      %3127 = vmatpush1.msra.mxu0 %v3126
      %3128 = vmatprep.subr.mxu0 0.0
      %v3129 = vand.u32 %v2842, 4294901760
      %v3130 = vsub.f32 %v2842, %v3129
      %v3131 = vand.u32 %v3130, 4294901760
      %v3132 = vsub.f32 %v3130, %v3131
      %v3133 = vand.u32 %v3132, 4294901760
      %3134 = vmatpush1.msra.mxu0 %v3133
      %3135 = vmatprep.subr.mxu0 0.0
      %v3136 = vand.u32 %v2843, 4294901760
      %v3137 = vsub.f32 %v2843, %v3136
      %v3138 = vand.u32 %v3137, 4294901760
      %v3139 = vsub.f32 %v3137, %v3138
      %v3140 = vand.u32 %v3139, 4294901760
      %3141 = vmatpush1.msra.mxu0 %v3140
      %3142 = vmatprep.subr.mxu0 0.0
      %v3143 = vand.u32 %v2844, 4294901760
      %v3144 = vsub.f32 %v2844, %v3143
      %v3145 = vand.u32 %v3144, 4294901760
      %v3146 = vsub.f32 %v3144, %v3145
      %v3147 = vand.u32 %v3146, 4294901760
      %3148 = vmatpush1.msra.mxu0 %v3147
      %3149 = vmatprep.subr.mxu0 0.0
      %v3150 = vand.u32 %v2845, 4294901760
      %v3151 = vsub.f32 %v2845, %v3150
      %v3152 = vand.u32 %v3151, 4294901760
      %v3153 = vsub.f32 %v3151, %v3152
      %v3154 = vand.u32 %v3153, 4294901760
      %3155 = vmatpush1.msra.mxu0 %v3154
      %3156 = vmatprep.subr.mxu0 0.0
      %v3157 = vand.u32 %v2846, 4294901760
      %v3158 = vsub.f32 %v2846, %v3157
      %v3159 = vand.u32 %v3158, 4294901760
      %v3160 = vsub.f32 %v3158, %v3159
      %v3161 = vand.u32 %v3160, 4294901760
      %3162 = vmatpush1.msra.mxu0 %v3161
      %3163 = vmatprep.subr.mxu0 0.0
      %v3164 = vand.u32 %v2847, 4294901760
      %v3165 = vsub.f32 %v2847, %v3164
      %v3166 = vand.u32 %v3165, 4294901760
      %v3167 = vsub.f32 %v3165, %v3166
      %v3168 = vand.u32 %v3167, 4294901760
      %3169 = vmatpush1.msra.mxu0 %v3168
      %3170 = vmatprep.subr.mxu0 0.0
      %v3171 = vand.u32 %v2848, 4294901760
      %v3172 = vsub.f32 %v2848, %v3171
      %v3173 = vand.u32 %v3172, 4294901760
      %v3174 = vsub.f32 %v3172, %v3173
      %v3175 = vand.u32 %v3174, 4294901760
      %3176 = vmatpush1.msra.mxu0 %v3175
      %3177 = vmatprep.subr.mxu0 0.0
      %v3178 = vand.u32 %v2849, 4294901760
      %v3179 = vsub.f32 %v2849, %v3178
      %v3180 = vand.u32 %v3179, 4294901760
      %v3181 = vsub.f32 %v3179, %v3180
      %v3182 = vand.u32 %v3181, 4294901760
      %3183 = vmatpush1.msra.mxu0 %v3182
      %3184 = vmatprep.subr.mxu0 0.0
      %v3185 = vand.u32 %v2850, 4294901760
      %v3186 = vsub.f32 %v2850, %v3185
      %v3187 = vand.u32 %v3186, 4294901760
      %v3188 = vsub.f32 %v3186, %v3187
      %v3189 = vand.u32 %v3188, 4294901760
      %3190 = vmatpush1.msra.mxu0 %v3189
      %3191 = vmatprep.subr.mxu0 0.0
      %v3192 = vand.u32 %v2851, 4294901760
      %v3193 = vsub.f32 %v2851, %v3192
      %v3194 = vand.u32 %v3193, 4294901760
      %v3195 = vsub.f32 %v3193, %v3194
      %v3196 = vand.u32 %v3195, 4294901760
      %3197 = vmatpush1.msra.mxu0 %v3196
      %3198 = vmatprep.subr.mxu0 0.0
      %v3199 = vand.u32 %v2852, 4294901760
      %v3200 = vsub.f32 %v2852, %v3199
      %v3201 = vand.u32 %v3200, 4294901760
      %v3202 = vsub.f32 %v3200, %v3201
      %v3203 = vand.u32 %v3202, 4294901760
      %3204 = vmatpush1.msra.mxu0 %v3203
      %3205 = vmatprep.subr.mxu0 0.0
      %v3206 = vand.u32 %v2853, 4294901760
      %v3207 = vsub.f32 %v2853, %v3206
      %v3208 = vand.u32 %v3207, 4294901760
      %v3209 = vsub.f32 %v3207, %v3208
      %v3210 = vand.u32 %v3209, 4294901760
      %3211 = vmatpush1.msra.mxu0 %v3210
      %3212 = vmatprep.subr.mxu0 0.0
      %3213 = vmatpush1.msra.mxu0 0.0
      %3214 = vmatprep.subr.mxu0 0.0
      %3215 = vmatpush1.msra.mxu0 0.0
      %3216 = vmatprep.subr.mxu0 0.0
      %3217 = vmatpush1.msra.mxu0 0.0
      %3218 = vmatprep.subr.mxu0 0.0
      %3219 = vmatpush1.msra.mxu0 0.0
      %3220 = vmatprep.subr.mxu0 0.0
      %3221 = vmatpush1.msra.mxu0 0.0
      %3222 = vmatprep.subr.mxu0 0.0
      %3223 = vmatpush1.msra.mxu0 0.0
      %3224 = vmatprep.subr.mxu0 0.0
      %3225 = vmatpush1.msra.mxu0 0.0
      %3226 = vmatprep.subr.mxu0 0.0
      %3227 = vmatpush1.msra.mxu0 0.0
      %3228 = vmatprep.subr.mxu0 0.0
      %3229 = vmatpush1.msra.mxu0 0.0
      %3230 = vmatprep.subr.mxu0 0.0
      %3231 = vmatpush1.msra.mxu0 0.0
      %3232 = vmatprep.subr.mxu0 0.0
      %3233 = vmatpush1.msra.mxu0 0.0
      %3234 = vmatprep.subr.mxu0 0.0
      %3235 = vmatpush1.msra.mxu0 0.0
      %3236 = vmatprep.subr.mxu0 0.0
      %3237 = vmatpush1.msra.mxu0 0.0
      %3238 = vmatprep.subr.mxu0 0.0
      %3239 = vmatpush1.msra.mxu0 0.0
      %3240 = vmatprep.subr.mxu0 0.0
      %3241 = vmatpush1.msra.mxu0 0.0
      %3242 = vmatprep.subr.mxu0 0.0
      %3243 = vmatpush1.msra.mxu0 0.0
      %3244 = vmatprep.mubr.f32.mxu0 0.0
      %v3245 = vand.u32 %v2821, 4294901760
      %3246 = vmatmul.mubr.f32.gmra.mrb[0].mxu0 %v3245
      %v3247 = vpop.f32.mrb[0].mxu0
      %v3248 = vadd.f32 %v2947, %v3247
      %v3249 = vpop.f32.mrb[0].mxu0
      %3250 = vmatprep.mubr.f32.mxu0 0.0
      %v3251 = vand.u32 %v2822, 4294901760
      %3252 = vmatmul.mubr.f32.gmra.mrb[0].mxu0 %v3251
      %v3253 = vpop.f32.mrb[0].mxu0
      %v3254 = vadd.f32 %v2957, %v3253
      %v3255 = vpop.f32.mrb[0].mxu0
      %3256 = vmatprep.mubr.f32.mxu0 0.0
      %v3257 = vand.u32 %v2823, 4294901760
      %3258 = vmatmul.mubr.f32.gmra.mrb[0].mxu0 %v3257
      %v3259 = vpop.f32.mrb[0].mxu0
      %v3260 = vadd.f32 %v2967, %v3259
      %v3261 = vpop.f32.mrb[0].mxu0
      %3262 = vmatprep.mubr.f32.mxu0 0.0
      %v3263 = vand.u32 %v2824, 4294901760
      %3264 = vmatmul.mubr.f32.gmra.mrb[0].mxu0 %v3263
      %v3265 = vpop.f32.mrb[0].mxu0
      %v3266 = vadd.f32 %v2977, %v3265
      %v3267 = vpop.f32.mrb[0].mxu0
      %3268 = vmatprep.mubr.f32.mxu0 0.0
      %v3269 = vand.u32 %v2825, 4294901760
      %3270 = vmatmul.mubr.f32.gmra.mrb[0].mxu0 %v3269
      %v3271 = vpop.f32.mrb[0].mxu0
      %v3272 = vadd.f32 %v2987, %v3271
      %v3273 = vpop.f32.mrb[0].mxu0
      %3274 = vmatprep.mubr.f32.mxu0 0.0
      %v3275 = vand.u32 %v2826, 4294901760
      %3276 = vmatmul.mubr.f32.gmra.mrb[0].mxu0 %v3275
      %v3277 = vpop.f32.mrb[0].mxu0
      %v3278 = vadd.f32 %v2997, %v3277
      %v3279 = vpop.f32.mrb[0].mxu0
      %3280 = vmatprep.mubr.f32.mxu0 0.0
      %v3281 = vand.u32 %v2827, 4294901760
      %3282 = vmatmul.mubr.f32.gmra.mrb[0].mxu0 %v3281
      %v3283 = vpop.f32.mrb[0].mxu0
      %v3284 = vadd.f32 %v3007, %v3283
      %v3285 = vpop.f32.mrb[0].mxu0
      %3286 = vmatprep.mubr.f32.mxu0 0.0
      %v3287 = vand.u32 %v2828, 4294901760
      %3288 = vmatmul.mubr.f32.gmra.mrb[0].mxu0 %v3287
      %v3289 = vpop.f32.mrb[0].mxu0
      %v3290 = vadd.f32 %v3017, %v3289
      %v3291 = vpop.f32.mrb[0].mxu0
      %3292 = vmatprep.mubr.f32.mxu0 0.0
      %v3293 = vand.u32 %v2829, 4294901760
      %3294 = vmatmul.mubr.f32.gmra.mrb[0].mxu0 %v3293
      %v3295 = vpop.f32.mrb[0].mxu0
      %v3296 = vadd.f32 %v3027, %v3295
      %v3297 = vpop.f32.mrb[0].mxu0
      %3298 = vmatprep.mubr.f32.mxu0 0.0
      %v3299 = vand.u32 %v2830, 4294901760
      %3300 = vmatmul.mubr.f32.gmra.mrb[0].mxu0 %v3299
      %v3301 = vpop.f32.mrb[0].mxu0
      %v3302 = vadd.f32 %v3037, %v3301
      %v3303 = vpop.f32.mrb[0].mxu0
      %3304 = vmatprep.mubr.f32.mxu0 0.0
      %v3305 = vand.u32 %v2831, 4294901760
      %3306 = vmatmul.mubr.f32.gmra.mrb[0].mxu0 %v3305
      %v3307 = vpop.f32.mrb[0].mxu0
      %v3308 = vadd.f32 %v3047, %v3307
      %v3309 = vpop.f32.mrb[0].mxu0
      %3310 = vmatprep.mubr.f32.mxu0 0.0
      %v3311 = vand.u32 %v2832, 4294901760
      %3312 = vmatmul.mubr.f32.gmra.mrb[0].mxu0 %v3311
      %v3313 = vpop.f32.mrb[0].mxu0
      %v3314 = vadd.f32 %v3057, %v3313
      %v3315 = vpop.f32.mrb[0].mxu0
      %3316 = vmatprep.mubr.f32.mxu0 0.0
      %v3317 = vand.u32 %v2833, 4294901760
      %3318 = vmatmul.mubr.f32.gmra.mrb[0].mxu0 %v3317
      %v3319 = vpop.f32.mrb[0].mxu0
      %v3320 = vadd.f32 %v3067, %v3319
      %v3321 = vpop.f32.mrb[0].mxu0
      %3322 = vmatprep.mubr.f32.mxu0 0.0
      %v3323 = vand.u32 %v2834, 4294901760
      %3324 = vmatmul.mubr.f32.gmra.mrb[0].mxu0 %v3323
      %v3325 = vpop.f32.mrb[0].mxu0
      %v3326 = vadd.f32 %v3077, %v3325
      %v3327 = vpop.f32.mrb[0].mxu0
      %3328 = vmatprep.mubr.f32.mxu0 0.0
      %v3329 = vand.u32 %v2835, 4294901760
      %3330 = vmatmul.mubr.f32.gmra.mrb[0].mxu0 %v3329
      %v3331 = vpop.f32.mrb[0].mxu0
      %v3332 = vadd.f32 %v3087, %v3331
      %v3333 = vpop.f32.mrb[0].mxu0
      %3334 = vmatprep.mubr.f32.mxu0 0.0
      %v3335 = vand.u32 %v2836, 4294901760
      %3336 = vmatmul.mubr.f32.gmra.mrb[0].mxu0 %v3335
      %v3337 = vpop.f32.mrb[0].mxu0
      %v3338 = vadd.f32 %v3097, %v3337
      %v3339 = vpop.f32.mrb[0].mxu0
      %3340 = vdwg.mxu0
      %3341 = vmatprep.subr.mxu0 0.0
      %v3342 = vand.u32 %v2838, 4294901760
      %v3343 = vsub.f32 %v2838, %v3342
      %3344 = vmatpush1.msra.mxu0 %v3343
      %3345 = vmatprep.subr.mxu0 0.0
      %v3346 = vand.u32 %v2839, 4294901760
      %v3347 = vsub.f32 %v2839, %v3346
      %3348 = vmatpush1.msra.mxu0 %v3347
      %3349 = vmatprep.subr.mxu0 0.0
      %v3350 = vand.u32 %v2840, 4294901760
      %v3351 = vsub.f32 %v2840, %v3350
      %3352 = vmatpush1.msra.mxu0 %v3351
      %3353 = vmatprep.subr.mxu0 0.0
      %v3354 = vand.u32 %v2841, 4294901760
      %v3355 = vsub.f32 %v2841, %v3354
      %3356 = vmatpush1.msra.mxu0 %v3355
      %3357 = vmatprep.subr.mxu0 0.0
      %v3358 = vand.u32 %v2842, 4294901760
      %v3359 = vsub.f32 %v2842, %v3358
      %3360 = vmatpush1.msra.mxu0 %v3359
      %3361 = vmatprep.subr.mxu0 0.0
      %v3362 = vand.u32 %v2843, 4294901760
      %v3363 = vsub.f32 %v2843, %v3362
      %3364 = vmatpush1.msra.mxu0 %v3363
      %3365 = vmatprep.subr.mxu0 0.0
      %v3366 = vand.u32 %v2844, 4294901760
      %v3367 = vsub.f32 %v2844, %v3366
      %3368 = vmatpush1.msra.mxu0 %v3367
      %3369 = vmatprep.subr.mxu0 0.0
      %v3370 = vand.u32 %v2845, 4294901760
      %v3371 = vsub.f32 %v2845, %v3370
      %3372 = vmatpush1.msra.mxu0 %v3371
      %3373 = vmatprep.subr.mxu0 0.0
      %v3374 = vand.u32 %v2846, 4294901760
      %v3375 = vsub.f32 %v2846, %v3374
      %3376 = vmatpush1.msra.mxu0 %v3375
      %3377 = vmatprep.subr.mxu0 0.0
      %v3378 = vand.u32 %v2847, 4294901760
      %v3379 = vsub.f32 %v2847, %v3378
      %3380 = vmatpush1.msra.mxu0 %v3379
      %3381 = vmatprep.subr.mxu0 0.0
      %v3382 = vand.u32 %v2848, 4294901760
      %v3383 = vsub.f32 %v2848, %v3382
      %3384 = vmatpush1.msra.mxu0 %v3383
      %3385 = vmatprep.subr.mxu0 0.0
      %v3386 = vand.u32 %v2849, 4294901760
      %v3387 = vsub.f32 %v2849, %v3386
      %3388 = vmatpush1.msra.mxu0 %v3387
      %3389 = vmatprep.subr.mxu0 0.0
      %v3390 = vand.u32 %v2850, 4294901760
      %v3391 = vsub.f32 %v2850, %v3390
      %3392 = vmatpush1.msra.mxu0 %v3391
      %3393 = vmatprep.subr.mxu0 0.0
      %v3394 = vand.u32 %v2851, 4294901760
      %v3395 = vsub.f32 %v2851, %v3394
      %3396 = vmatpush1.msra.mxu0 %v3395
      %3397 = vmatprep.subr.mxu0 0.0
      %v3398 = vand.u32 %v2852, 4294901760
      %v3399 = vsub.f32 %v2852, %v3398
      %3400 = vmatpush1.msra.mxu0 %v3399
      %3401 = vmatprep.subr.mxu0 0.0
      %v3402 = vand.u32 %v2853, 4294901760
      %v3403 = vsub.f32 %v2853, %v3402
      %3404 = vmatpush1.msra.mxu0 %v3403
      %3405 = vmatprep.subr.mxu0 0.0
      %3406 = vmatpush1.msra.mxu0 0.0
      %3407 = vmatprep.subr.mxu0 0.0
      %3408 = vmatpush1.msra.mxu0 0.0
      %3409 = vmatprep.subr.mxu0 0.0
      %3410 = vmatpush1.msra.mxu0 0.0
      %3411 = vmatprep.subr.mxu0 0.0
      %3412 = vmatpush1.msra.mxu0 0.0
      %3413 = vmatprep.subr.mxu0 0.0
      %3414 = vmatpush1.msra.mxu0 0.0
      %3415 = vmatprep.subr.mxu0 0.0
      %3416 = vmatpush1.msra.mxu0 0.0
      %3417 = vmatprep.subr.mxu0 0.0
      %3418 = vmatpush1.msra.mxu0 0.0
      %3419 = vmatprep.subr.mxu0 0.0
      %3420 = vmatpush1.msra.mxu0 0.0
      %3421 = vmatprep.subr.mxu0 0.0
      %3422 = vmatpush1.msra.mxu0 0.0
      %3423 = vmatprep.subr.mxu0 0.0
      %3424 = vmatpush1.msra.mxu0 0.0
      %3425 = vmatprep.subr.mxu0 0.0
      %3426 = vmatpush1.msra.mxu0 0.0
      %3427 = vmatprep.subr.mxu0 0.0
      %3428 = vmatpush1.msra.mxu0 0.0
      %3429 = vmatprep.subr.mxu0 0.0
      %3430 = vmatpush1.msra.mxu0 0.0
      %3431 = vmatprep.subr.mxu0 0.0
      %3432 = vmatpush1.msra.mxu0 0.0
      %3433 = vmatprep.subr.mxu0 0.0
      %3434 = vmatpush1.msra.mxu0 0.0
      %3435 = vmatprep.subr.mxu0 0.0
      %3436 = vmatpush1.msra.mxu0 0.0
      %3437 = vmatprep.mubr.f32.mxu0 0.0
      %v3438 = vand.u32 %v2821, 4294901760
      %v3439 = vsub.f32 %v2821, %v3438
      %3440 = vmatmul.mubr.f32.gmra.mrb[0].mxu0 %v3439
      %v3441 = vpop.f32.mrb[0].mxu0
      %v3442 = vadd.f32 %v3248, %v3441
      %v3443 = vpop.f32.mrb[0].mxu0
      %3444 = vmatprep.mubr.f32.mxu0 0.0
      %v3445 = vand.u32 %v2822, 4294901760
      %v3446 = vsub.f32 %v2822, %v3445
      %3447 = vmatmul.mubr.f32.gmra.mrb[0].mxu0 %v3446
      %v3448 = vpop.f32.mrb[0].mxu0
      %v3449 = vadd.f32 %v3254, %v3448
      %v3450 = vpop.f32.mrb[0].mxu0
      %3451 = vmatprep.mubr.f32.mxu0 0.0
      %v3452 = vand.u32 %v2823, 4294901760
      %v3453 = vsub.f32 %v2823, %v3452
      %3454 = vmatmul.mubr.f32.gmra.mrb[0].mxu0 %v3453
      %v3455 = vpop.f32.mrb[0].mxu0
      %v3456 = vadd.f32 %v3260, %v3455
      %v3457 = vpop.f32.mrb[0].mxu0
      %3458 = vmatprep.mubr.f32.mxu0 0.0
      %v3459 = vand.u32 %v2824, 4294901760
      %v3460 = vsub.f32 %v2824, %v3459
      %3461 = vmatmul.mubr.f32.gmra.mrb[0].mxu0 %v3460
      %v3462 = vpop.f32.mrb[0].mxu0
      %v3463 = vadd.f32 %v3266, %v3462
      %v3464 = vpop.f32.mrb[0].mxu0
      %3465 = vmatprep.mubr.f32.mxu0 0.0
      %v3466 = vand.u32 %v2825, 4294901760
      %v3467 = vsub.f32 %v2825, %v3466
      %3468 = vmatmul.mubr.f32.gmra.mrb[0].mxu0 %v3467
      %v3469 = vpop.f32.mrb[0].mxu0
      %v3470 = vadd.f32 %v3272, %v3469
      %v3471 = vpop.f32.mrb[0].mxu0
      %3472 = vmatprep.mubr.f32.mxu0 0.0
      %v3473 = vand.u32 %v2826, 4294901760
      %v3474 = vsub.f32 %v2826, %v3473
      %3475 = vmatmul.mubr.f32.gmra.mrb[0].mxu0 %v3474
      %v3476 = vpop.f32.mrb[0].mxu0
      %v3477 = vadd.f32 %v3278, %v3476
      %v3478 = vpop.f32.mrb[0].mxu0
      %3479 = vmatprep.mubr.f32.mxu0 0.0
      %v3480 = vand.u32 %v2827, 4294901760
      %v3481 = vsub.f32 %v2827, %v3480
      %3482 = vmatmul.mubr.f32.gmra.mrb[0].mxu0 %v3481
      %v3483 = vpop.f32.mrb[0].mxu0
      %v3484 = vadd.f32 %v3284, %v3483
      %v3485 = vpop.f32.mrb[0].mxu0
      %3486 = vmatprep.mubr.f32.mxu0 0.0
      %v3487 = vand.u32 %v2828, 4294901760
      %v3488 = vsub.f32 %v2828, %v3487
      %3489 = vmatmul.mubr.f32.gmra.mrb[0].mxu0 %v3488
      %v3490 = vpop.f32.mrb[0].mxu0
      %v3491 = vadd.f32 %v3290, %v3490
      %v3492 = vpop.f32.mrb[0].mxu0
      %3493 = vmatprep.mubr.f32.mxu0 0.0
      %v3494 = vand.u32 %v2829, 4294901760
      %v3495 = vsub.f32 %v2829, %v3494
      %3496 = vmatmul.mubr.f32.gmra.mrb[0].mxu0 %v3495
      %v3497 = vpop.f32.mrb[0].mxu0
      %v3498 = vadd.f32 %v3296, %v3497
      %v3499 = vpop.f32.mrb[0].mxu0
      %3500 = vmatprep.mubr.f32.mxu0 0.0
      %v3501 = vand.u32 %v2830, 4294901760
      %v3502 = vsub.f32 %v2830, %v3501
      %3503 = vmatmul.mubr.f32.gmra.mrb[0].mxu0 %v3502
      %v3504 = vpop.f32.mrb[0].mxu0
      %v3505 = vadd.f32 %v3302, %v3504
      %v3506 = vpop.f32.mrb[0].mxu0
      %3507 = vmatprep.mubr.f32.mxu0 0.0
      %v3508 = vand.u32 %v2831, 4294901760
      %v3509 = vsub.f32 %v2831, %v3508
      %3510 = vmatmul.mubr.f32.gmra.mrb[0].mxu0 %v3509
      %v3511 = vpop.f32.mrb[0].mxu0
      %v3512 = vadd.f32 %v3308, %v3511
      %v3513 = vpop.f32.mrb[0].mxu0
      %3514 = vmatprep.mubr.f32.mxu0 0.0
      %v3515 = vand.u32 %v2832, 4294901760
      %v3516 = vsub.f32 %v2832, %v3515
      %3517 = vmatmul.mubr.f32.gmra.mrb[0].mxu0 %v3516
      %v3518 = vpop.f32.mrb[0].mxu0
      %v3519 = vadd.f32 %v3314, %v3518
      %v3520 = vpop.f32.mrb[0].mxu0
      %3521 = vmatprep.mubr.f32.mxu0 0.0
      %v3522 = vand.u32 %v2833, 4294901760
      %v3523 = vsub.f32 %v2833, %v3522
      %3524 = vmatmul.mubr.f32.gmra.mrb[0].mxu0 %v3523
      %v3525 = vpop.f32.mrb[0].mxu0
      %v3526 = vadd.f32 %v3320, %v3525
      %v3527 = vpop.f32.mrb[0].mxu0
      %3528 = vmatprep.mubr.f32.mxu0 0.0
      %v3529 = vand.u32 %v2834, 4294901760
      %v3530 = vsub.f32 %v2834, %v3529
      %3531 = vmatmul.mubr.f32.gmra.mrb[0].mxu0 %v3530
      %v3532 = vpop.f32.mrb[0].mxu0
      %v3533 = vadd.f32 %v3326, %v3532
      %v3534 = vpop.f32.mrb[0].mxu0
      %3535 = vmatprep.mubr.f32.mxu0 0.0
      %v3536 = vand.u32 %v2835, 4294901760
      %v3537 = vsub.f32 %v2835, %v3536
      %3538 = vmatmul.mubr.f32.gmra.mrb[0].mxu0 %v3537
      %v3539 = vpop.f32.mrb[0].mxu0
      %v3540 = vadd.f32 %v3332, %v3539
      %v3541 = vpop.f32.mrb[0].mxu0
      %3542 = vmatprep.mubr.f32.mxu0 0.0
      %v3543 = vand.u32 %v2836, 4294901760
      %v3544 = vsub.f32 %v2836, %v3543
      %3545 = vmatmul.mubr.f32.gmra.mrb[0].mxu0 %v3544
      %v3546 = vpop.f32.mrb[0].mxu0
      %v3547 = vadd.f32 %v3338, %v3546
      %v3548 = vpop.f32.mrb[0].mxu0
      %3549 = vdwg.mxu0
      %3550 = vmatprep.subr.mxu0 0.0
      %v3551 = vand.u32 %v2838, 4294901760
      %3552 = vmatpush1.msra.mxu0 %v3551
      %3553 = vmatprep.subr.mxu0 0.0
      %v3554 = vand.u32 %v2839, 4294901760
      %3555 = vmatpush1.msra.mxu0 %v3554
      %3556 = vmatprep.subr.mxu0 0.0
      %v3557 = vand.u32 %v2840, 4294901760
      %3558 = vmatpush1.msra.mxu0 %v3557
      %3559 = vmatprep.subr.mxu0 0.0
      %v3560 = vand.u32 %v2841, 4294901760
      %3561 = vmatpush1.msra.mxu0 %v3560
      %3562 = vmatprep.subr.mxu0 0.0
      %v3563 = vand.u32 %v2842, 4294901760
      %3564 = vmatpush1.msra.mxu0 %v3563
      %3565 = vmatprep.subr.mxu0 0.0
      %v3566 = vand.u32 %v2843, 4294901760
      %3567 = vmatpush1.msra.mxu0 %v3566
      %3568 = vmatprep.subr.mxu0 0.0
      %v3569 = vand.u32 %v2844, 4294901760
      %3570 = vmatpush1.msra.mxu0 %v3569
      %3571 = vmatprep.subr.mxu0 0.0
      %v3572 = vand.u32 %v2845, 4294901760
      %3573 = vmatpush1.msra.mxu0 %v3572
      %3574 = vmatprep.subr.mxu0 0.0
      %v3575 = vand.u32 %v2846, 4294901760
      %3576 = vmatpush1.msra.mxu0 %v3575
      %3577 = vmatprep.subr.mxu0 0.0
      %v3578 = vand.u32 %v2847, 4294901760
      %3579 = vmatpush1.msra.mxu0 %v3578
      %3580 = vmatprep.subr.mxu0 0.0
      %v3581 = vand.u32 %v2848, 4294901760
      %3582 = vmatpush1.msra.mxu0 %v3581
      %3583 = vmatprep.subr.mxu0 0.0
      %v3584 = vand.u32 %v2849, 4294901760
      %3585 = vmatpush1.msra.mxu0 %v3584
      %3586 = vmatprep.subr.mxu0 0.0
      %v3587 = vand.u32 %v2850, 4294901760
      %3588 = vmatpush1.msra.mxu0 %v3587
      %3589 = vmatprep.subr.mxu0 0.0
      %v3590 = vand.u32 %v2851, 4294901760
      %3591 = vmatpush1.msra.mxu0 %v3590
      %3592 = vmatprep.subr.mxu0 0.0
      %v3593 = vand.u32 %v2852, 4294901760
      %3594 = vmatpush1.msra.mxu0 %v3593
      %3595 = vmatprep.subr.mxu0 0.0
      %v3596 = vand.u32 %v2853, 4294901760
      %3597 = vmatpush1.msra.mxu0 %v3596
      %3598 = vmatprep.subr.mxu0 0.0
      %3599 = vmatpush1.msra.mxu0 0.0
      %3600 = vmatprep.subr.mxu0 0.0
      %3601 = vmatpush1.msra.mxu0 0.0
      %3602 = vmatprep.subr.mxu0 0.0
      %3603 = vmatpush1.msra.mxu0 0.0
      %3604 = vmatprep.subr.mxu0 0.0
      %3605 = vmatpush1.msra.mxu0 0.0
      %3606 = vmatprep.subr.mxu0 0.0
      %3607 = vmatpush1.msra.mxu0 0.0
      %3608 = vmatprep.subr.mxu0 0.0
      %3609 = vmatpush1.msra.mxu0 0.0
      %3610 = vmatprep.subr.mxu0 0.0
      %3611 = vmatpush1.msra.mxu0 0.0
      %3612 = vmatprep.subr.mxu0 0.0
      %3613 = vmatpush1.msra.mxu0 0.0
      %3614 = vmatprep.subr.mxu0 0.0
      %3615 = vmatpush1.msra.mxu0 0.0
      %3616 = vmatprep.subr.mxu0 0.0
      %3617 = vmatpush1.msra.mxu0 0.0
      %3618 = vmatprep.subr.mxu0 0.0
      %3619 = vmatpush1.msra.mxu0 0.0
      %3620 = vmatprep.subr.mxu0 0.0
      %3621 = vmatpush1.msra.mxu0 0.0
      %3622 = vmatprep.subr.mxu0 0.0
      %3623 = vmatpush1.msra.mxu0 0.0
      %3624 = vmatprep.subr.mxu0 0.0
      %3625 = vmatpush1.msra.mxu0 0.0
      %3626 = vmatprep.subr.mxu0 0.0
      %3627 = vmatpush1.msra.mxu0 0.0
      %3628 = vmatprep.subr.mxu0 0.0
      %3629 = vmatpush1.msra.mxu0 0.0
      %3630 = vmatprep.mubr.f32.mxu0 0.0
      %v3631 = vand.u32 %v2821, 4294901760
      %v3632 = vsub.f32 %v2821, %v3631
      %v3633 = vand.u32 %v3632, 4294901760
      %3634 = vmatmul.mubr.f32.gmra.mrb[0].mxu0 %v3633
      %v3635 = vpop.f32.mrb[0].mxu0
      %v3636 = vadd.f32 %v3442, %v3635
      %v3637 = vpop.f32.mrb[0].mxu0
      %3638 = vmatprep.mubr.f32.mxu0 0.0
      %v3639 = vand.u32 %v2822, 4294901760
      %v3640 = vsub.f32 %v2822, %v3639
      %v3641 = vand.u32 %v3640, 4294901760
      %3642 = vmatmul.mubr.f32.gmra.mrb[0].mxu0 %v3641
      %v3643 = vpop.f32.mrb[0].mxu0
      %v3644 = vadd.f32 %v3449, %v3643
      %v3645 = vpop.f32.mrb[0].mxu0
      %3646 = vmatprep.mubr.f32.mxu0 0.0
      %v3647 = vand.u32 %v2823, 4294901760
      %v3648 = vsub.f32 %v2823, %v3647
      %v3649 = vand.u32 %v3648, 4294901760
      %3650 = vmatmul.mubr.f32.gmra.mrb[0].mxu0 %v3649
      %v3651 = vpop.f32.mrb[0].mxu0
      %v3652 = vadd.f32 %v3456, %v3651
      %v3653 = vpop.f32.mrb[0].mxu0
      %3654 = vmatprep.mubr.f32.mxu0 0.0
      %v3655 = vand.u32 %v2824, 4294901760
      %v3656 = vsub.f32 %v2824, %v3655
      %v3657 = vand.u32 %v3656, 4294901760
      %3658 = vmatmul.mubr.f32.gmra.mrb[0].mxu0 %v3657
      %v3659 = vpop.f32.mrb[0].mxu0
      %v3660 = vadd.f32 %v3463, %v3659
      %v3661 = vpop.f32.mrb[0].mxu0
      %3662 = vmatprep.mubr.f32.mxu0 0.0
      %v3663 = vand.u32 %v2825, 4294901760
      %v3664 = vsub.f32 %v2825, %v3663
      %v3665 = vand.u32 %v3664, 4294901760
      %3666 = vmatmul.mubr.f32.gmra.mrb[0].mxu0 %v3665
      %v3667 = vpop.f32.mrb[0].mxu0
      %v3668 = vadd.f32 %v3470, %v3667
      %v3669 = vpop.f32.mrb[0].mxu0
      %3670 = vmatprep.mubr.f32.mxu0 0.0
      %v3671 = vand.u32 %v2826, 4294901760
      %v3672 = vsub.f32 %v2826, %v3671
      %v3673 = vand.u32 %v3672, 4294901760
      %3674 = vmatmul.mubr.f32.gmra.mrb[0].mxu0 %v3673
      %v3675 = vpop.f32.mrb[0].mxu0
      %v3676 = vadd.f32 %v3477, %v3675
      %v3677 = vpop.f32.mrb[0].mxu0
      %3678 = vmatprep.mubr.f32.mxu0 0.0
      %v3679 = vand.u32 %v2827, 4294901760
      %v3680 = vsub.f32 %v2827, %v3679
      %v3681 = vand.u32 %v3680, 4294901760
      %3682 = vmatmul.mubr.f32.gmra.mrb[0].mxu0 %v3681
      %v3683 = vpop.f32.mrb[0].mxu0
      %v3684 = vadd.f32 %v3484, %v3683
      %v3685 = vpop.f32.mrb[0].mxu0
      %3686 = vmatprep.mubr.f32.mxu0 0.0
      %v3687 = vand.u32 %v2828, 4294901760
      %v3688 = vsub.f32 %v2828, %v3687
      %v3689 = vand.u32 %v3688, 4294901760
      %3690 = vmatmul.mubr.f32.gmra.mrb[0].mxu0 %v3689
      %v3691 = vpop.f32.mrb[0].mxu0
      %v3692 = vadd.f32 %v3491, %v3691
      %v3693 = vpop.f32.mrb[0].mxu0
      %3694 = vmatprep.mubr.f32.mxu0 0.0
      %v3695 = vand.u32 %v2829, 4294901760
      %v3696 = vsub.f32 %v2829, %v3695
      %v3697 = vand.u32 %v3696, 4294901760
      %3698 = vmatmul.mubr.f32.gmra.mrb[0].mxu0 %v3697
      %v3699 = vpop.f32.mrb[0].mxu0
      %v3700 = vadd.f32 %v3498, %v3699
      %v3701 = vpop.f32.mrb[0].mxu0
      %3702 = vmatprep.mubr.f32.mxu0 0.0
      %v3703 = vand.u32 %v2830, 4294901760
      %v3704 = vsub.f32 %v2830, %v3703
      %v3705 = vand.u32 %v3704, 4294901760
      %3706 = vmatmul.mubr.f32.gmra.mrb[0].mxu0 %v3705
      %v3707 = vpop.f32.mrb[0].mxu0
      %v3708 = vadd.f32 %v3505, %v3707
      %v3709 = vpop.f32.mrb[0].mxu0
      %3710 = vmatprep.mubr.f32.mxu0 0.0
      %v3711 = vand.u32 %v2831, 4294901760
      %v3712 = vsub.f32 %v2831, %v3711
      %v3713 = vand.u32 %v3712, 4294901760
      %3714 = vmatmul.mubr.f32.gmra.mrb[0].mxu0 %v3713
      %v3715 = vpop.f32.mrb[0].mxu0
      %v3716 = vadd.f32 %v3512, %v3715
      %v3717 = vpop.f32.mrb[0].mxu0
      %3718 = vmatprep.mubr.f32.mxu0 0.0
      %v3719 = vand.u32 %v2832, 4294901760
      %v3720 = vsub.f32 %v2832, %v3719
      %v3721 = vand.u32 %v3720, 4294901760
      %3722 = vmatmul.mubr.f32.gmra.mrb[0].mxu0 %v3721
      %v3723 = vpop.f32.mrb[0].mxu0
      %v3724 = vadd.f32 %v3519, %v3723
      %v3725 = vpop.f32.mrb[0].mxu0
      %3726 = vmatprep.mubr.f32.mxu0 0.0
      %v3727 = vand.u32 %v2833, 4294901760
      %v3728 = vsub.f32 %v2833, %v3727
      %v3729 = vand.u32 %v3728, 4294901760
      %3730 = vmatmul.mubr.f32.gmra.mrb[0].mxu0 %v3729
      %v3731 = vpop.f32.mrb[0].mxu0
      %v3732 = vadd.f32 %v3526, %v3731
      %v3733 = vpop.f32.mrb[0].mxu0
      %3734 = vmatprep.mubr.f32.mxu0 0.0
      %v3735 = vand.u32 %v2834, 4294901760
      %v3736 = vsub.f32 %v2834, %v3735
      %v3737 = vand.u32 %v3736, 4294901760
      %3738 = vmatmul.mubr.f32.gmra.mrb[0].mxu0 %v3737
      %v3739 = vpop.f32.mrb[0].mxu0
      %v3740 = vadd.f32 %v3533, %v3739
      %v3741 = vpop.f32.mrb[0].mxu0
      %3742 = vmatprep.mubr.f32.mxu0 0.0
      %v3743 = vand.u32 %v2835, 4294901760
      %v3744 = vsub.f32 %v2835, %v3743
      %v3745 = vand.u32 %v3744, 4294901760
      %3746 = vmatmul.mubr.f32.gmra.mrb[0].mxu0 %v3745
      %v3747 = vpop.f32.mrb[0].mxu0
      %v3748 = vadd.f32 %v3540, %v3747
      %v3749 = vpop.f32.mrb[0].mxu0
      %3750 = vmatprep.mubr.f32.mxu0 0.0
      %v3751 = vand.u32 %v2836, 4294901760
      %v3752 = vsub.f32 %v2836, %v3751
      %v3753 = vand.u32 %v3752, 4294901760
      %3754 = vmatmul.mubr.f32.gmra.mrb[0].mxu0 %v3753
      %v3755 = vpop.f32.mrb[0].mxu0
      %v3756 = vadd.f32 %v3547, %v3755
      %v3757 = vpop.f32.mrb[0].mxu0
      %3758 = vdwg.mxu0
      %3759 = vmatprep.subr.mxu0 0.0
      %v3760 = vand.u32 %v2838, 4294901760
      %v3761 = vsub.f32 %v2838, %v3760
      %v3762 = vand.u32 %v3761, 4294901760
      %3763 = vmatpush1.msra.mxu0 %v3762
      %3764 = vmatprep.subr.mxu0 0.0
      %v3765 = vand.u32 %v2839, 4294901760
      %v3766 = vsub.f32 %v2839, %v3765
      %v3767 = vand.u32 %v3766, 4294901760
      %3768 = vmatpush1.msra.mxu0 %v3767
      %3769 = vmatprep.subr.mxu0 0.0
      %v3770 = vand.u32 %v2840, 4294901760
      %v3771 = vsub.f32 %v2840, %v3770
      %v3772 = vand.u32 %v3771, 4294901760
      %3773 = vmatpush1.msra.mxu0 %v3772
      %3774 = vmatprep.subr.mxu0 0.0
      %v3775 = vand.u32 %v2841, 4294901760
      %v3776 = vsub.f32 %v2841, %v3775
      %v3777 = vand.u32 %v3776, 4294901760
      %3778 = vmatpush1.msra.mxu0 %v3777
      %3779 = vmatprep.subr.mxu0 0.0
      %v3780 = vand.u32 %v2842, 4294901760
      %v3781 = vsub.f32 %v2842, %v3780
      %v3782 = vand.u32 %v3781, 4294901760
      %3783 = vmatpush1.msra.mxu0 %v3782
      %3784 = vmatprep.subr.mxu0 0.0
      %v3785 = vand.u32 %v2843, 4294901760
      %v3786 = vsub.f32 %v2843, %v3785
      %v3787 = vand.u32 %v3786, 4294901760
      %3788 = vmatpush1.msra.mxu0 %v3787
      %3789 = vmatprep.subr.mxu0 0.0
      %v3790 = vand.u32 %v2844, 4294901760
      %v3791 = vsub.f32 %v2844, %v3790
      %v3792 = vand.u32 %v3791, 4294901760
      %3793 = vmatpush1.msra.mxu0 %v3792
      %3794 = vmatprep.subr.mxu0 0.0
      %v3795 = vand.u32 %v2845, 4294901760
      %v3796 = vsub.f32 %v2845, %v3795
      %v3797 = vand.u32 %v3796, 4294901760
      %3798 = vmatpush1.msra.mxu0 %v3797
      %3799 = vmatprep.subr.mxu0 0.0
      %v3800 = vand.u32 %v2846, 4294901760
      %v3801 = vsub.f32 %v2846, %v3800
      %v3802 = vand.u32 %v3801, 4294901760
      %3803 = vmatpush1.msra.mxu0 %v3802
      %3804 = vmatprep.subr.mxu0 0.0
      %v3805 = vand.u32 %v2847, 4294901760
      %v3806 = vsub.f32 %v2847, %v3805
      %v3807 = vand.u32 %v3806, 4294901760
      %3808 = vmatpush1.msra.mxu0 %v3807
      %3809 = vmatprep.subr.mxu0 0.0
      %v3810 = vand.u32 %v2848, 4294901760
      %v3811 = vsub.f32 %v2848, %v3810
      %v3812 = vand.u32 %v3811, 4294901760
      %3813 = vmatpush1.msra.mxu0 %v3812
      %3814 = vmatprep.subr.mxu0 0.0
      %v3815 = vand.u32 %v2849, 4294901760
      %v3816 = vsub.f32 %v2849, %v3815
      %v3817 = vand.u32 %v3816, 4294901760
      %3818 = vmatpush1.msra.mxu0 %v3817
      %3819 = vmatprep.subr.mxu0 0.0
      %v3820 = vand.u32 %v2850, 4294901760
      %v3821 = vsub.f32 %v2850, %v3820
      %v3822 = vand.u32 %v3821, 4294901760
      %3823 = vmatpush1.msra.mxu0 %v3822
      %3824 = vmatprep.subr.mxu0 0.0
      %v3825 = vand.u32 %v2851, 4294901760
      %v3826 = vsub.f32 %v2851, %v3825
      %v3827 = vand.u32 %v3826, 4294901760
      %3828 = vmatpush1.msra.mxu0 %v3827
      %3829 = vmatprep.subr.mxu0 0.0
      %v3830 = vand.u32 %v2852, 4294901760
      %v3831 = vsub.f32 %v2852, %v3830
      %v3832 = vand.u32 %v3831, 4294901760
      %3833 = vmatpush1.msra.mxu0 %v3832
      %3834 = vmatprep.subr.mxu0 0.0
      %v3835 = vand.u32 %v2853, 4294901760
      %v3836 = vsub.f32 %v2853, %v3835
      %v3837 = vand.u32 %v3836, 4294901760
      %3838 = vmatpush1.msra.mxu0 %v3837
      %3839 = vmatprep.subr.mxu0 0.0
      %3840 = vmatpush1.msra.mxu0 0.0
      %3841 = vmatprep.subr.mxu0 0.0
      %3842 = vmatpush1.msra.mxu0 0.0
      %3843 = vmatprep.subr.mxu0 0.0
      %3844 = vmatpush1.msra.mxu0 0.0
      %3845 = vmatprep.subr.mxu0 0.0
      %3846 = vmatpush1.msra.mxu0 0.0
      %3847 = vmatprep.subr.mxu0 0.0
      %3848 = vmatpush1.msra.mxu0 0.0
      %3849 = vmatprep.subr.mxu0 0.0
      %3850 = vmatpush1.msra.mxu0 0.0
      %3851 = vmatprep.subr.mxu0 0.0
      %3852 = vmatpush1.msra.mxu0 0.0
      %3853 = vmatprep.subr.mxu0 0.0
      %3854 = vmatpush1.msra.mxu0 0.0
      %3855 = vmatprep.subr.mxu0 0.0
      %3856 = vmatpush1.msra.mxu0 0.0
      %3857 = vmatprep.subr.mxu0 0.0
      %3858 = vmatpush1.msra.mxu0 0.0
      %3859 = vmatprep.subr.mxu0 0.0
      %3860 = vmatpush1.msra.mxu0 0.0
      %3861 = vmatprep.subr.mxu0 0.0
      %3862 = vmatpush1.msra.mxu0 0.0
      %3863 = vmatprep.subr.mxu0 0.0
      %3864 = vmatpush1.msra.mxu0 0.0
      %3865 = vmatprep.subr.mxu0 0.0
      %3866 = vmatpush1.msra.mxu0 0.0
      %3867 = vmatprep.subr.mxu0 0.0
      %3868 = vmatpush1.msra.mxu0 0.0
      %3869 = vmatprep.subr.mxu0 0.0
      %3870 = vmatpush1.msra.mxu0 0.0
      %3871 = vmatprep.mubr.f32.mxu0 0.0
      %v3872 = vand.u32 %v2821, 4294901760
      %3873 = vmatmul.mubr.f32.gmra.mrb[0].mxu0 %v3872
      %v3874 = vpop.f32.mrb[0].mxu0
      %v3875 = vadd.f32 %v3636, %v3874
      %v3876 = vpop.f32.mrb[0].mxu0
      %3877 = vmatprep.mubr.f32.mxu0 0.0
      %v3878 = vand.u32 %v2822, 4294901760
      %3879 = vmatmul.mubr.f32.gmra.mrb[0].mxu0 %v3878
      %v3880 = vpop.f32.mrb[0].mxu0
      %v3881 = vadd.f32 %v3644, %v3880
      %v3882 = vpop.f32.mrb[0].mxu0
      %3883 = vmatprep.mubr.f32.mxu0 0.0
      %v3884 = vand.u32 %v2823, 4294901760
      %3885 = vmatmul.mubr.f32.gmra.mrb[0].mxu0 %v3884
      %v3886 = vpop.f32.mrb[0].mxu0
      %v3887 = vadd.f32 %v3652, %v3886
      %v3888 = vpop.f32.mrb[0].mxu0
      %3889 = vmatprep.mubr.f32.mxu0 0.0
      %v3890 = vand.u32 %v2824, 4294901760
      %3891 = vmatmul.mubr.f32.gmra.mrb[0].mxu0 %v3890
      %v3892 = vpop.f32.mrb[0].mxu0
      %v3893 = vadd.f32 %v3660, %v3892
      %v3894 = vpop.f32.mrb[0].mxu0
      %3895 = vmatprep.mubr.f32.mxu0 0.0
      %v3896 = vand.u32 %v2825, 4294901760
      %3897 = vmatmul.mubr.f32.gmra.mrb[0].mxu0 %v3896
      %v3898 = vpop.f32.mrb[0].mxu0
      %v3899 = vadd.f32 %v3668, %v3898
      %v3900 = vpop.f32.mrb[0].mxu0
      %3901 = vmatprep.mubr.f32.mxu0 0.0
      %v3902 = vand.u32 %v2826, 4294901760
      %3903 = vmatmul.mubr.f32.gmra.mrb[0].mxu0 %v3902
      %v3904 = vpop.f32.mrb[0].mxu0
      %v3905 = vadd.f32 %v3676, %v3904
      %v3906 = vpop.f32.mrb[0].mxu0
      %3907 = vmatprep.mubr.f32.mxu0 0.0
      %v3908 = vand.u32 %v2827, 4294901760
      %3909 = vmatmul.mubr.f32.gmra.mrb[0].mxu0 %v3908
      %v3910 = vpop.f32.mrb[0].mxu0
      %v3911 = vadd.f32 %v3684, %v3910
      %v3912 = vpop.f32.mrb[0].mxu0
      %3913 = vmatprep.mubr.f32.mxu0 0.0
      %v3914 = vand.u32 %v2828, 4294901760
      %3915 = vmatmul.mubr.f32.gmra.mrb[0].mxu0 %v3914
      %v3916 = vpop.f32.mrb[0].mxu0
      %v3917 = vadd.f32 %v3692, %v3916
      %v3918 = vpop.f32.mrb[0].mxu0
      %3919 = vmatprep.mubr.f32.mxu0 0.0
      %v3920 = vand.u32 %v2829, 4294901760
      %3921 = vmatmul.mubr.f32.gmra.mrb[0].mxu0 %v3920
      %v3922 = vpop.f32.mrb[0].mxu0
      %v3923 = vadd.f32 %v3700, %v3922
      %v3924 = vpop.f32.mrb[0].mxu0
      %3925 = vmatprep.mubr.f32.mxu0 0.0
      %v3926 = vand.u32 %v2830, 4294901760
      %3927 = vmatmul.mubr.f32.gmra.mrb[0].mxu0 %v3926
      %v3928 = vpop.f32.mrb[0].mxu0
      %v3929 = vadd.f32 %v3708, %v3928
      %v3930 = vpop.f32.mrb[0].mxu0
      %3931 = vmatprep.mubr.f32.mxu0 0.0
      %v3932 = vand.u32 %v2831, 4294901760
      %3933 = vmatmul.mubr.f32.gmra.mrb[0].mxu0 %v3932
      %v3934 = vpop.f32.mrb[0].mxu0
      %v3935 = vadd.f32 %v3716, %v3934
      %v3936 = vpop.f32.mrb[0].mxu0
      %3937 = vmatprep.mubr.f32.mxu0 0.0
      %v3938 = vand.u32 %v2832, 4294901760
      %3939 = vmatmul.mubr.f32.gmra.mrb[0].mxu0 %v3938
      %v3940 = vpop.f32.mrb[0].mxu0
      %v3941 = vadd.f32 %v3724, %v3940
      %v3942 = vpop.f32.mrb[0].mxu0
      %3943 = vmatprep.mubr.f32.mxu0 0.0
      %v3944 = vand.u32 %v2833, 4294901760
      %3945 = vmatmul.mubr.f32.gmra.mrb[0].mxu0 %v3944
      %v3946 = vpop.f32.mrb[0].mxu0
      %v3947 = vadd.f32 %v3732, %v3946
      %v3948 = vpop.f32.mrb[0].mxu0
      %3949 = vmatprep.mubr.f32.mxu0 0.0
      %v3950 = vand.u32 %v2834, 4294901760
      %3951 = vmatmul.mubr.f32.gmra.mrb[0].mxu0 %v3950
      %v3952 = vpop.f32.mrb[0].mxu0
      %v3953 = vadd.f32 %v3740, %v3952
      %v3954 = vpop.f32.mrb[0].mxu0
      %3955 = vmatprep.mubr.f32.mxu0 0.0
      %v3956 = vand.u32 %v2835, 4294901760
      %3957 = vmatmul.mubr.f32.gmra.mrb[0].mxu0 %v3956
      %v3958 = vpop.f32.mrb[0].mxu0
      %v3959 = vadd.f32 %v3748, %v3958
      %v3960 = vpop.f32.mrb[0].mxu0
      %3961 = vmatprep.mubr.f32.mxu0 0.0
      %v3962 = vand.u32 %v2836, 4294901760
      %3963 = vmatmul.mubr.f32.gmra.mrb[0].mxu0 %v3962
      %v3964 = vpop.f32.mrb[0].mxu0
      %v3965 = vadd.f32 %v3756, %v3964
      %v3966 = vpop.f32.mrb[0].mxu0
      %3967 = vdwg.mxu0
      %3968 = vmatprep.subr.mxu0 0.0
      %v3969 = vand.u32 %v2838, 4294901760
      %3970 = vmatpush1.msra.mxu0 %v3969
      %3971 = vmatprep.subr.mxu0 0.0
      %v3972 = vand.u32 %v2839, 4294901760
      %3973 = vmatpush1.msra.mxu0 %v3972
      %3974 = vmatprep.subr.mxu0 0.0
      %v3975 = vand.u32 %v2840, 4294901760
      %3976 = vmatpush1.msra.mxu0 %v3975
      %3977 = vmatprep.subr.mxu0 0.0
      %v3978 = vand.u32 %v2841, 4294901760
      %3979 = vmatpush1.msra.mxu0 %v3978
      %3980 = vmatprep.subr.mxu0 0.0
      %v3981 = vand.u32 %v2842, 4294901760
      %3982 = vmatpush1.msra.mxu0 %v3981
      %3983 = vmatprep.subr.mxu0 0.0
      %v3984 = vand.u32 %v2843, 4294901760
      %3985 = vmatpush1.msra.mxu0 %v3984
      %3986 = vmatprep.subr.mxu0 0.0
      %v3987 = vand.u32 %v2844, 4294901760
      %3988 = vmatpush1.msra.mxu0 %v3987
      %3989 = vmatprep.subr.mxu0 0.0
      %v3990 = vand.u32 %v2845, 4294901760
      %3991 = vmatpush1.msra.mxu0 %v3990
      %3992 = vmatprep.subr.mxu0 0.0
      %v3993 = vand.u32 %v2846, 4294901760
      %3994 = vmatpush1.msra.mxu0 %v3993
      %3995 = vmatprep.subr.mxu0 0.0
      %v3996 = vand.u32 %v2847, 4294901760
      %3997 = vmatpush1.msra.mxu0 %v3996
      %3998 = vmatprep.subr.mxu0 0.0
      %v3999 = vand.u32 %v2848, 4294901760
      %4000 = vmatpush1.msra.mxu0 %v3999
      %4001 = vmatprep.subr.mxu0 0.0
      %v4002 = vand.u32 %v2849, 4294901760
      %4003 = vmatpush1.msra.mxu0 %v4002
      %4004 = vmatprep.subr.mxu0 0.0
      %v4005 = vand.u32 %v2850, 4294901760
      %4006 = vmatpush1.msra.mxu0 %v4005
      %4007 = vmatprep.subr.mxu0 0.0
      %v4008 = vand.u32 %v2851, 4294901760
      %4009 = vmatpush1.msra.mxu0 %v4008
      %4010 = vmatprep.subr.mxu0 0.0
      %v4011 = vand.u32 %v2852, 4294901760
      %4012 = vmatpush1.msra.mxu0 %v4011
      %4013 = vmatprep.subr.mxu0 0.0
      %v4014 = vand.u32 %v2853, 4294901760
      %4015 = vmatpush1.msra.mxu0 %v4014
      %4016 = vmatprep.subr.mxu0 0.0
      %4017 = vmatpush1.msra.mxu0 0.0
      %4018 = vmatprep.subr.mxu0 0.0
      %4019 = vmatpush1.msra.mxu0 0.0
      %4020 = vmatprep.subr.mxu0 0.0
      %4021 = vmatpush1.msra.mxu0 0.0
      %4022 = vmatprep.subr.mxu0 0.0
      %4023 = vmatpush1.msra.mxu0 0.0
      %4024 = vmatprep.subr.mxu0 0.0
      %4025 = vmatpush1.msra.mxu0 0.0
      %4026 = vmatprep.subr.mxu0 0.0
      %4027 = vmatpush1.msra.mxu0 0.0
      %4028 = vmatprep.subr.mxu0 0.0
      %4029 = vmatpush1.msra.mxu0 0.0
      %4030 = vmatprep.subr.mxu0 0.0
      %4031 = vmatpush1.msra.mxu0 0.0
      %4032 = vmatprep.subr.mxu0 0.0
      %4033 = vmatpush1.msra.mxu0 0.0
      %4034 = vmatprep.subr.mxu0 0.0
      %4035 = vmatpush1.msra.mxu0 0.0
      %4036 = vmatprep.subr.mxu0 0.0
      %4037 = vmatpush1.msra.mxu0 0.0
      %4038 = vmatprep.subr.mxu0 0.0
      %4039 = vmatpush1.msra.mxu0 0.0
      %4040 = vmatprep.subr.mxu0 0.0
      %4041 = vmatpush1.msra.mxu0 0.0
      %4042 = vmatprep.subr.mxu0 0.0
      %4043 = vmatpush1.msra.mxu0 0.0
      %4044 = vmatprep.subr.mxu0 0.0
      %4045 = vmatpush1.msra.mxu0 0.0
      %4046 = vmatprep.subr.mxu0 0.0
      %4047 = vmatpush1.msra.mxu0 0.0
      %4048 = vmatprep.mubr.f32.mxu0 0.0
      %v4049 = vand.u32 %v2821, 4294901760
      %4050 = vmatmul.mubr.f32.gmra.mrb[0].mxu0 %v4049
      %v4051 = vpop.f32.mrb[0].mxu0
      %v4052 = vadd.f32 %v3875, %v4051
      %v4053 = vpop.f32.mrb[0].mxu0
      %4054 = vmatprep.mubr.f32.mxu0 0.0
      %v4055 = vand.u32 %v2822, 4294901760
      %4056 = vmatmul.mubr.f32.gmra.mrb[0].mxu0 %v4055
      %v4057 = vpop.f32.mrb[0].mxu0
      %v4058 = vadd.f32 %v3881, %v4057
      %v4059 = vpop.f32.mrb[0].mxu0
      %4060 = vmatprep.mubr.f32.mxu0 0.0
      %v4061 = vand.u32 %v2823, 4294901760
      %4062 = vmatmul.mubr.f32.gmra.mrb[0].mxu0 %v4061
      %v4063 = vpop.f32.mrb[0].mxu0
      %v4064 = vadd.f32 %v3887, %v4063
      %v4065 = vpop.f32.mrb[0].mxu0
      %4066 = vmatprep.mubr.f32.mxu0 0.0
      %v4067 = vand.u32 %v2824, 4294901760
      %4068 = vmatmul.mubr.f32.gmra.mrb[0].mxu0 %v4067
      %v4069 = vpop.f32.mrb[0].mxu0
      %v4070 = vadd.f32 %v3893, %v4069
      %v4071 = vpop.f32.mrb[0].mxu0
      %4072 = vmatprep.mubr.f32.mxu0 0.0
      %v4073 = vand.u32 %v2825, 4294901760
      %4074 = vmatmul.mubr.f32.gmra.mrb[0].mxu0 %v4073
      %v4075 = vpop.f32.mrb[0].mxu0
      %v4076 = vadd.f32 %v3899, %v4075
      %v4077 = vpop.f32.mrb[0].mxu0
      %4078 = vmatprep.mubr.f32.mxu0 0.0
      %v4079 = vand.u32 %v2826, 4294901760
      %4080 = vmatmul.mubr.f32.gmra.mrb[0].mxu0 %v4079
      %v4081 = vpop.f32.mrb[0].mxu0
      %v4082 = vadd.f32 %v3905, %v4081
      %v4083 = vpop.f32.mrb[0].mxu0
      %4084 = vmatprep.mubr.f32.mxu0 0.0
      %v4085 = vand.u32 %v2827, 4294901760
      %4086 = vmatmul.mubr.f32.gmra.mrb[0].mxu0 %v4085
      %v4087 = vpop.f32.mrb[0].mxu0
      %v4088 = vadd.f32 %v3911, %v4087
      %v4089 = vpop.f32.mrb[0].mxu0
      %4090 = vmatprep.mubr.f32.mxu0 0.0
      %v4091 = vand.u32 %v2828, 4294901760
      %4092 = vmatmul.mubr.f32.gmra.mrb[0].mxu0 %v4091
      %v4093 = vpop.f32.mrb[0].mxu0
      %v4094 = vadd.f32 %v3917, %v4093
      %v4095 = vpop.f32.mrb[0].mxu0
      %4096 = vmatprep.mubr.f32.mxu0 0.0
      %v4097 = vand.u32 %v2829, 4294901760
      %4098 = vmatmul.mubr.f32.gmra.mrb[0].mxu0 %v4097
      %v4099 = vpop.f32.mrb[0].mxu0
      %v4100 = vadd.f32 %v3923, %v4099
      %v4101 = vpop.f32.mrb[0].mxu0
      %4102 = vmatprep.mubr.f32.mxu0 0.0
      %v4103 = vand.u32 %v2830, 4294901760
      %4104 = vmatmul.mubr.f32.gmra.mrb[0].mxu0 %v4103
      %v4105 = vpop.f32.mrb[0].mxu0
      %v4106 = vadd.f32 %v3929, %v4105
      %v4107 = vpop.f32.mrb[0].mxu0
      %4108 = vmatprep.mubr.f32.mxu0 0.0
      %v4109 = vand.u32 %v2831, 4294901760
      %4110 = vmatmul.mubr.f32.gmra.mrb[0].mxu0 %v4109
      %v4111 = vpop.f32.mrb[0].mxu0
      %v4112 = vadd.f32 %v3935, %v4111
      %v4113 = vpop.f32.mrb[0].mxu0
      %4114 = vmatprep.mubr.f32.mxu0 0.0
      %v4115 = vand.u32 %v2832, 4294901760
      %4116 = vmatmul.mubr.f32.gmra.mrb[0].mxu0 %v4115
      %v4117 = vpop.f32.mrb[0].mxu0
      %v4118 = vadd.f32 %v3941, %v4117
      %v4119 = vpop.f32.mrb[0].mxu0
      %4120 = vmatprep.mubr.f32.mxu0 0.0
      %v4121 = vand.u32 %v2833, 4294901760
      %4122 = vmatmul.mubr.f32.gmra.mrb[0].mxu0 %v4121
      %v4123 = vpop.f32.mrb[0].mxu0
      %v4124 = vadd.f32 %v3947, %v4123
      %v4125 = vpop.f32.mrb[0].mxu0
      %4126 = vmatprep.mubr.f32.mxu0 0.0
      %v4127 = vand.u32 %v2834, 4294901760
      %4128 = vmatmul.mubr.f32.gmra.mrb[0].mxu0 %v4127
      %v4129 = vpop.f32.mrb[0].mxu0
      %v4130 = vadd.f32 %v3953, %v4129
      %v4131 = vpop.f32.mrb[0].mxu0
      %4132 = vmatprep.mubr.f32.mxu0 0.0
      %v4133 = vand.u32 %v2835, 4294901760
      %4134 = vmatmul.mubr.f32.gmra.mrb[0].mxu0 %v4133
      %v4135 = vpop.f32.mrb[0].mxu0
      %v4136 = vadd.f32 %v3959, %v4135
      %v4137 = vpop.f32.mrb[0].mxu0
      %4138 = vmatprep.mubr.f32.mxu0 0.0
      %v4139 = vand.u32 %v2836, 4294901760
      %4140 = vmatmul.mubr.f32.gmra.mrb[0].mxu0 %v4139
      %v4141 = vpop.f32.mrb[0].mxu0
      %v4142 = vadd.f32 %v3965, %v4141
      %v4143 = vpop.f32.mrb[0].mxu0
      %4144 = vdwg.mxu0
      %v4145 = vmul.f32 %v4052, %v4052
      %v4146 = vmul.f32 %v4058, %v4058
      %v4147 = vmul.f32 %v4064, %v4064
      %v4148 = vmul.f32 %v4070, %v4070
      %v4149 = vmul.f32 %v4076, %v4076
      %v4150 = vmul.f32 %v4082, %v4082
      %v4151 = vmul.f32 %v4088, %v4088
      %v4152 = vmul.f32 %v4094, %v4094
      %v4153 = vmul.f32 %v4100, %v4100
      %v4154 = vmul.f32 %v4106, %v4106
      %v4155 = vmul.f32 %v4112, %v4112
      %v4156 = vmul.f32 %v4118, %v4118
      %v4157 = vmul.f32 %v4124, %v4124
      %v4158 = vmul.f32 %v4130, %v4130
      %v4159 = vmul.f32 %v4136, %v4136
      %v4160 = vmul.f32 %v4142, %v4142
      %v4161 = vmul.f32 %v4145, 0.16666667
      %v4162 = vmul.f32 %v4146, 0.16666667
      %v4163 = vmul.f32 %v4147, 0.16666667
      %v4164 = vmul.f32 %v4148, 0.16666667
      %v4165 = vmul.f32 %v4149, 0.16666667
      %v4166 = vmul.f32 %v4150, 0.16666667
      %v4167 = vmul.f32 %v4151, 0.16666667
      %v4168 = vmul.f32 %v4152, 0.16666667
      %v4169 = vmul.f32 %v4153, 0.16666667
      %v4170 = vmul.f32 %v4154, 0.16666667
      %v4171 = vmul.f32 %v4155, 0.16666667
      %v4172 = vmul.f32 %v4156, 0.16666667
      %v4173 = vmul.f32 %v4157, 0.16666667
      %v4174 = vmul.f32 %v4158, 0.16666667
      %v4175 = vmul.f32 %v4159, 0.16666667
      %v4176 = vmul.f32 %v4160, 0.16666667
      %v4177 = vmul.f32 %v4052, %v174
      %v4178 = vmul.f32 %v4058, %v175
      %v4179 = vmul.f32 %v4064, %v176
      %v4180 = vmul.f32 %v4070, %v177
      %v4181 = vmul.f32 %v4076, %v178
      %v4182 = vmul.f32 %v4082, %v179
      %v4183 = vmul.f32 %v4088, %v180
      %v4184 = vmul.f32 %v4094, %v181
      %v4185 = vmul.f32 %v4100, %v182
      %v4186 = vmul.f32 %v4106, %v183
      %v4187 = vmul.f32 %v4112, %v184
      %v4188 = vmul.f32 %v4118, %v185
      %v4189 = vmul.f32 %v4124, %v186
      %v4190 = vmul.f32 %v4130, %v187
      %v4191 = vmul.f32 %v4136, %v188
      %v4192 = vmul.f32 %v4142, %v189
      %v4193 = vadd.f32 %v4161, %v4177
      %v4194 = vadd.f32 %v4162, %v4178
      %v4195 = vadd.f32 %v4163, %v4179
      %v4196 = vadd.f32 %v4164, %v4180
      %v4197 = vadd.f32 %v4165, %v4181
      %v4198 = vadd.f32 %v4166, %v4182
      %v4199 = vadd.f32 %v4167, %v4183
      %v4200 = vadd.f32 %v4168, %v4184
      %v4201 = vadd.f32 %v4169, %v4185
      %v4202 = vadd.f32 %v4170, %v4186
      %v4203 = vadd.f32 %v4171, %v4187
      %v4204 = vadd.f32 %v4172, %v4188
      %v4205 = vadd.f32 %v4173, %v4189
      %v4206 = vadd.f32 %v4174, %v4190
      %v4207 = vadd.f32 %v4175, %v4191
      %v4208 = vadd.f32 %v4176, %v4192
      %4209 = vadd.xlane.f32.xlu0 %v4193
      %v4210 = vpop.xlane.xlu0 %4209
      %4211 = vadd.xlane.f32.xlu0 %v4194
      %v4212 = vpop.xlane.xlu0 %4211
      %4213 = vadd.xlane.f32.xlu0 %v4195
      %v4214 = vpop.xlane.xlu0 %4213
      %4215 = vadd.xlane.f32.xlu0 %v4196
      %v4216 = vpop.xlane.xlu0 %4215
      %4217 = vadd.xlane.f32.xlu0 %v4197
      %v4218 = vpop.xlane.xlu0 %4217
      %4219 = vadd.xlane.f32.xlu0 %v4198
      %v4220 = vpop.xlane.xlu0 %4219
      %4221 = vadd.xlane.f32.xlu0 %v4199
      %v4222 = vpop.xlane.xlu0 %4221
      %4223 = vadd.xlane.f32.xlu0 %v4200
      %v4224 = vpop.xlane.xlu0 %4223
      %4225 = vadd.xlane.f32.xlu0 %v4201
      %v4226 = vpop.xlane.xlu0 %4225
      %4227 = vadd.xlane.f32.xlu0 %v4202
      %v4228 = vpop.xlane.xlu0 %4227
      %4229 = vadd.xlane.f32.xlu0 %v4203
      %v4230 = vpop.xlane.xlu0 %4229
      %4231 = vadd.xlane.f32.xlu0 %v4204
      %v4232 = vpop.xlane.xlu0 %4231
      %4233 = vadd.xlane.f32.xlu0 %v4205
      %v4234 = vpop.xlane.xlu0 %4233
      %4235 = vadd.xlane.f32.xlu0 %v4206
      %v4236 = vpop.xlane.xlu0 %4235
      %4237 = vadd.xlane.f32.xlu0 %v4207
      %v4238 = vpop.xlane.xlu0 %4237
      %4239 = vadd.xlane.f32.xlu0 %v4208
      %v4240 = vpop.xlane.xlu0 %4239
      %v4241 = vld [vmem:[%s2 + $0x3] sm:$0x1]
      %v4242 = vlaneseq
      %v4243 = vshrl.u32 %v4242, 7
      %v4244 = vsub.s32 0, %v4243
      %v4245 = vrot.slane %v4241, %v4244
      %v4246 = vadd.f32 %v4210, %v4245
      %v4247 = vadd.f32 %v4212, %v4245
      %v4248 = vadd.f32 %v4214, %v4245
      %v4249 = vadd.f32 %v4216, %v4245
      %v4250 = vadd.f32 %v4218, %v4245
      %v4251 = vadd.f32 %v4220, %v4245
      %v4252 = vadd.f32 %v4222, %v4245
      %v4253 = vadd.f32 %v4224, %v4245
      %v4254 = vadd.f32 %v4226, %v4245
      %v4255 = vadd.f32 %v4228, %v4245
      %v4256 = vadd.f32 %v4230, %v4245
      %v4257 = vadd.f32 %v4232, %v4245
      %v4258 = vadd.f32 %v4234, %v4245
      %v4259 = vadd.f32 %v4236, %v4245
      %v4260 = vadd.f32 %v4238, %v4245
      %v4261 = vadd.f32 %v4240, %v4245
      %vm4262 = vcmask 7168
      %4263 = vst.msk [vmem:[%s172] sm:$0xff] %vm4262, %v4246
      %4264 = vst.msk [vmem:[%s172 + $0x8] sm:$0xff] %vm4262, %v4247
      %4265 = vst.msk [vmem:[%s172 + $0x10] sm:$0xff] %vm4262, %v4248
      %4266 = vst.msk [vmem:[%s172 + $0x18] sm:$0xff] %vm4262, %v4249
      %4267 = vst.msk [vmem:[%s172 + $0x20] sm:$0xff] %vm4262, %v4250
      %4268 = vst.msk [vmem:[%s172 + $0x28] sm:$0xff] %vm4262, %v4251
      %4269 = vst.msk [vmem:[%s172 + $0x30] sm:$0xff] %vm4262, %v4252
      %4270 = vst.msk [vmem:[%s172 + $0x38] sm:$0xff] %vm4262, %v4253
      %4271 = vst.msk [vmem:[%s172 + $0x40] sm:$0xff] %vm4262, %v4254
      %4272 = vst.msk [vmem:[%s172 + $0x48] sm:$0xff] %vm4262, %v4255
      %4273 = vst.msk [vmem:[%s172 + $0x50] sm:$0xff] %vm4262, %v4256
      %4274 = vst.msk [vmem:[%s172 + $0x58] sm:$0xff] %vm4262, %v4257
      %4275 = vst.msk [vmem:[%s172 + $0x60] sm:$0xff] %vm4262, %v4258
      %4276 = vst.msk [vmem:[%s172 + $0x68] sm:$0xff] %vm4262, %v4259
      %4277 = vst.msk [vmem:[%s172 + $0x70] sm:$0xff] %vm4262, %v4260
      %4278 = vst.msk [vmem:[%s172 + $0x78] sm:$0xff] %vm4262, %v4261
      %s4279 = smul.u32 16, %s14
      %p4280 = scmp.lt.s32.totalorder %s4279, 31
      %s4281 = scalar_select %p4280, %s4279, 31
      %s4282 = smul.addr %s4281, 8
      %s4283 = scalar_lea.vmem %s3, %s4282
      // Predicated region
      $region33: #{_lambda_.1} parent=31 // pred_check
        %p4284 = pneg %p100
      $region34: #{_lambda_.1} parent=31 // pred_check_branch
        %4286 = sbr.rel (%p4284) target = $region36
      $region35: #{_lambda_.1} parent=31 // pred_region
        %s4287 = smul.u32 16, %s14
      $region36: #{_lambda_.1} parent=31 // pred_fallthru
        _
    $region32: #{_lambda_.1} parent=5 // pred_fallthru
      _
    %p4288 = scmp.le.s32.totalorder 2, %s9
    // Predicated region
    $region37: #{_lambda_.1} parent=5 // pred_check
      %p4289 = pneg %p4288
    $region38: #{_lambda_.1} parent=5 // pred_check_branch
      %4291 = sbr.rel (%p4289) target = $region40
    $region39: #{_lambda_.1} parent=5 // pred_region
      %s4292 = ssub.s32 %s9, 2
      // Predicated region
      $region41: #{_lambda_.1} parent=39 // pred_check
        %p4293 = pneg %p106
      $region42: #{_lambda_.1} parent=39 // pred_check_branch
        %4295 = sbr.rel (%p4293) target = $region44
      $region43: #{_lambda_.1} parent=39 // pred_region
        %s4296 = smul.u32 16, %s15
        %p4297 = scmp.lt.s32.totalorder %s4296, 31
        %s4298 = scalar_select %p4297, %s4296, 31
        %s4299 = smul.addr %s4298, 8
        %s4300 = scalar_lea.vmem %s3, %s4299
      $region44: #{_lambda_.1} parent=39 // pred_fallthru
        _
    $region40: #{_lambda_.1} parent=5 // pred_fallthru
      _
  $region6: #{_lambda_.1} parent=0 // loop_footer
    %s13 = sadd.s32 1, %s9
  $region7: #{_lambda_.1} parent=0 // loop_footer_branch
    %8 = sbr.rel target = $region3
  $region8: #{_lambda_.1} parent=0 // loop_exit
    _

</llo_original>
